<compile_context>
chip_gen: v6e
topology: v6e:2x2x1
jax: 0.10.0
libtpu: 0.0.40
codegen_flags: <defaults>
</compile_context>

<pallas_src>
import jax
import jax.numpy as jnp
from jax.experimental import pallas as pl
from jax.experimental.pallas import tpu as pltpu

EPS = 1e-5
LANE = 128
_VMEM_LIMIT = 48 * 1024 * 1024  # explicit scoped-VMEM cap (safe on v5e/v6e/v7x)


def _round_up(x, m):
    return (x + m - 1) // m * m


def _choose_bt_block(bt, cap=8):
    """Largest divisor of bt that is <= cap (keeps >= 2 grid steps when bt > cap)."""
    for tb in range(min(cap, bt), 0, -1):
        if bt % tb == 0:
            return tb
    return 1


def _gcn_proj_kernel(x_ref, g_ref, wt_ref, w1t_ref, b1_ref, z_ref):
    """Fused  z[b] = (g[b] @ x[b]) @ W^T + x[b] @ W1^T + b1  for TB (b,t) pairs.

    x_ref:   (TB, J, Cin)  channel-last slab of x1 (already permuted)
    g_ref:   (TB, J, J)    per-(b,t) graph matrix
    wt_ref:  (Cin, Cp)     W^T   (Cp = Cout padded to a multiple of 128)
    w1t_ref: (Cin, Cp)     W1^T
    b1_ref:  (1, Cp)       w1 bias (zeros when bias=False, the module default)
    z_ref:   (TB, J, Cp)   pre-BN activations
    """
    tb = x_ref.shape[0]
    wt = wt_ref[...]
    w1t = w1t_ref[...]
    b1 = b1_ref[...]
    for t in range(tb):  # static unroll: each iteration is plain 2-D MXU matmuls
        x_t = x_ref[t]                                                  # (J, Cin)
        xg = jnp.dot(g_ref[t], x_t, preferred_element_type=jnp.float32)  # (J, Cin)
        z = jnp.dot(xg, wt, preferred_element_type=jnp.float32)          # (J, Cp)
        z = z + jnp.dot(x_t, w1t, preferred_element_type=jnp.float32)
        z_ref[t] = (z + b1).astype(z_ref.dtype)


def _bn_relu_kernel(z_ref, gamma_ref, beta_ref, o_ref):
    """BatchNorm2d (training-mode batch stats, biased var) + affine + ReLU
    over a full-N column slab; affine folded into one scale/shift per channel."""
    z = z_ref[...].astype(jnp.float32)                    # (N, C_BLOCK)
    mean = jnp.mean(z, axis=0, keepdims=True)             # (1, C_BLOCK)
    d = z - mean
    var = jnp.mean(d * d, axis=0, keepdims=True)          # biased var (PyTorch BN)
    inv = jax.lax.rsqrt(var + EPS)
    scale = inv * gamma_ref[...].astype(jnp.float32)
    shift = beta_ref[...].astype(jnp.float32) - mean * scale
    o_ref[...] = jnp.maximum(z * scale + shift, 0.0).astype(o_ref.dtype)


@jax.jit
def gcn_spa_forward(x1, g, w, w1, b1, gamma, beta):
    """x1: (B, Cin, J, T); g: (B, T, J, J); w, w1: (Cout, Cin);
    b1, gamma, beta: (Cout,).  Returns (B, Cout, J, T) like the PyTorch module."""
    B, Cin, J, T = x1.shape
    Cout = w.shape[0]
    Cp = _round_up(Cout, LANE)
    pad = Cp - Cout
    BT = B * T

    # ---- layout plumbing (XLA): the module's own permute, done once --------
    xt = jnp.transpose(x1, (0, 3, 2, 1)).reshape(BT, J, Cin)   # (BT, J, Cin)
    g2 = g.reshape(BT, J, J)

    wt = jnp.pad(w.T, ((0, 0), (0, pad)))                      # (Cin, Cp)
    w1t = jnp.pad(w1.T, ((0, 0), (0, pad)))
    b1p = jnp.pad(b1, (0, pad)).reshape(1, Cp)
    gamma_p = jnp.pad(gamma, (0, pad), constant_values=1.0).reshape(1, Cp)
    beta_p = jnp.pad(beta, (0, pad)).reshape(1, Cp)

    # ---- kernel 1: fused g-matmul + both 1x1 convs --------------------------
    TB = _choose_bt_block(BT)
    z = pl.pallas_call(
        _gcn_proj_kernel,
        out_shape=jax.ShapeDtypeStruct((BT, J, Cp), x1.dtype),
        grid=(BT // TB,),
        in_specs=[
            pl.BlockSpec((TB, J, Cin), lambda i: (i, 0, 0)),
            pl.BlockSpec((TB, J, J), lambda i: (i, 0, 0)),
            pl.BlockSpec((Cin, Cp), lambda i: (0, 0)),
            pl.BlockSpec((Cin, Cp), lambda i: (0, 0)),
            pl.BlockSpec((1, Cp), lambda i: (0, 0)),
        ],
        out_specs=pl.BlockSpec((TB, J, Cp), lambda i: (i, 0, 0)),
        compiler_params=pltpu.CompilerParams(
            dimension_semantics=("parallel",),
            vmem_limit_bytes=_VMEM_LIMIT,
        ),
    )(xt, g2, wt, w1t, b1p)

    # ---- kernel 2: BatchNorm (batch stats) + affine + ReLU -------------------
    N = BT * J
    z2 = z.reshape(N, Cp)  # merges leading dims only: no transpose, no HBM shuffle

    # Lane-dense channel tile that divides Cp exactly (no masked partial block).
    cb = LANE
    for cand in range(min(512, Cp), LANE - 1, -LANE):
        if Cp % cand == 0:
            cb = cand
            break
    # NOTE: the full-N column slab must fit VMEM; for very large B*T*J this pass
    # should be split along N with a two-pass sum / sum-of-squares accumulation.
    y2 = pl.pallas_call(
        _bn_relu_kernel,
        out_shape=jax.ShapeDtypeStruct((N, Cp), x1.dtype),
        grid=(Cp // cb,),
        in_specs=[
            pl.BlockSpec((N, cb), lambda j: (0, j)),
            pl.BlockSpec((1, cb), lambda j: (0, j)),
            pl.BlockSpec((1, cb), lambda j: (0, j)),
        ],
        out_specs=pl.BlockSpec((N, cb), lambda j: (0, j)),
        compiler_params=pltpu.CompilerParams(
            dimension_semantics=("parallel",),
            vmem_limit_bytes=_VMEM_LIMIT,
        ),
    )(z2, gamma_p, beta_p)

    # ---- back to PyTorch's (B, Cout, J, T) layout ----------------------------
    y = y2.reshape(B, T, J, Cp)[..., :Cout]
    return jnp.transpose(y, (0, 3, 2, 1))
    # TODO(synk): BatchNorm2d running_mean/running_var buffer updates (training
    # bookkeeping) are not materialized; only the forward output is produced.


def _reference(x1, g, w, w1, b1, gamma, beta):
    hp = jax.lax.Precision.HIGHEST
    x = jnp.transpose(x1, (0, 3, 2, 1))                              # (B,T,J,Cin)
    x = jnp.einsum('btjk,btkc->btjc', g, x, precision=hp)
    x = jnp.transpose(x, (0, 3, 2, 1))                               # (B,Cin,J,T)
    y = (jnp.einsum('oi,bijt->bojt', w, x, precision=hp)
         + jnp.einsum('oi,bijt->bojt', w1, x1, precision=hp)
         + b1[None, :, None, None])
    mean = jnp.mean(y, axis=(0, 2, 3), keepdims=True)
    var = jnp.mean((y - mean) ** 2, axis=(0, 2, 3), keepdims=True)
    yn = (y - mean) / jnp.sqrt(var + EPS)
    yn = yn * gamma[None, :, None, None] + beta[None, :, None, None]
    return jnp.maximum(yn, 0.0)


if __name__ == "__main__":
    # Small, module-consistent shapes: in_feature=64, out_feature=128,
    # num_joints=25, step=8, batch=2.
    B, Cin, Cout, J, T = 2, 64, 128, 25, 8

    key = jax.random.PRNGKey(0)
    k1, k2, k3, k4, k5, k6 = jax.random.split(key, 6)
    x1 = jax.random.normal(k1, (B, Cin, J, T), dtype=jnp.float32)
    g = jax.nn.softmax(jax.random.normal(k2, (B, T, J, J), dtype=jnp.float32), axis=-1)
    w = jax.random.normal(k3, (Cout, Cin), dtype=jnp.float32) / jnp.sqrt(Cin)
    w1 = jax.random.normal(k4, (Cout, Cin), dtype=jnp.float32) / jnp.sqrt(Cin)
    b1 = jnp.zeros((Cout,), dtype=jnp.float32)  # gcn_spa default: bias=False
    # Fresh BN2d has gamma=1, beta=0; perturb slightly so the affine path is exercised.
    gamma = 1.0 + 0.1 * jax.random.normal(k5, (Cout,), dtype=jnp.float32)
    beta = 0.1 * jax.random.normal(k6, (Cout,), dtype=jnp.float32)

    out = gcn_spa_forward(x1, g, w, w1, b1, gamma, beta)
    out = jax.block_until_ready(out)

    ref = _reference(x1, g, w, w1, b1, gamma, beta)
    assert out.shape == (B, Cout, J, T)
    max_err = float(jnp.max(jnp.abs(out - ref)))
    assert jnp.allclose(out, ref, atol=2e-3, rtol=2e-3), f"mismatch vs reference: {max_err}"

    print("KERNEL_OK")
</pallas_src>

<mosaic_0001>
module attributes {stable_mosaic.version = 11 : i64} {
  func.func @_gcn_proj_kernel(%arg0: i32, %arg1: memref<8x25x64xf32, #tpu.memory_space<vmem>>, %arg2: memref<8x25x25xf32, #tpu.memory_space<vmem>>, %arg3: memref<64x128xf32, #tpu.memory_space<vmem>>, %arg4: memref<64x128xf32, #tpu.memory_space<vmem>>, %arg5: memref<1x128xf32, #tpu.memory_space<vmem>>, %arg6: memref<8x25x128xf32, #tpu.memory_space<vmem>>) attributes {dimension_semantics = [#tpu.dimension_semantics<parallel>], iteration_bounds = array<i64: 2>, scalar_prefetch = 0 : i64, scratch_operands = 0 : i64, tpu.core_type = #tpu.core_type<tc>, window_params = [{transform_indices = @transform_0, window_bounds = array<i64: 8, 25, 64>}, {transform_indices = @transform_1, window_bounds = array<i64: 8, 25, 25>}, {pipeline_mode = #tpu.pipeline_mode<synchronous>, transform_indices = @transform_2, window_bounds = array<i64: 64, 128>}, {pipeline_mode = #tpu.pipeline_mode<synchronous>, transform_indices = @transform_3, window_bounds = array<i64: 64, 128>}, {pipeline_mode = #tpu.pipeline_mode<synchronous>, transform_indices = @transform_4, window_bounds = array<i64: 1, 128>}, {transform_indices = @transform_5, window_bounds = array<i64: 8, 25, 128>}]} {
    %c0 = arith.constant 0 : index
    %c0_0 = arith.constant 0 : index
    %0 = vector.load %arg3[%c0, %c0_0] : memref<64x128xf32, #tpu.memory_space<vmem>>, vector<64x128xf32>
    %c0_1 = arith.constant 0 : index
    %c0_2 = arith.constant 0 : index
    %1 = vector.load %arg4[%c0_1, %c0_2] : memref<64x128xf32, #tpu.memory_space<vmem>>, vector<64x128xf32>
    %c0_3 = arith.constant 0 : index
    %c0_4 = arith.constant 0 : index
    %2 = vector.load %arg5[%c0_3, %c0_4] : memref<1x128xf32, #tpu.memory_space<vmem>>, vector<1x128xf32>
    %c0_5 = arith.constant 0 : index
    %c0_6 = arith.constant 0 : index
    %c0_7 = arith.constant 0 : index
    %3 = vector.load %arg1[%c0_5, %c0_6, %c0_7] : memref<8x25x64xf32, #tpu.memory_space<vmem>>, vector<1x25x64xf32>
    %4 = vector.shape_cast %3 : vector<1x25x64xf32> to vector<25x64xf32>
    %c0_8 = arith.constant 0 : index
    %c0_9 = arith.constant 0 : index
    %c0_10 = arith.constant 0 : index
    %5 = vector.load %arg2[%c0_8, %c0_9, %c0_10] : memref<8x25x25xf32, #tpu.memory_space<vmem>>, vector<1x25x25xf32>
    %6 = vector.shape_cast %5 : vector<1x25x25xf32> to vector<25x25xf32>
    %cst = arith.constant dense<0.000000e+00> : vector<25x64xf32>
    %7 = tpu.matmul %6, %4, %cst {dimension_numbers = #tpu.dot_dimension_numbers<[1], [0], [0], [1], [0, 0, 1, 1], [], []>} : vector<25x25xf32>, vector<25x64xf32>, vector<25x64xf32> -> vector<25x64xf32>
    %cst_11 = arith.constant dense<0.000000e+00> : vector<25x128xf32>
    %8 = tpu.matmul %7, %0, %cst_11 {dimension_numbers = #tpu.dot_dimension_numbers<[1], [0], [0], [1], [0, 0, 1, 1], [], []>} : vector<25x64xf32>, vector<64x128xf32>, vector<25x128xf32> -> vector<25x128xf32>
    %cst_12 = arith.constant dense<0.000000e+00> : vector<25x128xf32>
    %9 = tpu.matmul %4, %1, %cst_12 {dimension_numbers = #tpu.dot_dimension_numbers<[1], [0], [0], [1], [0, 0, 1, 1], [], []>} : vector<25x64xf32>, vector<64x128xf32>, vector<25x128xf32> -> vector<25x128xf32>
    %10 = arith.addf %8, %9 : vector<25x128xf32>
    %11 = vector.broadcast %2 : vector<1x128xf32> to vector<25x128xf32>
    %12 = arith.addf %10, %11 : vector<25x128xf32>
    %c0_13 = arith.constant 0 : index
    %c0_14 = arith.constant 0 : index
    %c0_15 = arith.constant 0 : index
    %13 = vector.load %arg6[%c0_13, %c0_14, %c0_15] : memref<8x25x128xf32, #tpu.memory_space<vmem>>, vector<1x25x128xf32>
    %14 = vector.shape_cast %13 : vector<1x25x128xf32> to vector<25x128xf32>
    %15 = vector.shape_cast %12 : vector<25x128xf32> to vector<1x25x128xf32>
    tpu.vector_store %arg6[%c0_13, %c0_14, %c0_15], %15 {strides = array<i32>} : memref<8x25x128xf32, #tpu.memory_space<vmem>>, vector<1x25x128xf32>,
    %c1 = arith.constant 1 : index
    %c0_16 = arith.constant 0 : index
    %c0_17 = arith.constant 0 : index
    %16 = vector.load %arg1[%c1, %c0_16, %c0_17] : memref<8x25x64xf32, #tpu.memory_space<vmem>>, vector<1x25x64xf32>
    %17 = vector.shape_cast %16 : vector<1x25x64xf32> to vector<25x64xf32>
    %c1_18 = arith.constant 1 : index
    %c0_19 = arith.constant 0 : index
    %c0_20 = arith.constant 0 : index
    %18 = vector.load %arg2[%c1_18, %c0_19, %c0_20] : memref<8x25x25xf32, #tpu.memory_space<vmem>>, vector<1x25x25xf32>
    %19 = vector.shape_cast %18 : vector<1x25x25xf32> to vector<25x25xf32>
    %cst_21 = arith.constant dense<0.000000e+00> : vector<25x64xf32>
    %20 = tpu.matmul %19, %17, %cst_21 {dimension_numbers = #tpu.dot_dimension_numbers<[1], [0], [0], [1], [0, 0, 1, 1], [], []>} : vector<25x25xf32>, vector<25x64xf32>, vector<25x64xf32> -> vector<25x64xf32>
    %cst_22 = arith.constant dense<0.000000e+00> : vector<25x128xf32>
    %21 = tpu.matmul %20, %0, %cst_22 {dimension_numbers = #tpu.dot_dimension_numbers<[1], [0], [0], [1], [0, 0, 1, 1], [], []>} : vector<25x64xf32>, vector<64x128xf32>, vector<25x128xf32> -> vector<25x128xf32>
    %cst_23 = arith.constant dense<0.000000e+00> : vector<25x128xf32>
    %22 = tpu.matmul %17, %1, %cst_23 {dimension_numbers = #tpu.dot_dimension_numbers<[1], [0], [0], [1], [0, 0, 1, 1], [], []>} : vector<25x64xf32>, vector<64x128xf32>, vector<25x128xf32> -> vector<25x128xf32>
    %23 = arith.addf %21, %22 : vector<25x128xf32>
    %24 = vector.broadcast %2 : vector<1x128xf32> to vector<25x128xf32>
    %25 = arith.addf %23, %24 : vector<25x128xf32>
    %c1_24 = arith.constant 1 : index
    %c0_25 = arith.constant 0 : index
    %c0_26 = arith.constant 0 : index
    %26 = vector.load %arg6[%c1_24, %c0_25, %c0_26] : memref<8x25x128xf32, #tpu.memory_space<vmem>>, vector<1x25x128xf32>
    %27 = vector.shape_cast %26 : vector<1x25x128xf32> to vector<25x128xf32>
    %28 = vector.shape_cast %25 : vector<25x128xf32> to vector<1x25x128xf32>
    tpu.vector_store %arg6[%c1_24, %c0_25, %c0_26], %28 {strides = array<i32>} : memref<8x25x128xf32, #tpu.memory_space<vmem>>, vector<1x25x128xf32>,
    %c2 = arith.constant 2 : index
    %c0_27 = arith.constant 0 : index
    %c0_28 = arith.constant 0 : index
    %29 = vector.load %arg1[%c2, %c0_27, %c0_28] : memref<8x25x64xf32, #tpu.memory_space<vmem>>, vector<1x25x64xf32>
    %30 = vector.shape_cast %29 : vector<1x25x64xf32> to vector<25x64xf32>
    %c2_29 = arith.constant 2 : index
    %c0_30 = arith.constant 0 : index
    %c0_31 = arith.constant 0 : index
    %31 = vector.load %arg2[%c2_29, %c0_30, %c0_31] : memref<8x25x25xf32, #tpu.memory_space<vmem>>, vector<1x25x25xf32>
    %32 = vector.shape_cast %31 : vector<1x25x25xf32> to vector<25x25xf32>
    %cst_32 = arith.constant dense<0.000000e+00> : vector<25x64xf32>
    %33 = tpu.matmul %32, %30, %cst_32 {dimension_numbers = #tpu.dot_dimension_numbers<[1], [0], [0], [1], [0, 0, 1, 1], [], []>} : vector<25x25xf32>, vector<25x64xf32>, vector<25x64xf32> -> vector<25x64xf32>
    %cst_33 = arith.constant dense<0.000000e+00> : vector<25x128xf32>
    %34 = tpu.matmul %33, %0, %cst_33 {dimension_numbers = #tpu.dot_dimension_numbers<[1], [0], [0], [1], [0, 0, 1, 1], [], []>} : vector<25x64xf32>, vector<64x128xf32>, vector<25x128xf32> -> vector<25x128xf32>
    %cst_34 = arith.constant dense<0.000000e+00> : vector<25x128xf32>
    %35 = tpu.matmul %30, %1, %cst_34 {dimension_numbers = #tpu.dot_dimension_numbers<[1], [0], [0], [1], [0, 0, 1, 1], [], []>} : vector<25x64xf32>, vector<64x128xf32>, vector<25x128xf32> -> vector<25x128xf32>
    %36 = arith.addf %34, %35 : vector<25x128xf32>
    %37 = vector.broadcast %2 : vector<1x128xf32> to vector<25x128xf32>
    %38 = arith.addf %36, %37 : vector<25x128xf32>
    %c2_35 = arith.constant 2 : index
    %c0_36 = arith.constant 0 : index
    %c0_37 = arith.constant 0 : index
    %39 = vector.load %arg6[%c2_35, %c0_36, %c0_37] : memref<8x25x128xf32, #tpu.memory_space<vmem>>, vector<1x25x128xf32>
    %40 = vector.shape_cast %39 : vector<1x25x128xf32> to vector<25x128xf32>
    %41 = vector.shape_cast %38 : vector<25x128xf32> to vector<1x25x128xf32>
    tpu.vector_store %arg6[%c2_35, %c0_36, %c0_37], %41 {strides = array<i32>} : memref<8x25x128xf32, #tpu.memory_space<vmem>>, vector<1x25x128xf32>,
    %c3 = arith.constant 3 : index
    %c0_38 = arith.constant 0 : index
    %c0_39 = arith.constant 0 : index
    %42 = vector.load %arg1[%c3, %c0_38, %c0_39] : memref<8x25x64xf32, #tpu.memory_space<vmem>>, vector<1x25x64xf32>
    %43 = vector.shape_cast %42 : vector<1x25x64xf32> to vector<25x64xf32>
    %c3_40 = arith.constant 3 : index
    %c0_41 = arith.constant 0 : index
    %c0_42 = arith.constant 0 : index
    %44 = vector.load %arg2[%c3_40, %c0_41, %c0_42] : memref<8x25x25xf32, #tpu.memory_space<vmem>>, vector<1x25x25xf32>
    %45 = vector.shape_cast %44 : vector<1x25x25xf32> to vector<25x25xf32>
    %cst_43 = arith.constant dense<0.000000e+00> : vector<25x64xf32>
    %46 = tpu.matmul %45, %43, %cst_43 {dimension_numbers = #tpu.dot_dimension_numbers<[1], [0], [0], [1], [0, 0, 1, 1], [], []>} : vector<25x25xf32>, vector<25x64xf32>, vector<25x64xf32> -> vector<25x64xf32>
    %cst_44 = arith.constant dense<0.000000e+00> : vector<25x128xf32>
    %47 = tpu.matmul %46, %0, %cst_44 {dimension_numbers = #tpu.dot_dimension_numbers<[1], [0], [0], [1], [0, 0, 1, 1], [], []>} : vector<25x64xf32>, vector<64x128xf32>, vector<25x128xf32> -> vector<25x128xf32>
    %cst_45 = arith.constant dense<0.000000e+00> : vector<25x128xf32>
    %48 = tpu.matmul %43, %1, %cst_45 {dimension_numbers = #tpu.dot_dimension_numbers<[1], [0], [0], [1], [0, 0, 1, 1], [], []>} : vector<25x64xf32>, vector<64x128xf32>, vector<25x128xf32> -> vector<25x128xf32>
    %49 = arith.addf %47, %48 : vector<25x128xf32>
    %50 = vector.broadcast %2 : vector<1x128xf32> to vector<25x128xf32>
    %51 = arith.addf %49, %50 : vector<25x128xf32>
    %c3_46 = arith.constant 3 : index
    %c0_47 = arith.constant 0 : index
    %c0_48 = arith.constant 0 : index
    %52 = vector.load %arg6[%c3_46, %c0_47, %c0_48] : memref<8x25x128xf32, #tpu.memory_space<vmem>>, vector<1x25x128xf32>
    %53 = vector.shape_cast %52 : vector<1x25x128xf32> to vector<25x128xf32>
    %54 = vector.shape_cast %51 : vector<25x128xf32> to vector<1x25x128xf32>
    tpu.vector_store %arg6[%c3_46, %c0_47, %c0_48], %54 {strides = array<i32>} : memref<8x25x128xf32, #tpu.memory_space<vmem>>, vector<1x25x128xf32>,
    %c4 = arith.constant 4 : index
    %c0_49 = arith.constant 0 : index
    %c0_50 = arith.constant 0 : index
    %55 = vector.load %arg1[%c4, %c0_49, %c0_50] : memref<8x25x64xf32, #tpu.memory_space<vmem>>, vector<1x25x64xf32>
    %56 = vector.shape_cast %55 : vector<1x25x64xf32> to vector<25x64xf32>
    %c4_51 = arith.constant 4 : index
    %c0_52 = arith.constant 0 : index
    %c0_53 = arith.constant 0 : index
    %57 = vector.load %arg2[%c4_51, %c0_52, %c0_53] : memref<8x25x25xf32, #tpu.memory_space<vmem>>, vector<1x25x25xf32>
    %58 = vector.shape_cast %57 : vector<1x25x25xf32> to vector<25x25xf32>
    %cst_54 = arith.constant dense<0.000000e+00> : vector<25x64xf32>
    %59 = tpu.matmul %58, %56, %cst_54 {dimension_numbers = #tpu.dot_dimension_numbers<[1], [0], [0], [1], [0, 0, 1, 1], [], []>} : vector<25x25xf32>, vector<25x64xf32>, vector<25x64xf32> -> vector<25x64xf32>
    %cst_55 = arith.constant dense<0.000000e+00> : vector<25x128xf32>
    %60 = tpu.matmul %59, %0, %cst_55 {dimension_numbers = #tpu.dot_dimension_numbers<[1], [0], [0], [1], [0, 0, 1, 1], [], []>} : vector<25x64xf32>, vector<64x128xf32>, vector<25x128xf32> -> vector<25x128xf32>
    %cst_56 = arith.constant dense<0.000000e+00> : vector<25x128xf32>
    %61 = tpu.matmul %56, %1, %cst_56 {dimension_numbers = #tpu.dot_dimension_numbers<[1], [0], [0], [1], [0, 0, 1, 1], [], []>} : vector<25x64xf32>, vector<64x128xf32>, vector<25x128xf32> -> vector<25x128xf32>
    %62 = arith.addf %60, %61 : vector<25x128xf32>
    %63 = vector.broadcast %2 : vector<1x128xf32> to vector<25x128xf32>
    %64 = arith.addf %62, %63 : vector<25x128xf32>
    %c4_57 = arith.constant 4 : index
    %c0_58 = arith.constant 0 : index
    %c0_59 = arith.constant 0 : index
    %65 = vector.load %arg6[%c4_57, %c0_58, %c0_59] : memref<8x25x128xf32, #tpu.memory_space<vmem>>, vector<1x25x128xf32>
    %66 = vector.shape_cast %65 : vector<1x25x128xf32> to vector<25x128xf32>
    %67 = vector.shape_cast %64 : vector<25x128xf32> to vector<1x25x128xf32>
    tpu.vector_store %arg6[%c4_57, %c0_58, %c0_59], %67 {strides = array<i32>} : memref<8x25x128xf32, #tpu.memory_space<vmem>>, vector<1x25x128xf32>,
    %c5 = arith.constant 5 : index
    %c0_60 = arith.constant 0 : index
    %c0_61 = arith.constant 0 : index
    %68 = vector.load %arg1[%c5, %c0_60, %c0_61] : memref<8x25x64xf32, #tpu.memory_space<vmem>>, vector<1x25x64xf32>
    %69 = vector.shape_cast %68 : vector<1x25x64xf32> to vector<25x64xf32>
    %c5_62 = arith.constant 5 : index
    %c0_63 = arith.constant 0 : index
    %c0_64 = arith.constant 0 : index
    %70 = vector.load %arg2[%c5_62, %c0_63, %c0_64] : memref<8x25x25xf32, #tpu.memory_space<vmem>>, vector<1x25x25xf32>
    %71 = vector.shape_cast %70 : vector<1x25x25xf32> to vector<25x25xf32>
    %cst_65 = arith.constant dense<0.000000e+00> : vector<25x64xf32>
    %72 = tpu.matmul %71, %69, %cst_65 {dimension_numbers = #tpu.dot_dimension_numbers<[1], [0], [0], [1], [0, 0, 1, 1], [], []>} : vector<25x25xf32>, vector<25x64xf32>, vector<25x64xf32> -> vector<25x64xf32>
    %cst_66 = arith.constant dense<0.000000e+00> : vector<25x128xf32>
    %73 = tpu.matmul %72, %0, %cst_66 {dimension_numbers = #tpu.dot_dimension_numbers<[1], [0], [0], [1], [0, 0, 1, 1], [], []>} : vector<25x64xf32>, vector<64x128xf32>, vector<25x128xf32> -> vector<25x128xf32>
    %cst_67 = arith.constant dense<0.000000e+00> : vector<25x128xf32>
    %74 = tpu.matmul %69, %1, %cst_67 {dimension_numbers = #tpu.dot_dimension_numbers<[1], [0], [0], [1], [0, 0, 1, 1], [], []>} : vector<25x64xf32>, vector<64x128xf32>, vector<25x128xf32> -> vector<25x128xf32>
    %75 = arith.addf %73, %74 : vector<25x128xf32>
    %76 = vector.broadcast %2 : vector<1x128xf32> to vector<25x128xf32>
    %77 = arith.addf %75, %76 : vector<25x128xf32>
    %c5_68 = arith.constant 5 : index
    %c0_69 = arith.constant 0 : index
    %c0_70 = arith.constant 0 : index
    %78 = vector.load %arg6[%c5_68, %c0_69, %c0_70] : memref<8x25x128xf32, #tpu.memory_space<vmem>>, vector<1x25x128xf32>
    %79 = vector.shape_cast %78 : vector<1x25x128xf32> to vector<25x128xf32>
    %80 = vector.shape_cast %77 : vector<25x128xf32> to vector<1x25x128xf32>
    tpu.vector_store %arg6[%c5_68, %c0_69, %c0_70], %80 {strides = array<i32>} : memref<8x25x128xf32, #tpu.memory_space<vmem>>, vector<1x25x128xf32>,
    %c6 = arith.constant 6 : index
    %c0_71 = arith.constant 0 : index
    %c0_72 = arith.constant 0 : index
    %81 = vector.load %arg1[%c6, %c0_71, %c0_72] : memref<8x25x64xf32, #tpu.memory_space<vmem>>, vector<1x25x64xf32>
    %82 = vector.shape_cast %81 : vector<1x25x64xf32> to vector<25x64xf32>
    %c6_73 = arith.constant 6 : index
    %c0_74 = arith.constant 0 : index
    %c0_75 = arith.constant 0 : index
    %83 = vector.load %arg2[%c6_73, %c0_74, %c0_75] : memref<8x25x25xf32, #tpu.memory_space<vmem>>, vector<1x25x25xf32>
    %84 = vector.shape_cast %83 : vector<1x25x25xf32> to vector<25x25xf32>
    %cst_76 = arith.constant dense<0.000000e+00> : vector<25x64xf32>
    %85 = tpu.matmul %84, %82, %cst_76 {dimension_numbers = #tpu.dot_dimension_numbers<[1], [0], [0], [1], [0, 0, 1, 1], [], []>} : vector<25x25xf32>, vector<25x64xf32>, vector<25x64xf32> -> vector<25x64xf32>
    %cst_77 = arith.constant dense<0.000000e+00> : vector<25x128xf32>
    %86 = tpu.matmul %85, %0, %cst_77 {dimension_numbers = #tpu.dot_dimension_numbers<[1], [0], [0], [1], [0, 0, 1, 1], [], []>} : vector<25x64xf32>, vector<64x128xf32>, vector<25x128xf32> -> vector<25x128xf32>
    %cst_78 = arith.constant dense<0.000000e+00> : vector<25x128xf32>
    %87 = tpu.matmul %82, %1, %cst_78 {dimension_numbers = #tpu.dot_dimension_numbers<[1], [0], [0], [1], [0, 0, 1, 1], [], []>} : vector<25x64xf32>, vector<64x128xf32>, vector<25x128xf32> -> vector<25x128xf32>
    %88 = arith.addf %86, %87 : vector<25x128xf32>
    %89 = vector.broadcast %2 : vector<1x128xf32> to vector<25x128xf32>
    %90 = arith.addf %88, %89 : vector<25x128xf32>
    %c6_79 = arith.constant 6 : index
    %c0_80 = arith.constant 0 : index
    %c0_81 = arith.constant 0 : index
    %91 = vector.load %arg6[%c6_79, %c0_80, %c0_81] : memref<8x25x128xf32, #tpu.memory_space<vmem>>, vector<1x25x128xf32>
    %92 = vector.shape_cast %91 : vector<1x25x128xf32> to vector<25x128xf32>
    %93 = vector.shape_cast %90 : vector<25x128xf32> to vector<1x25x128xf32>
    tpu.vector_store %arg6[%c6_79, %c0_80, %c0_81], %93 {strides = array<i32>} : memref<8x25x128xf32, #tpu.memory_space<vmem>>, vector<1x25x128xf32>,
    %c7 = arith.constant 7 : index
    %c0_82 = arith.constant 0 : index
    %c0_83 = arith.constant 0 : index
    %94 = vector.load %arg1[%c7, %c0_82, %c0_83] : memref<8x25x64xf32, #tpu.memory_space<vmem>>, vector<1x25x64xf32>
    %95 = vector.shape_cast %94 : vector<1x25x64xf32> to vector<25x64xf32>
    %c7_84 = arith.constant 7 : index
    %c0_85 = arith.constant 0 : index
    %c0_86 = arith.constant 0 : index
    %96 = vector.load %arg2[%c7_84, %c0_85, %c0_86] : memref<8x25x25xf32, #tpu.memory_space<vmem>>, vector<1x25x25xf32>
    %97 = vector.shape_cast %96 : vector<1x25x25xf32> to vector<25x25xf32>
    %cst_87 = arith.constant dense<0.000000e+00> : vector<25x64xf32>
    %98 = tpu.matmul %97, %95, %cst_87 {dimension_numbers = #tpu.dot_dimension_numbers<[1], [0], [0], [1], [0, 0, 1, 1], [], []>} : vector<25x25xf32>, vector<25x64xf32>, vector<25x64xf32> -> vector<25x64xf32>
    %cst_88 = arith.constant dense<0.000000e+00> : vector<25x128xf32>
    %99 = tpu.matmul %98, %0, %cst_88 {dimension_numbers = #tpu.dot_dimension_numbers<[1], [0], [0], [1], [0, 0, 1, 1], [], []>} : vector<25x64xf32>, vector<64x128xf32>, vector<25x128xf32> -> vector<25x128xf32>
    %cst_89 = arith.constant dense<0.000000e+00> : vector<25x128xf32>
    %100 = tpu.matmul %95, %1, %cst_89 {dimension_numbers = #tpu.dot_dimension_numbers<[1], [0], [0], [1], [0, 0, 1, 1], [], []>} : vector<25x64xf32>, vector<64x128xf32>, vector<25x128xf32> -> vector<25x128xf32>
    %101 = arith.addf %99, %100 : vector<25x128xf32>
    %102 = vector.broadcast %2 : vector<1x128xf32> to vector<25x128xf32>
    %103 = arith.addf %101, %102 : vector<25x128xf32>
    %c7_90 = arith.constant 7 : index
    %c0_91 = arith.constant 0 : index
    %c0_92 = arith.constant 0 : index
    %104 = vector.load %arg6[%c7_90, %c0_91, %c0_92] : memref<8x25x128xf32, #tpu.memory_space<vmem>>, vector<1x25x128xf32>
    %105 = vector.shape_cast %104 : vector<1x25x128xf32> to vector<25x128xf32>
    %106 = vector.shape_cast %103 : vector<25x128xf32> to vector<1x25x128xf32>
    tpu.vector_store %arg6[%c7_90, %c0_91, %c0_92], %106 {strides = array<i32>} : memref<8x25x128xf32, #tpu.memory_space<vmem>>, vector<1x25x128xf32>,
    return
  }
  func.func @transform_0(%arg0: i32) -> (i32, i32, i32) {
    %c0_i32 = arith.constant 0 : i32
    %c0_i32_0 = arith.constant 0 : i32
    %c0_i32_1 = arith.constant 0 : i32
    return %arg0, %c0_i32, %c0_i32_0 : i32, i32, i32
  }
  func.func @transform_1(%arg0: i32) -> (i32, i32, i32) {
    %c0_i32 = arith.constant 0 : i32
    %c0_i32_0 = arith.constant 0 : i32
    %c0_i32_1 = arith.constant 0 : i32
    return %arg0, %c0_i32, %c0_i32_0 : i32, i32, i32
  }
  func.func @transform_2(%arg0: i32) -> (i32, i32) {
    %c0_i32 = arith.constant 0 : i32
    %c0_i32_0 = arith.constant 0 : i32
    %c0_i32_1 = arith.constant 0 : i32
    return %c0_i32, %c0_i32_0 : i32, i32
  }
  func.func @transform_3(%arg0: i32) -> (i32, i32) {
    %c0_i32 = arith.constant 0 : i32
    %c0_i32_0 = arith.constant 0 : i32
    %c0_i32_1 = arith.constant 0 : i32
    return %c0_i32, %c0_i32_0 : i32, i32
  }
  func.func @transform_4(%arg0: i32) -> (i32, i32) {
    %c0_i32 = arith.constant 0 : i32
    %c0_i32_0 = arith.constant 0 : i32
    %c0_i32_1 = arith.constant 0 : i32
    return %c0_i32, %c0_i32_0 : i32, i32
  }
  func.func @transform_5(%arg0: i32) -> (i32, i32, i32) {
    %c0_i32 = arith.constant 0 : i32
    %c0_i32_0 = arith.constant 0 : i32
    %c0_i32_1 = arith.constant 0 : i32
    return %arg0, %c0_i32, %c0_i32_0 : i32, i32, i32
  }
}

module attributes {stable_mosaic.version = 11 : i64} {
  func.func @_bn_relu_kernel(%arg0: i32, %arg1: memref<400x128xf32, #tpu.memory_space<vmem>>, %arg2: memref<1x128xf32, #tpu.memory_space<vmem>>, %arg3: memref<1x128xf32, #tpu.memory_space<vmem>>, %arg4: memref<400x128xf32, #tpu.memory_space<vmem>>) attributes {dimension_semantics = [#tpu.dimension_semantics<parallel>], iteration_bounds = array<i64: 1>, scalar_prefetch = 0 : i64, scratch_operands = 0 : i64, tpu.core_type = #tpu.core_type<tc>, window_params = [{transform_indices = @transform_0, window_bounds = array<i64: 400, 128>}, {transform_indices = @transform_1, window_bounds = array<i64: 1, 128>}, {transform_indices = @transform_2, window_bounds = array<i64: 1, 128>}, {transform_indices = @transform_3, window_bounds = array<i64: 400, 128>}]} {
    %c0 = arith.constant 0 : index
    %c0_0 = arith.constant 0 : index
    %0 = vector.load %arg1[%c0, %c0_0] : memref<400x128xf32, #tpu.memory_space<vmem>>, vector<400x128xf32>
    %cst = arith.constant dense<0.000000e+00> : vector<128xf32>
    %1 = vector.multi_reduction <add>, %0, %cst [0] : vector<400x128xf32> to vector<128xf32>
    %2 = vector.shape_cast %1 : vector<128xf32> to vector<1x128xf32>
    %cst_1 = arith.constant 4.000000e+02 : f32
    %3 = vector.broadcast %cst_1 : f32 to vector<1x128xf32>
    %4 = arith.divf %2, %3 : vector<1x128xf32>
    %5 = vector.broadcast %4 : vector<1x128xf32> to vector<400x128xf32>
    %6 = arith.subf %0, %5 : vector<400x128xf32>
    %7 = arith.mulf %6, %6 : vector<400x128xf32>
    %cst_2 = arith.constant dense<0.000000e+00> : vector<128xf32>
    %8 = vector.multi_reduction <add>, %7, %cst_2 [0] : vector<400x128xf32> to vector<128xf32>
    %9 = vector.shape_cast %8 : vector<128xf32> to vector<1x128xf32>
    %cst_3 = arith.constant 4.000000e+02 : f32
    %10 = vector.broadcast %cst_3 : f32 to vector<1x128xf32>
    %11 = arith.divf %9, %10 : vector<1x128xf32>
    %cst_4 = arith.constant 9.99999974E-6 : f32
    %12 = vector.broadcast %cst_4 : f32 to vector<1x128xf32>
    %13 = arith.addf %11, %12 : vector<1x128xf32>
    %14 = math.rsqrt %13 : vector<1x128xf32>
    %c0_5 = arith.constant 0 : index
    %c0_6 = arith.constant 0 : index
    %15 = vector.load %arg2[%c0_5, %c0_6] : memref<1x128xf32, #tpu.memory_space<vmem>>, vector<1x128xf32>
    %16 = arith.mulf %14, %15 : vector<1x128xf32>
    %c0_7 = arith.constant 0 : index
    %c0_8 = arith.constant 0 : index
    %17 = vector.load %arg3[%c0_7, %c0_8] : memref<1x128xf32, #tpu.memory_space<vmem>>, vector<1x128xf32>
    %18 = arith.mulf %4, %16 : vector<1x128xf32>
    %19 = arith.subf %17, %18 : vector<1x128xf32>
    %20 = vector.broadcast %16 : vector<1x128xf32> to vector<400x128xf32>
    %21 = arith.mulf %0, %20 : vector<400x128xf32>
    %22 = vector.broadcast %19 : vector<1x128xf32> to vector<400x128xf32>
    %23 = arith.addf %21, %22 : vector<400x128xf32>
    %cst_9 = arith.constant 0.000000e+00 : f32
    %24 = vector.broadcast %cst_9 : f32 to vector<400x128xf32>
    %25 = arith.maximumf %23, %24 : vector<400x128xf32>
    %c0_10 = arith.constant 0 : index
    %c0_11 = arith.constant 0 : index
    %26 = vector.load %arg4[%c0_10, %c0_11] : memref<400x128xf32, #tpu.memory_space<vmem>>, vector<400x128xf32>
    tpu.vector_store %arg4[%c0_10, %c0_11], %25 {strides = array<i32>} : memref<400x128xf32, #tpu.memory_space<vmem>>, vector<400x128xf32>,
    return
  }
  func.func @transform_0(%arg0: i32) -> (i32, i32) {
    %c0_i32 = arith.constant 0 : i32
    %c0_i32_0 = arith.constant 0 : i32
    return %c0_i32, %arg0 : i32, i32
  }
  func.func @transform_1(%arg0: i32) -> (i32, i32) {
    %c0_i32 = arith.constant 0 : i32
    %c0_i32_0 = arith.constant 0 : i32
    return %c0_i32, %arg0 : i32, i32
  }
  func.func @transform_2(%arg0: i32) -> (i32, i32) {
    %c0_i32 = arith.constant 0 : i32
    %c0_i32_0 = arith.constant 0 : i32
    return %c0_i32, %arg0 : i32, i32
  }
  func.func @transform_3(%arg0: i32) -> (i32, i32) {
    %c0_i32 = arith.constant 0 : i32
    %c0_i32_0 = arith.constant 0 : i32
    return %c0_i32, %arg0 : i32, i32
  }
}

</mosaic_0001>

<llo_original>
// kernel: gcn_spa_forward.3
$region0: #{gcn_spa_forward.3}
  #allocation0 [shape = 'u32[]', space=smem, size = 0x4, offset = 0x4, fixed_abs, tag = 'smem constant byte address 0x4 - core index']
  #allocation1 [shape = 'u32[144,128]{1,0:T(1,128)}', space=vmem, size = 0x12000, scoped, tag = 'internal scratch']
  %s0 = inlined_call_operand.vmem [shape: f32[400,128], index: 0, kind: input, shape index: {}]
  %s1 = inlined_call_operand.vmem [shape: f32[1,128], index: 1, kind: input, shape index: {}]
  %s2 = inlined_call_operand.vmem [shape: f32[1,128], index: 2, kind: input, shape index: {}]
  %s3 = inlined_call_operand.vmem [shape: f32[400,128], index: 3, kind: output, shape index: {}]
  %s4 = sld [smem:[#allocation0]]
  $region22: #{gcn_spa_forward.3} parent=0
    _
  %s6 = ssub.s32 1, %s4
  %s7 = scalar_select 0, %s6, %s4
  // Predicated region
  $region2: #{gcn_spa_forward.3} parent=0 // pred_check
    _
  $region3: #{gcn_spa_forward.3} parent=0 // pred_check_branch
    %9 = sbr.rel (0) target = $region5
  $region4: #{gcn_spa_forward.3} parent=0 // pred_region
    _
  $region5: #{gcn_spa_forward.3} parent=0 // pred_fallthru
    _
  // Predicated region
  $region6: #{gcn_spa_forward.3} parent=0 // pred_check
    _
  $region7: #{gcn_spa_forward.3} parent=0 // pred_check_branch
    %11 = sbr.rel (0) target = $region9
  $region8: #{gcn_spa_forward.3} parent=0 // pred_region
    _
  $region9: #{gcn_spa_forward.3} parent=0 // pred_fallthru
    _
  // Predicated region
  $region10: #{gcn_spa_forward.3} parent=0 // pred_check
    _
  $region11: #{gcn_spa_forward.3} parent=0 // pred_check_branch
    %13 = sbr.rel (0) target = $region13
  $region12: #{gcn_spa_forward.3} parent=0 // pred_region
    _
  $region13: #{gcn_spa_forward.3} parent=0 // pred_fallthru
    _
  %v14 = vld [vmem:[%s0] sm:$0xff]
  %v15 = vld [vmem:[%s0 + $0x8] sm:$0xff]
  %v16 = vld [vmem:[%s0 + $0x10] sm:$0xff]
  %v17 = vld [vmem:[%s0 + $0x18] sm:$0xff]
  %v18 = vld [vmem:[%s0 + $0x20] sm:$0xff]
  %v19 = vld [vmem:[%s0 + $0x28] sm:$0xff]
  %v20 = vld [vmem:[%s0 + $0x30] sm:$0xff]
  %v21 = vld [vmem:[%s0 + $0x38] sm:$0xff]
  %v22 = vld [vmem:[%s0 + $0x40] sm:$0xff]
  %v23 = vld [vmem:[%s0 + $0x48] sm:$0xff]
  %v24 = vld [vmem:[%s0 + $0x50] sm:$0xff]
  %v25 = vld [vmem:[%s0 + $0x58] sm:$0xff]
  %v26 = vld [vmem:[%s0 + $0x60] sm:$0xff]
  %v27 = vld [vmem:[%s0 + $0x68] sm:$0xff]
  %v28 = vld [vmem:[%s0 + $0x70] sm:$0xff]
  %v29 = vld [vmem:[%s0 + $0x78] sm:$0xff]
  %v30 = vld [vmem:[%s0 + $0x80] sm:$0xff]
  %v31 = vld [vmem:[%s0 + $0x88] sm:$0xff]
  %v32 = vld [vmem:[%s0 + $0x90] sm:$0xff]
  %v33 = vld [vmem:[%s0 + $0x98] sm:$0xff]
  %v34 = vld [vmem:[%s0 + $0xa0] sm:$0xff]
  %v35 = vld [vmem:[%s0 + $0xa8] sm:$0xff]
  %v36 = vld [vmem:[%s0 + $0xb0] sm:$0xff]
  %v37 = vld [vmem:[%s0 + $0xb8] sm:$0xff]
  %v38 = vld [vmem:[%s0 + $0xc0] sm:$0xff]
  %v39 = vld [vmem:[%s0 + $0xc8] sm:$0xff]
  %v40 = vld [vmem:[%s0 + $0xd0] sm:$0xff]
  %v41 = vld [vmem:[%s0 + $0xd8] sm:$0xff]
  %v42 = vld [vmem:[%s0 + $0xe0] sm:$0xff]
  %v43 = vld [vmem:[%s0 + $0xe8] sm:$0xff]
  %v44 = vld [vmem:[%s0 + $0xf0] sm:$0xff]
  %v45 = vld [vmem:[%s0 + $0xf8] sm:$0xff]
  %v46 = vld [vmem:[%s0 + $0x100] sm:$0xff]
  %v47 = vld [vmem:[%s0 + $0x108] sm:$0xff]
  %v48 = vld [vmem:[%s0 + $0x110] sm:$0xff]
  %v49 = vld [vmem:[%s0 + $0x118] sm:$0xff]
  %v50 = vld [vmem:[%s0 + $0x120] sm:$0xff]
  %v51 = vld [vmem:[%s0 + $0x128] sm:$0xff]
  %v52 = vld [vmem:[%s0 + $0x130] sm:$0xff]
  %v53 = vld [vmem:[%s0 + $0x138] sm:$0xff]
  %v54 = vld [vmem:[%s0 + $0x140] sm:$0xff]
  %v55 = vld [vmem:[%s0 + $0x148] sm:$0xff]
  %v56 = vld [vmem:[%s0 + $0x150] sm:$0xff]
  %v57 = vld [vmem:[%s0 + $0x158] sm:$0xff]
  %v58 = vld [vmem:[%s0 + $0x160] sm:$0xff]
  %v59 = vld [vmem:[%s0 + $0x168] sm:$0xff]
  %v60 = vld [vmem:[%s0 + $0x170] sm:$0xff]
  %v61 = vld [vmem:[%s0 + $0x178] sm:$0xff]
  %v62 = vld [vmem:[%s0 + $0x180] sm:$0xff]
  %v63 = vld [vmem:[%s0 + $0x188] sm:$0xff]
  %v64 = vadd.f32 %v14, %v15
  %v65 = vadd.f32 %v64, %v16
  %v66 = vadd.f32 %v65, %v17
  %v67 = vadd.f32 %v66, %v18
  %v68 = vadd.f32 %v67, %v19
  %v69 = vadd.f32 %v68, %v20
  %v70 = vadd.f32 %v69, %v21
  %v71 = vadd.f32 %v70, %v22
  %v72 = vadd.f32 %v71, %v23
  %v73 = vadd.f32 %v72, %v24
  %v74 = vadd.f32 %v73, %v25
  %v75 = vadd.f32 %v74, %v26
  %v76 = vadd.f32 %v75, %v27
  %v77 = vadd.f32 %v76, %v28
  %v78 = vadd.f32 %v77, %v29
  %v79 = vadd.f32 %v78, %v30
  %v80 = vadd.f32 %v79, %v31
  %v81 = vadd.f32 %v80, %v32
  %v82 = vadd.f32 %v81, %v33
  %v83 = vadd.f32 %v82, %v34
  %v84 = vadd.f32 %v83, %v35
  %v85 = vadd.f32 %v84, %v36
  %v86 = vadd.f32 %v85, %v37
  %v87 = vadd.f32 %v86, %v38
  %v88 = vadd.f32 %v87, %v39
  %v89 = vadd.f32 %v88, %v40
  %v90 = vadd.f32 %v89, %v41
  %v91 = vadd.f32 %v90, %v42
  %v92 = vadd.f32 %v91, %v43
  %v93 = vadd.f32 %v92, %v44
  %v94 = vadd.f32 %v93, %v45
  %v95 = vadd.f32 %v94, %v46
  %v96 = vadd.f32 %v95, %v47
  %v97 = vadd.f32 %v96, %v48
  %v98 = vadd.f32 %v97, %v49
  %v99 = vadd.f32 %v98, %v50
  %v100 = vadd.f32 %v99, %v51
  %v101 = vadd.f32 %v100, %v52
  %v102 = vadd.f32 %v101, %v53
  %v103 = vadd.f32 %v102, %v54
  %v104 = vadd.f32 %v103, %v55
  %v105 = vadd.f32 %v104, %v56
  %v106 = vadd.f32 %v105, %v57
  %v107 = vadd.f32 %v106, %v58
  %v108 = vadd.f32 %v107, %v59
  %v109 = vadd.f32 %v108, %v60
  %v110 = vadd.f32 %v109, %v61
  %v111 = vadd.f32 %v110, %v62
  %v112 = vadd.f32 %v111, %v63
  %v113 = vrot.slane %v112, 4
  %v114 = vadd.f32 %v112, %v113
  %v115 = vrot.slane %v114, 2
  %v116 = vadd.f32 %v114, %v115
  %v117 = vrot.slane %v116, 1
  %v118 = vadd.f32 %v116, %v117
  %v119 = vrcp.pop 400.0
  %v120 = vmul.f32 %v118, %v119
  %v121 = vsub.f32 %v14, %v120
  %v122 = vsub.f32 %v15, %v120
  %v123 = vsub.f32 %v16, %v120
  %v124 = vsub.f32 %v17, %v120
  %v125 = vsub.f32 %v18, %v120
  %v126 = vsub.f32 %v19, %v120
  %v127 = vsub.f32 %v20, %v120
  %v128 = vsub.f32 %v21, %v120
  %v129 = vsub.f32 %v22, %v120
  %v130 = vsub.f32 %v23, %v120
  %v131 = vsub.f32 %v24, %v120
  %v132 = vsub.f32 %v25, %v120
  %v133 = vsub.f32 %v26, %v120
  %v134 = vsub.f32 %v27, %v120
  %v135 = vsub.f32 %v28, %v120
  %v136 = vsub.f32 %v29, %v120
  %v137 = vsub.f32 %v30, %v120
  %v138 = vsub.f32 %v31, %v120
  %v139 = vsub.f32 %v32, %v120
  %v140 = vsub.f32 %v33, %v120
  %v141 = vsub.f32 %v34, %v120
  %v142 = vsub.f32 %v35, %v120
  %v143 = vsub.f32 %v36, %v120
  %v144 = vsub.f32 %v37, %v120
  %v145 = vsub.f32 %v38, %v120
  %v146 = vsub.f32 %v39, %v120
  %v147 = vsub.f32 %v40, %v120
  %v148 = vsub.f32 %v41, %v120
  %v149 = vsub.f32 %v42, %v120
  %v150 = vsub.f32 %v43, %v120
  %v151 = vsub.f32 %v44, %v120
  %v152 = vsub.f32 %v45, %v120
  %v153 = vsub.f32 %v46, %v120
  %v154 = vsub.f32 %v47, %v120
  %v155 = vsub.f32 %v48, %v120
  %v156 = vsub.f32 %v49, %v120
  %v157 = vsub.f32 %v50, %v120
  %v158 = vsub.f32 %v51, %v120
  %v159 = vsub.f32 %v52, %v120
  %v160 = vsub.f32 %v53, %v120
  %v161 = vsub.f32 %v54, %v120
  %v162 = vsub.f32 %v55, %v120
  %v163 = vsub.f32 %v56, %v120
  %v164 = vsub.f32 %v57, %v120
  %v165 = vsub.f32 %v58, %v120
  %v166 = vsub.f32 %v59, %v120
  %v167 = vsub.f32 %v60, %v120
  %v168 = vsub.f32 %v61, %v120
  %v169 = vsub.f32 %v62, %v120
  %v170 = vsub.f32 %v63, %v120
  %v171 = vmul.f32 %v121, %v121
  %v172 = vmul.f32 %v122, %v122
  %v173 = vmul.f32 %v123, %v123
  %v174 = vmul.f32 %v124, %v124
  %v175 = vmul.f32 %v125, %v125
  %v176 = vmul.f32 %v126, %v126
  %v177 = vmul.f32 %v127, %v127
  %v178 = vmul.f32 %v128, %v128
  %v179 = vmul.f32 %v129, %v129
  %v180 = vmul.f32 %v130, %v130
  %v181 = vmul.f32 %v131, %v131
  %v182 = vmul.f32 %v132, %v132
  %v183 = vmul.f32 %v133, %v133
  %v184 = vmul.f32 %v134, %v134
  %v185 = vmul.f32 %v135, %v135
  %v186 = vmul.f32 %v136, %v136
  %v187 = vmul.f32 %v137, %v137
  %v188 = vmul.f32 %v138, %v138
  %v189 = vmul.f32 %v139, %v139
  %v190 = vmul.f32 %v140, %v140
  %v191 = vmul.f32 %v141, %v141
  %v192 = vmul.f32 %v142, %v142
  %v193 = vmul.f32 %v143, %v143
  %v194 = vmul.f32 %v144, %v144
  %v195 = vmul.f32 %v145, %v145
  %v196 = vmul.f32 %v146, %v146
  %v197 = vmul.f32 %v147, %v147
  %v198 = vmul.f32 %v148, %v148
  %v199 = vmul.f32 %v149, %v149
  %v200 = vmul.f32 %v150, %v150
  %v201 = vmul.f32 %v151, %v151
  %v202 = vmul.f32 %v152, %v152
  %v203 = vmul.f32 %v153, %v153
  %v204 = vmul.f32 %v154, %v154
  %v205 = vmul.f32 %v155, %v155
  %v206 = vmul.f32 %v156, %v156
  %v207 = vmul.f32 %v157, %v157
  %v208 = vmul.f32 %v158, %v158
  %v209 = vmul.f32 %v159, %v159
  %v210 = vmul.f32 %v160, %v160
  %v211 = vmul.f32 %v161, %v161
  %v212 = vmul.f32 %v162, %v162
  %v213 = vmul.f32 %v163, %v163
  %v214 = vmul.f32 %v164, %v164
  %v215 = vmul.f32 %v165, %v165
  %v216 = vmul.f32 %v166, %v166
  %v217 = vmul.f32 %v167, %v167
  %v218 = vmul.f32 %v168, %v168
  %v219 = vmul.f32 %v169, %v169
  %v220 = vmul.f32 %v170, %v170
  %v221 = vadd.f32 %v171, %v172
  %v222 = vadd.f32 %v221, %v173
  %v223 = vadd.f32 %v222, %v174
  %v224 = vadd.f32 %v223, %v175
  %v225 = vadd.f32 %v224, %v176
  %v226 = vadd.f32 %v225, %v177
  %v227 = vadd.f32 %v226, %v178
  %v228 = vadd.f32 %v227, %v179
  %v229 = vadd.f32 %v228, %v180
  %v230 = vadd.f32 %v229, %v181
  %v231 = vadd.f32 %v230, %v182
  %v232 = vadd.f32 %v231, %v183
  %v233 = vadd.f32 %v232, %v184
  %v234 = vadd.f32 %v233, %v185
  %v235 = vadd.f32 %v234, %v186
  %v236 = vadd.f32 %v235, %v187
  %v237 = vadd.f32 %v236, %v188
  %v238 = vadd.f32 %v237, %v189
  %v239 = vadd.f32 %v238, %v190
  %v240 = vadd.f32 %v239, %v191
  %v241 = vadd.f32 %v240, %v192
  %v242 = vadd.f32 %v241, %v193
  %v243 = vadd.f32 %v242, %v194
  %v244 = vadd.f32 %v243, %v195
  %v245 = vadd.f32 %v244, %v196
  %v246 = vadd.f32 %v245, %v197
  %v247 = vadd.f32 %v246, %v198
  %v248 = vadd.f32 %v247, %v199
  %v249 = vadd.f32 %v248, %v200
  %v250 = vadd.f32 %v249, %v201
  %v251 = vadd.f32 %v250, %v202
  %v252 = vadd.f32 %v251, %v203
  %v253 = vadd.f32 %v252, %v204
  %v254 = vadd.f32 %v253, %v205
  %v255 = vadd.f32 %v254, %v206
  %v256 = vadd.f32 %v255, %v207
  %v257 = vadd.f32 %v256, %v208
  %v258 = vadd.f32 %v257, %v209
  %v259 = vadd.f32 %v258, %v210
  %v260 = vadd.f32 %v259, %v211
  %v261 = vadd.f32 %v260, %v212
  %v262 = vadd.f32 %v261, %v213
  %v263 = vadd.f32 %v262, %v214
  %v264 = vadd.f32 %v263, %v215
  %v265 = vadd.f32 %v264, %v216
  %v266 = vadd.f32 %v265, %v217
  %v267 = vadd.f32 %v266, %v218
  %v268 = vadd.f32 %v267, %v219
  %v269 = vadd.f32 %v268, %v220
  %v270 = vrot.slane %v269, 4
  %v271 = vadd.f32 %v269, %v270
  %v272 = vrot.slane %v271, 2
  %v273 = vadd.f32 %v271, %v272
  %v274 = vrot.slane %v273, 1
  %v275 = vadd.f32 %v273, %v274
  %v276 = vmul.f32 %v275, %v119
  %v277 = vadd.f32 %v276, 1e-05
  %v278 = vrsqrt.pop %v277
  %v279 = vld [vmem:[%s1] sm:$0x1]
  %v280 = vmul.f32 %v278, %v279
  %v281 = vld [vmem:[%s2] sm:$0x1]
  %v282 = vmul.f32 %v120, %v280
  %v283 = vsub.f32 %v281, %v282
  %v284 = vlaneseq
  %v285 = vshrl.u32 %v284, 7
  %v286 = vsub.s32 0, %v285
  %v287 = vrot.slane %v280, %v286
  %v288 = vmul.f32 %v14, %v287
  %v289 = vmul.f32 %v15, %v287
  %v290 = vmul.f32 %v16, %v287
  %v291 = vmul.f32 %v17, %v287
  %v292 = vmul.f32 %v18, %v287
  %v293 = vmul.f32 %v19, %v287
  %v294 = vmul.f32 %v20, %v287
  %v295 = vmul.f32 %v21, %v287
  %v296 = vmul.f32 %v22, %v287
  %v297 = vmul.f32 %v23, %v287
  %v298 = vmul.f32 %v24, %v287
  %v299 = vmul.f32 %v25, %v287
  %v300 = vmul.f32 %v26, %v287
  %v301 = vmul.f32 %v27, %v287
  %v302 = vmul.f32 %v28, %v287
  %v303 = vmul.f32 %v29, %v287
  %v304 = vmul.f32 %v30, %v287
  %v305 = vmul.f32 %v31, %v287
  %v306 = vmul.f32 %v32, %v287
  %v307 = vmul.f32 %v33, %v287
  %v308 = vmul.f32 %v34, %v287
  %v309 = vmul.f32 %v35, %v287
  %v310 = vmul.f32 %v36, %v287
  %v311 = vmul.f32 %v37, %v287
  %v312 = vmul.f32 %v38, %v287
  %v313 = vmul.f32 %v39, %v287
  %v314 = vmul.f32 %v40, %v287
  %v315 = vmul.f32 %v41, %v287
  %v316 = vmul.f32 %v42, %v287
  %v317 = vmul.f32 %v43, %v287
  %v318 = vmul.f32 %v44, %v287
  %v319 = vmul.f32 %v45, %v287
  %v320 = vmul.f32 %v46, %v287
  %v321 = vmul.f32 %v47, %v287
  %v322 = vmul.f32 %v48, %v287
  %v323 = vmul.f32 %v49, %v287
  %v324 = vmul.f32 %v50, %v287
  %v325 = vmul.f32 %v51, %v287
  %v326 = vmul.f32 %v52, %v287
  %v327 = vmul.f32 %v53, %v287
  %v328 = vmul.f32 %v54, %v287
  %v329 = vmul.f32 %v55, %v287
  %v330 = vmul.f32 %v56, %v287
  %v331 = vmul.f32 %v57, %v287
  %v332 = vmul.f32 %v58, %v287
  %v333 = vmul.f32 %v59, %v287
  %v334 = vmul.f32 %v60, %v287
  %v335 = vmul.f32 %v61, %v287
  %v336 = vmul.f32 %v62, %v287
  %v337 = vmul.f32 %v63, %v287
  %v339 = vlaneseq
  %v340 = vshrl.u32 %v339, 7
  %v341 = vsub.s32 0, %v340
  %v342 = vrot.slane %v283, %v341
  %v344 = vadd.f32 %v288, %v342
  %v345 = vadd.f32 %v289, %v342
  %v346 = vadd.f32 %v290, %v342
  %v347 = vadd.f32 %v291, %v342
  %v348 = vadd.f32 %v292, %v342
  %v349 = vadd.f32 %v293, %v342
  %v350 = vadd.f32 %v294, %v342
  %v351 = vadd.f32 %v295, %v342
  %v352 = vadd.f32 %v296, %v342
  %v353 = vadd.f32 %v297, %v342
  %v354 = vadd.f32 %v298, %v342
  %v355 = vadd.f32 %v299, %v342
  %v356 = vadd.f32 %v300, %v342
  %v357 = vadd.f32 %v301, %v342
  %v358 = vadd.f32 %v302, %v342
  %v359 = vadd.f32 %v303, %v342
  %v360 = vadd.f32 %v304, %v342
  %v361 = vadd.f32 %v305, %v342
  %v362 = vadd.f32 %v306, %v342
  %v363 = vadd.f32 %v307, %v342
  %v364 = vadd.f32 %v308, %v342
  %v365 = vadd.f32 %v309, %v342
  %v366 = vadd.f32 %v310, %v342
  %v367 = vadd.f32 %v311, %v342
  %v368 = vadd.f32 %v312, %v342
  %v369 = vadd.f32 %v313, %v342
  %v370 = vadd.f32 %v314, %v342
  %v371 = vadd.f32 %v315, %v342
  %v372 = vadd.f32 %v316, %v342
  %v373 = vadd.f32 %v317, %v342
  %v374 = vadd.f32 %v318, %v342
  %v375 = vadd.f32 %v319, %v342
  %v376 = vadd.f32 %v320, %v342
  %v377 = vadd.f32 %v321, %v342
  %v378 = vadd.f32 %v322, %v342
  %v379 = vadd.f32 %v323, %v342
  %v380 = vadd.f32 %v324, %v342
  %v381 = vadd.f32 %v325, %v342
  %v382 = vadd.f32 %v326, %v342
  %v383 = vadd.f32 %v327, %v342
  %v384 = vadd.f32 %v328, %v342
  %v385 = vadd.f32 %v329, %v342
  %v386 = vadd.f32 %v330, %v342
  %v387 = vadd.f32 %v331, %v342
  %v388 = vadd.f32 %v332, %v342
  %v389 = vadd.f32 %v333, %v342
  %v390 = vadd.f32 %v334, %v342
  %v391 = vadd.f32 %v335, %v342
  %v392 = vadd.f32 %v336, %v342
  %v393 = vadd.f32 %v337, %v342
  %v394 = vmax.f32 %v344, 0.0
  %v395 = vmax.f32 %v345, 0.0
  %v396 = vmax.f32 %v346, 0.0
  %v397 = vmax.f32 %v347, 0.0
  %v398 = vmax.f32 %v348, 0.0
  %v399 = vmax.f32 %v349, 0.0
  %v400 = vmax.f32 %v350, 0.0
  %v401 = vmax.f32 %v351, 0.0
  %v402 = vmax.f32 %v352, 0.0
  %v403 = vmax.f32 %v353, 0.0
  %v404 = vmax.f32 %v354, 0.0
  %v405 = vmax.f32 %v355, 0.0
  %v406 = vmax.f32 %v356, 0.0
  %v407 = vmax.f32 %v357, 0.0
  %v408 = vmax.f32 %v358, 0.0
  %v409 = vmax.f32 %v359, 0.0
  %v410 = vmax.f32 %v360, 0.0
  %v411 = vmax.f32 %v361, 0.0
  %v412 = vmax.f32 %v362, 0.0
  %v413 = vmax.f32 %v363, 0.0
  %v414 = vmax.f32 %v364, 0.0
  %v415 = vmax.f32 %v365, 0.0
  %v416 = vmax.f32 %v366, 0.0
  %v417 = vmax.f32 %v367, 0.0
  %v418 = vmax.f32 %v368, 0.0
  %v419 = vmax.f32 %v369, 0.0
  %v420 = vmax.f32 %v370, 0.0
  %v421 = vmax.f32 %v371, 0.0
  %v422 = vmax.f32 %v372, 0.0
  %v423 = vmax.f32 %v373, 0.0
  %v424 = vmax.f32 %v374, 0.0
  %v425 = vmax.f32 %v375, 0.0
  %v426 = vmax.f32 %v376, 0.0
  %v427 = vmax.f32 %v377, 0.0
  %v428 = vmax.f32 %v378, 0.0
  %v429 = vmax.f32 %v379, 0.0
  %v430 = vmax.f32 %v380, 0.0
  %v431 = vmax.f32 %v381, 0.0
  %v432 = vmax.f32 %v382, 0.0
  %v433 = vmax.f32 %v383, 0.0
  %v434 = vmax.f32 %v384, 0.0
  %v435 = vmax.f32 %v385, 0.0
  %v436 = vmax.f32 %v386, 0.0
  %v437 = vmax.f32 %v387, 0.0
  %v438 = vmax.f32 %v388, 0.0
  %v439 = vmax.f32 %v389, 0.0
  %v440 = vmax.f32 %v390, 0.0
  %v441 = vmax.f32 %v391, 0.0
  %v442 = vmax.f32 %v392, 0.0
  %v443 = vmax.f32 %v393, 0.0
  %444 = vst [vmem:[%s3] sm:$0xff] %v394
  %445 = vst [vmem:[%s3 + $0x8] sm:$0xff] %v395
  %446 = vst [vmem:[%s3 + $0x10] sm:$0xff] %v396
  %447 = vst [vmem:[%s3 + $0x18] sm:$0xff] %v397
  %448 = vst [vmem:[%s3 + $0x20] sm:$0xff] %v398
  %449 = vst [vmem:[%s3 + $0x28] sm:$0xff] %v399
  %450 = vst [vmem:[%s3 + $0x30] sm:$0xff] %v400
  %451 = vst [vmem:[%s3 + $0x38] sm:$0xff] %v401
  %452 = vst [vmem:[%s3 + $0x40] sm:$0xff] %v402
  %453 = vst [vmem:[%s3 + $0x48] sm:$0xff] %v403
  %454 = vst [vmem:[%s3 + $0x50] sm:$0xff] %v404
  %455 = vst [vmem:[%s3 + $0x58] sm:$0xff] %v405
  %456 = vst [vmem:[%s3 + $0x60] sm:$0xff] %v406
  %457 = vst [vmem:[%s3 + $0x68] sm:$0xff] %v407
  %458 = vst [vmem:[%s3 + $0x70] sm:$0xff] %v408
  %459 = vst [vmem:[%s3 + $0x78] sm:$0xff] %v409
  %460 = vst [vmem:[%s3 + $0x80] sm:$0xff] %v410
  %461 = vst [vmem:[%s3 + $0x88] sm:$0xff] %v411
  %462 = vst [vmem:[%s3 + $0x90] sm:$0xff] %v412
  %463 = vst [vmem:[%s3 + $0x98] sm:$0xff] %v413
  %464 = vst [vmem:[%s3 + $0xa0] sm:$0xff] %v414
  %465 = vst [vmem:[%s3 + $0xa8] sm:$0xff] %v415
  %466 = vst [vmem:[%s3 + $0xb0] sm:$0xff] %v416
  %467 = vst [vmem:[%s3 + $0xb8] sm:$0xff] %v417
  %468 = vst [vmem:[%s3 + $0xc0] sm:$0xff] %v418
  %469 = vst [vmem:[%s3 + $0xc8] sm:$0xff] %v419
  %470 = vst [vmem:[%s3 + $0xd0] sm:$0xff] %v420
  %471 = vst [vmem:[%s3 + $0xd8] sm:$0xff] %v421
  %472 = vst [vmem:[%s3 + $0xe0] sm:$0xff] %v422
  %473 = vst [vmem:[%s3 + $0xe8] sm:$0xff] %v423
  %474 = vst [vmem:[%s3 + $0xf0] sm:$0xff] %v424
  %475 = vst [vmem:[%s3 + $0xf8] sm:$0xff] %v425
  %476 = vst [vmem:[%s3 + $0x100] sm:$0xff] %v426
  %477 = vst [vmem:[%s3 + $0x108] sm:$0xff] %v427
  %478 = vst [vmem:[%s3 + $0x110] sm:$0xff] %v428
  %479 = vst [vmem:[%s3 + $0x118] sm:$0xff] %v429
  %480 = vst [vmem:[%s3 + $0x120] sm:$0xff] %v430
  %481 = vst [vmem:[%s3 + $0x128] sm:$0xff] %v431
  %482 = vst [vmem:[%s3 + $0x130] sm:$0xff] %v432
  %483 = vst [vmem:[%s3 + $0x138] sm:$0xff] %v433
  %484 = vst [vmem:[%s3 + $0x140] sm:$0xff] %v434
  %485 = vst [vmem:[%s3 + $0x148] sm:$0xff] %v435
  %486 = vst [vmem:[%s3 + $0x150] sm:$0xff] %v436
  %487 = vst [vmem:[%s3 + $0x158] sm:$0xff] %v437
  %488 = vst [vmem:[%s3 + $0x160] sm:$0xff] %v438
  %489 = vst [vmem:[%s3 + $0x168] sm:$0xff] %v439
  %490 = vst [vmem:[%s3 + $0x170] sm:$0xff] %v440
  %491 = vst [vmem:[%s3 + $0x178] sm:$0xff] %v441
  %492 = vst [vmem:[%s3 + $0x180] sm:$0xff] %v442
  %493 = vst [vmem:[%s3 + $0x188] sm:$0xff] %v443
  // Predicated region
  $region14: #{gcn_spa_forward.3} parent=0 // pred_check
    _
  $region15: #{gcn_spa_forward.3} parent=0 // pred_check_branch
    %495 = sbr.rel (0) target = $region17
  $region16: #{gcn_spa_forward.3} parent=0 // pred_region
    _
  $region17: #{gcn_spa_forward.3} parent=0 // pred_fallthru
    _
  // Predicated region
  $region18: #{gcn_spa_forward.3} parent=0 // pred_check
    _
  $region19: #{gcn_spa_forward.3} parent=0 // pred_check_branch
    %497 = sbr.rel (0) target = $region21
  $region20: #{gcn_spa_forward.3} parent=0 // pred_region
    _
  $region21: #{gcn_spa_forward.3} parent=0 // pred_fallthru
    _

// kernel: gcn_spa_forward.2
$region0: #{gcn_spa_forward.2}
  #allocation0 [shape = 'u32[]', space=smem, size = 0x4, offset = 0x4, fixed_abs, tag = 'smem constant byte address 0x4 - core index']
  #allocation1 [shape = 'u32[144,128]{1,0:T(1,128)}', space=vmem, size = 0x12000, scoped, tag = 'internal scratch']
  %s0 = inlined_call_operand.vmem [shape: f32[16,25,64], index: 0, kind: input, shape index: {}]
  %s1 = inlined_call_operand.vmem [shape: f32[16,25,25], index: 1, kind: input, shape index: {}]
  %s2 = inlined_call_operand.vmem [shape: f32[64,128], index: 2, kind: input, shape index: {}]
  %s3 = inlined_call_operand.vmem [shape: f32[64,128], index: 3, kind: input, shape index: {}]
  %s4 = inlined_call_operand.vmem [shape: f32[1,128], index: 4, kind: input, shape index: {}]
  %s5 = inlined_call_operand.vmem [shape: f32[16,25,128], index: 5, kind: output, shape index: {}]
  %s6 = sld [smem:[#allocation0]]
  $region53: #{gcn_spa_forward.2} parent=0
    _
  %s8 = ssub.s32 1, %s6
  %s9 = scalar_select 0, %s8, %s6
  loop: start=0, step=1, limit=4
  $region2: #{gcn_spa_forward.2} parent=0 // loop_pre_header
    _
  $region3: #{gcn_spa_forward.2} parent=0 // loop_header
    %s11 = sphi 0, %s15
    %p12 = scmp.ge.s32.totalorder %s11, 4
    %s21 = sphi 0, %s23
    %s24 = sphi 0, %s21
    %s25 = sphi 0, %s24
    %s41 = sphi 0, %s25
    %s47 = sphi 0, %s49
    %s50 = sphi 0, %s47
    %s51 = sphi 0, %s50
    %s67 = sphi 0, %s51
    %s71 = sphi 0, %s71
    %s73 = sphi 0, %s71
    %s74 = sphi 0, %s73
    %s88 = sphi 0, %s74
    %s92 = sphi 0, %s92
    %s94 = sphi 0, %s92
    %s95 = sphi 0, %s94
    %s109 = sphi 0, %s95
    %s113 = sphi 0, %s113
    %s115 = sphi 0, %s113
    %s116 = sphi 0, %s115
    %s130 = sphi 0, %s116
    %s136 = sphi 0, %s138
    %s139 = sphi 0, %s136
    %s140 = sphi 0, %s139
    %s156 = sphi 0, %s140
  $region4: #{gcn_spa_forward.2} parent=0 // loop_header_branch
    %14 = sbr.rel (%p12) target = $region8
  $region5: #{gcn_spa_forward.2} parent=0 // loop_body
    %s16 = ssub.s32 %s11, 1
    %s17 = ssub.s32 %s11, 2
    %s18 = sadd.s32 %s11, 1
    %s19 = ssub.s32 %s11, %s18
    %p20 = scmp.eq.s32.totalorder %s19, 0
    %s22 = sadd.s32 %s21, 1
    %s23 = scalar_select %p20, %s21, %s22
    %p26 = pneg %p20
    %p27 = scmp.eq.s32.totalorder %s11, 1
    %p28 = por %p26, %p27
    %p29 = scmp.ne.s32.totalorder %s21, %s24
    %p30 = scmp.eq.s32.totalorder %s11, 0
    %p31 = por %p29, %p30
    %p32 = scmp.ne.s32.totalorder %s21, %s24
    %p33 = scmp.eq.s32.totalorder %s16, 1
    %p34 = por %p32, %p33
    %p35 = scmp.ne.s32.totalorder %s24, %s25
    %p36 = scmp.eq.s32.totalorder %s16, 0
    %p37 = por %p35, %p36
    %p38 = scmp.ne.s32.totalorder %s24, %s25
    %p39 = scmp.eq.s32.totalorder %s17, 1
    %p40 = por %p38, %p39
    %p42 = scmp.ne.s32.totalorder %s25, %s41
    %p43 = scmp.eq.s32.totalorder %s17, 0
    %p44 = por %p42, %p43
    %s45 = ssub.s32 %s11, %s18
    %p46 = scmp.eq.s32.totalorder %s45, 0
    %s48 = sadd.s32 %s47, 1
    %s49 = scalar_select %p46, %s47, %s48
    %p52 = pneg %p46
    %p53 = scmp.eq.s32.totalorder %s11, 1
    %p54 = por %p52, %p53
    %p55 = scmp.ne.s32.totalorder %s47, %s50
    %p56 = scmp.eq.s32.totalorder %s11, 0
    %p57 = por %p55, %p56
    %p58 = scmp.ne.s32.totalorder %s47, %s50
    %p59 = scmp.eq.s32.totalorder %s16, 1
    %p60 = por %p58, %p59
    %p61 = scmp.ne.s32.totalorder %s50, %s51
    %p62 = scmp.eq.s32.totalorder %s16, 0
    %p63 = por %p61, %p62
    %p64 = scmp.ne.s32.totalorder %s50, %s51
    %p65 = scmp.eq.s32.totalorder %s17, 1
    %p66 = por %p64, %p65
    %p68 = scmp.ne.s32.totalorder %s51, %s67
    %p69 = scmp.eq.s32.totalorder %s17, 0
    %p70 = por %p68, %p69
    %s72 = sadd.s32 %s71, 1
    %p75 = scmp.eq.s32.totalorder %s11, 1
    %p76 = scmp.ne.s32.totalorder %s71, %s73
    %p77 = scmp.eq.s32.totalorder %s11, 0
    %p78 = por %p76, %p77
    %p79 = scmp.ne.s32.totalorder %s71, %s73
    %p80 = scmp.eq.s32.totalorder %s16, 1
    %p81 = por %p79, %p80
    %p82 = scmp.ne.s32.totalorder %s73, %s74
    %p83 = scmp.eq.s32.totalorder %s16, 0
    %p84 = por %p82, %p83
    %p85 = scmp.ne.s32.totalorder %s73, %s74
    %p86 = scmp.eq.s32.totalorder %s17, 1
    %p87 = por %p85, %p86
    %p89 = scmp.ne.s32.totalorder %s74, %s88
    %p90 = scmp.eq.s32.totalorder %s17, 0
    %p91 = por %p89, %p90
    %s93 = sadd.s32 %s92, 1
    %p96 = scmp.eq.s32.totalorder %s11, 1
    %p97 = scmp.ne.s32.totalorder %s92, %s94
    %p98 = scmp.eq.s32.totalorder %s11, 0
    %p99 = por %p97, %p98
    %p100 = scmp.ne.s32.totalorder %s92, %s94
    %p101 = scmp.eq.s32.totalorder %s16, 1
    %p102 = por %p100, %p101
    %p103 = scmp.ne.s32.totalorder %s94, %s95
    %p104 = scmp.eq.s32.totalorder %s16, 0
    %p105 = por %p103, %p104
    %p106 = scmp.ne.s32.totalorder %s94, %s95
    %p107 = scmp.eq.s32.totalorder %s17, 1
    %p108 = por %p106, %p107
    %p110 = scmp.ne.s32.totalorder %s95, %s109
    %p111 = scmp.eq.s32.totalorder %s17, 0
    %p112 = por %p110, %p111
    %s114 = sadd.s32 %s113, 1
    %p117 = scmp.eq.s32.totalorder %s11, 1
    %p118 = scmp.ne.s32.totalorder %s113, %s115
    %p119 = scmp.eq.s32.totalorder %s11, 0
    %p120 = por %p118, %p119
    %p121 = scmp.ne.s32.totalorder %s113, %s115
    %p122 = scmp.eq.s32.totalorder %s16, 1
    %p123 = por %p121, %p122
    %p124 = scmp.ne.s32.totalorder %s115, %s116
    %p125 = scmp.eq.s32.totalorder %s16, 0
    %p126 = por %p124, %p125
    %p127 = scmp.ne.s32.totalorder %s115, %s116
    %p128 = scmp.eq.s32.totalorder %s17, 1
    %p129 = por %p127, %p128
    %p131 = scmp.ne.s32.totalorder %s116, %s130
    %p132 = scmp.eq.s32.totalorder %s17, 0
    %p133 = por %p131, %p132
    %s134 = ssub.s32 %s11, %s18
    %p135 = scmp.eq.s32.totalorder %s134, 0
    %s137 = sadd.s32 %s136, 1
    %s138 = scalar_select %p135, %s136, %s137
    %p141 = pneg %p135
    %p142 = scmp.eq.s32.totalorder %s11, 1
    %p143 = por %p141, %p142
    %p144 = scmp.ne.s32.totalorder %s136, %s139
    %p145 = scmp.eq.s32.totalorder %s11, 0
    %p146 = por %p144, %p145
    %p147 = scmp.ne.s32.totalorder %s136, %s139
    %p148 = scmp.eq.s32.totalorder %s16, 1
    %p149 = por %p147, %p148
    %p150 = scmp.ne.s32.totalorder %s139, %s140
    %p151 = scmp.eq.s32.totalorder %s16, 0
    %p152 = por %p150, %p151
    %p153 = scmp.ne.s32.totalorder %s139, %s140
    %p154 = scmp.eq.s32.totalorder %s17, 1
    %p155 = por %p153, %p154
    %p157 = scmp.ne.s32.totalorder %s140, %s156
    %p158 = scmp.eq.s32.totalorder %s17, 0
    %p159 = por %p157, %p158
    %p160 = scmp.le.s32.totalorder 1, %s11
    %p161 = scmp.lt.s32.totalorder %s11, 3
    %p162 = pnand %p160, %p161
    %p163 = pneg %p162
    // Predicated region
    $region9: #{gcn_spa_forward.2} parent=5 // pred_check
      _
    $region10: #{gcn_spa_forward.2} parent=5 // pred_check_branch
      %165 = sbr.rel (%p162) target = $region12
    $region11: #{gcn_spa_forward.2} parent=5 // pred_region
      %s166 = ssub.s32 %s11, 1
      // Predicated region
      $region13: #{gcn_spa_forward.2} parent=11 // pred_check
        %p167 = pneg %p84
      $region14: #{gcn_spa_forward.2} parent=11 // pred_check_branch
        %169 = sbr.rel (%p167) target = $region16
      $region15: #{gcn_spa_forward.2} parent=11 // pred_region
        _
      $region16: #{gcn_spa_forward.2} parent=11 // pred_fallthru
        _
      // Predicated region
      $region17: #{gcn_spa_forward.2} parent=11 // pred_check
        %p170 = pneg %p105
      $region18: #{gcn_spa_forward.2} parent=11 // pred_check_branch
        %172 = sbr.rel (%p170) target = $region20
      $region19: #{gcn_spa_forward.2} parent=11 // pred_region
        _
      $region20: #{gcn_spa_forward.2} parent=11 // pred_fallthru
        _
      // Predicated region
      $region21: #{gcn_spa_forward.2} parent=11 // pred_check
        %p173 = pneg %p126
      $region22: #{gcn_spa_forward.2} parent=11 // pred_check_branch
        %175 = sbr.rel (%p173) target = $region24
      $region23: #{gcn_spa_forward.2} parent=11 // pred_region
        _
      $region24: #{gcn_spa_forward.2} parent=11 // pred_fallthru
        _
    $region12: #{gcn_spa_forward.2} parent=5 // pred_fallthru
      _
    %p176 = scmp.lt.s32.totalorder %s11, 2
    // Predicated region
    $region25: #{gcn_spa_forward.2} parent=5 // pred_check
      %p177 = pneg %p176
    $region26: #{gcn_spa_forward.2} parent=5 // pred_check_branch
      %179 = sbr.rel (%p177) target = $region28
    $region27: #{gcn_spa_forward.2} parent=5 // pred_region
      // Predicated region
      $region29: #{gcn_spa_forward.2} parent=27 // pred_check
        %p180 = pneg %p31
      $region30: #{gcn_spa_forward.2} parent=27 // pred_check_branch
        %182 = sbr.rel (%p180) target = $region32
      $region31: #{gcn_spa_forward.2} parent=27 // pred_region
        %s183 = smul.u32 8, %s11
        %p184 = scmp.lt.s32.totalorder %s183, 15
        %s185 = scalar_select %p184, %s183, 15
        %s186 = smul.addr %s185, 4
        %s187 = smul.addr %s186, 8
        %s188 = scalar_lea.vmem %s0, %s187
        %s189 = smul.u32 8, %s11
      $region32: #{gcn_spa_forward.2} parent=27 // pred_fallthru
        _
      // Predicated region
      $region33: #{gcn_spa_forward.2} parent=27 // pred_check
        %p190 = pneg %p57
      $region34: #{gcn_spa_forward.2} parent=27 // pred_check_branch
        %192 = sbr.rel (%p190) target = $region36
      $region35: #{gcn_spa_forward.2} parent=27 // pred_region
        %s193 = smul.u32 8, %s11
        %p194 = scmp.lt.s32.totalorder %s193, 15
        %s195 = scalar_select %p194, %s193, 15
        %s196 = smul.addr %s195, 4
        %s197 = smul.addr %s196, 8
        %s198 = scalar_lea.vmem %s1, %s197
        %s199 = smul.u32 8, %s11
      $region36: #{gcn_spa_forward.2} parent=27 // pred_fallthru
        _
    $region28: #{gcn_spa_forward.2} parent=5 // pred_fallthru
      _
    %p200 = scmp.le.s32.totalorder 1, %s11
    %p201 = scmp.lt.s32.totalorder %s11, 3
    %p202 = pnand %p200, %p201
    %p203 = pneg %p202
    // Predicated region
    $region37: #{gcn_spa_forward.2} parent=5 // pred_check
      _
    $region38: #{gcn_spa_forward.2} parent=5 // pred_check_branch
      %205 = sbr.rel (%p202) target = $region40
    $region39: #{gcn_spa_forward.2} parent=5 // pred_region
      %s206 = ssub.s32 %s11, 1
      %s207 = smul.u32 8, %s16
      %p208 = scmp.lt.s32.totalorder %s207, 15
      %s209 = scalar_select %p208, %s207, 15
      %s210 = smul.addr %s209, 4
      %s211 = smul.addr %s210, 8
      %s212 = scalar_lea.vmem %s0, %s211
      %p213 = pneg %p37
      %p214 = pneg %p34
      %s215 = smul.u32 8, %s16
      %p216 = scmp.lt.s32.totalorder %s215, 15
      %s217 = scalar_select %p216, %s215, 15
      %s218 = smul.addr %s217, 4
      %s219 = smul.addr %s218, 8
      %s220 = scalar_lea.vmem %s1, %s219
      %p221 = pneg %p63
      %p222 = pneg %p60
      %p223 = pneg %p84
      %p224 = pneg %p81
      %p225 = pneg %p105
      %p226 = pneg %p102
      %p227 = pneg %p126
      %p228 = pneg %p123
      %p229 = pneg %p152
      %p230 = pneg %p149
      %s231 = smul.u32 8, %s16
      %p232 = scmp.lt.s32.totalorder %s231, 15
      %s233 = scalar_select %p232, %s231, 15
      %s234 = smul.addr %s233, 4
      %s235 = smul.addr %s234, 8
      %s236 = scalar_lea.vmem %s5, %s235
      %s237 = smul.u32 8, %s16
      %p238 = scmp.lt.s32.totalorder %s237, 15
      %s239 = scalar_select %p238, %s237, 15
      %s240 = smul.addr %s239, 4
      %s241 = smul.addr %s240, 8
      %s242 = scalar_lea.vmem %s0, %s241
      %s243 = smul.u32 8, %s16
      %s244 = smul.u32 8, %s16
      %p245 = scmp.lt.s32.totalorder %s244, 15
      %s246 = scalar_select %p245, %s244, 15
      %s247 = smul.addr %s246, 4
      %s248 = smul.addr %s247, 8
      %s249 = scalar_lea.vmem %s1, %s248
      %s250 = smul.u32 8, %s16
      %s251 = smul.u32 8, %s16
      %p252 = scmp.lt.s32.totalorder %s251, 15
      %s253 = scalar_select %p252, %s251, 15
      %s254 = smul.addr %s253, 4
      %s255 = smul.addr %s254, 8
      %s256 = scalar_lea.vmem %s5, %s255
      %s257 = smul.u32 8, %s16
      %v258 = vld [vmem:[%s2] sm:$0xff]
      %v259 = vld [vmem:[%s2 + $0x8] sm:$0xff]
      %v260 = vld [vmem:[%s2 + $0x10] sm:$0xff]
      %v261 = vld [vmem:[%s2 + $0x18] sm:$0xff]
      %v262 = vld [vmem:[%s2 + $0x20] sm:$0xff]
      %v263 = vld [vmem:[%s2 + $0x28] sm:$0xff]
      %v264 = vld [vmem:[%s2 + $0x30] sm:$0xff]
      %v265 = vld [vmem:[%s2 + $0x38] sm:$0xff]
      %v266 = vld [vmem:[%s3] sm:$0xff]
      %v267 = vld [vmem:[%s3 + $0x8] sm:$0xff]
      %v268 = vld [vmem:[%s3 + $0x10] sm:$0xff]
      %v269 = vld [vmem:[%s3 + $0x18] sm:$0xff]
      %v270 = vld [vmem:[%s3 + $0x20] sm:$0xff]
      %v271 = vld [vmem:[%s3 + $0x28] sm:$0xff]
      %v272 = vld [vmem:[%s3 + $0x30] sm:$0xff]
      %v273 = vld [vmem:[%s3 + $0x38] sm:$0xff]
      %v274 = vld [vmem:[%s4] sm:$0x1]
      %v275 = vld [vmem:[%s242] sm:$0xff]
      %v276 = vld [vmem:[%s242 + $0x8] sm:$0xff]
      %v277 = vld [vmem:[%s242 + $0x10] sm:$0xff]
      %v278 = vld [vmem:[%s242 + $0x18] sm:$0x1]
      %v279 = vld [vmem:[%s249] sm:$0xff]
      %v280 = vld [vmem:[%s249 + $0x8] sm:$0xff]
      %v281 = vld [vmem:[%s249 + $0x10] sm:$0xff]
      %v282 = vld [vmem:[%s249 + $0x18] sm:$0x1]
      %vm283 = vcmask 203776
      %v285 = vsel %vm283, %v279, 0
      %v288 = vsel %vm283, %v280, 0
      %v291 = vsel %vm283, %v281, 0
      %v294 = vsel %vm283, %v282, 0
      %vm296 = vcmask 1040384
      %v298 = vsel %vm296, %v278, 0
      %300 = vmatprep.subr.mxu0 0.0
      %301 = vmatpush1.msra.mxu0 0.0
      %302 = vmatprep.subr.mxu0 0.0
      %303 = vmatpush1.msra.mxu0 0.0
      %304 = vmatprep.subr.mxu0 0.0
      %305 = vmatpush1.msra.mxu0 0.0
      %306 = vmatprep.subr.mxu0 0.0
      %307 = vmatpush1.msra.mxu0 0.0
      %308 = vmatprep.subr.mxu0 0.0
      %309 = vmatpush1.msra.mxu0 0.0
      %310 = vmatprep.subr.mxu0 0.0
      %311 = vmatpush1.msra.mxu0 0.0
      %312 = vmatprep.subr.mxu0 0.0
      %313 = vmatpush1.msra.mxu0 0.0
      %314 = vmatprep.subr.mxu0 0.0
      %315 = vmatpush1.msra.mxu0 0.0
      %316 = vmatprep.subr.mxu0 0.0
      %317 = vmatpush1.msra.mxu0 0.0
      %318 = vmatprep.subr.mxu0 0.0
      %319 = vmatpush1.msra.mxu0 0.0
      %320 = vmatprep.subr.mxu0 0.0
      %321 = vmatpush1.msra.mxu0 0.0
      %322 = vmatprep.subr.mxu0 0.0
      %323 = vmatpush1.msra.mxu0 0.0
      %324 = vmatprep.subr.mxu0 0.0
      %325 = vmatpush1.msra.mxu0 %v298
      %326 = vmatprep.subr.mxu0 0.0
      %327 = vmatpush1.msra.mxu0 %v277
      %328 = vmatprep.subr.mxu0 0.0
      %329 = vmatpush1.msra.mxu0 %v276
      %330 = vmatprep.subr.mxu0 0.0
      %331 = vmatpush1.msra.mxu0 %v275
      %332 = vmatprep.subr.mxu0 0.0
      %333 = vmatpush2.msra.mxu0 0.0
      %334 = vmatprep.subr.mxu0 0.0
      %335 = vmatpush2.msra.mxu0 0.0
      %336 = vmatprep.subr.mxu0 0.0
      %337 = vmatpush2.msra.mxu0 0.0
      %338 = vmatprep.subr.mxu0 0.0
      %339 = vmatpush2.msra.mxu0 0.0
      %340 = vmatprep.subr.mxu0 0.0
      %341 = vmatpush2.msra.mxu0 0.0
      %342 = vmatprep.subr.mxu0 0.0
      %343 = vmatpush2.msra.mxu0 0.0
      %344 = vmatprep.subr.mxu0 0.0
      %345 = vmatpush2.msra.mxu0 0.0
      %346 = vmatprep.subr.mxu0 0.0
      %347 = vmatpush2.msra.mxu0 0.0
      %348 = vmatprep.subr.mxu0 0.0
      %349 = vmatpush2.msra.mxu0 0.0
      %350 = vmatprep.subr.mxu0 0.0
      %351 = vmatpush2.msra.mxu0 0.0
      %352 = vmatprep.subr.mxu0 0.0
      %353 = vmatpush2.msra.mxu0 0.0
      %354 = vmatprep.subr.mxu0 0.0
      %355 = vmatpush2.msra.mxu0 0.0
      %356 = vmatprep.subr.mxu0 0.0
      %357 = vmatpush2.msra.mxu0 0.0
      %358 = vmatprep.subr.mxu0 0.0
      %359 = vmatpush2.msra.mxu0 0.0
      %360 = vmatprep.subr.mxu0 0.0
      %361 = vmatpush2.msra.mxu0 0.0
      %362 = vmatprep.subr.mxu0 0.0
      %363 = vmatpush2.msra.mxu0 0.0
      %364 = vmatprep.mubr.f32.mxu0 0.0
      %365 = vmatmul.mubr.f32.gmra.mxu0 %v285
      %v366 = vpop.f32.mrf.mxu0
      %v367 = vadd.f32 0.0, %v366
      %v368 = vpop.f32.mrf.mxu0
      %369 = vmatprep.mubr.f32.mxu0 0.0
      %370 = vmatmul.mubr.f32.gmra.mxu0 %v288
      %v371 = vpop.f32.mrf.mxu0
      %v372 = vadd.f32 0.0, %v371
      %v373 = vpop.f32.mrf.mxu0
      %374 = vmatprep.mubr.f32.mxu0 0.0
      %375 = vmatmul.mubr.f32.gmra.mxu0 %v291
      %v376 = vpop.f32.mrf.mxu0
      %v377 = vadd.f32 0.0, %v376
      %v378 = vpop.f32.mrf.mxu0
      %379 = vmatprep.mubr.f32.mxu0 0.0
      %380 = vmatmul.mubr.f32.gmra.mxu0 %v294
      %v381 = vpop.f32.mrf.mxu0
      %v382 = vadd.f32 0.0, %v381
      %v383 = vpop.f32.mrf.mxu0
      %384 = vdwg.mxu0
      %vm385 = vcmask 523264
      %v387 = vsel %vm385, %v275, 0
      %v390 = vsel %vm385, %v276, 0
      %v393 = vsel %vm385, %v277, 0
      %v395 = vsel %vm385, %v278, 0
      %397 = vmatprep.subr.mxu0 0.0
      %398 = vmatpush1.msra.mxu0 0.0
      %399 = vmatprep.subr.mxu0 0.0
      %400 = vmatpush1.msra.mxu0 0.0
      %401 = vmatprep.subr.mxu0 0.0
      %402 = vmatpush1.msra.mxu0 0.0
      %403 = vmatprep.subr.mxu0 0.0
      %404 = vmatpush1.msra.mxu0 0.0
      %405 = vmatprep.subr.mxu0 0.0
      %406 = vmatpush1.msra.mxu0 0.0
      %407 = vmatprep.subr.mxu0 0.0
      %408 = vmatpush1.msra.mxu0 0.0
      %409 = vmatprep.subr.mxu0 0.0
      %410 = vmatpush1.msra.mxu0 0.0
      %411 = vmatprep.subr.mxu0 0.0
      %412 = vmatpush1.msra.mxu0 0.0
      %413 = vmatprep.subr.mxu0 0.0
      %414 = vmatpush1.msra.mxu0 %v273
      %415 = vmatprep.subr.mxu0 0.0
      %416 = vmatpush1.msra.mxu0 %v272
      %417 = vmatprep.subr.mxu0 0.0
      %418 = vmatpush1.msra.mxu0 %v271
      %419 = vmatprep.subr.mxu0 0.0
      %420 = vmatpush1.msra.mxu0 %v270
      %421 = vmatprep.subr.mxu0 0.0
      %422 = vmatpush1.msra.mxu0 %v269
      %423 = vmatprep.subr.mxu0 0.0
      %424 = vmatpush1.msra.mxu0 %v268
      %425 = vmatprep.subr.mxu0 0.0
      %426 = vmatpush1.msra.mxu0 %v267
      %427 = vmatprep.subr.mxu0 0.0
      %428 = vmatpush1.msra.mxu0 %v266
      %429 = vmatprep.subr.mxu0 0.0
      %430 = vmatpush2.msra.mxu0 0.0
      %431 = vmatprep.subr.mxu0 0.0
      %432 = vmatpush2.msra.mxu0 0.0
      %433 = vmatprep.subr.mxu0 0.0
      %434 = vmatpush2.msra.mxu0 0.0
      %435 = vmatprep.subr.mxu0 0.0
      %436 = vmatpush2.msra.mxu0 0.0
      %437 = vmatprep.subr.mxu0 0.0
      %438 = vmatpush2.msra.mxu0 0.0
      %439 = vmatprep.subr.mxu0 0.0
      %440 = vmatpush2.msra.mxu0 0.0
      %441 = vmatprep.subr.mxu0 0.0
      %442 = vmatpush2.msra.mxu0 0.0
      %443 = vmatprep.subr.mxu0 0.0
      %444 = vmatpush2.msra.mxu0 0.0
      %445 = vmatprep.subr.mxu0 0.0
      %446 = vmatpush2.msra.mxu0 0.0
      %447 = vmatprep.subr.mxu0 0.0
      %448 = vmatpush2.msra.mxu0 0.0
      %449 = vmatprep.subr.mxu0 0.0
      %450 = vmatpush2.msra.mxu0 0.0
      %451 = vmatprep.subr.mxu0 0.0
      %452 = vmatpush2.msra.mxu0 0.0
      %453 = vmatprep.subr.mxu0 0.0
      %454 = vmatpush2.msra.mxu0 0.0
      %455 = vmatprep.subr.mxu0 0.0
      %456 = vmatpush2.msra.mxu0 0.0
      %457 = vmatprep.subr.mxu0 0.0
      %458 = vmatpush2.msra.mxu0 0.0
      %459 = vmatprep.subr.mxu0 0.0
      %460 = vmatpush2.msra.mxu0 0.0
      %461 = vmatprep.mubr.f32.mxu0 0.0
      %462 = vmatmul.mubr.f32.gmra.mxu0 %v387
      %v463 = vpop.f32.mrf.mxu0
      %v464 = vadd.f32 0.0, %v463
      %v465 = vpop.f32.mrf.mxu0
      %466 = vmatprep.mubr.f32.mxu0 0.0
      %467 = vmatmul.mubr.f32.gmra.mxu0 %v390
      %v468 = vpop.f32.mrf.mxu0
      %v469 = vadd.f32 0.0, %v468
      %v470 = vpop.f32.mrf.mxu0
      %471 = vmatprep.mubr.f32.mxu0 0.0
      %472 = vmatmul.mubr.f32.gmra.mxu0 %v393
      %v473 = vpop.f32.mrf.mxu0
      %v474 = vadd.f32 0.0, %v473
      %v475 = vpop.f32.mrf.mxu0
      %476 = vmatprep.mubr.f32.mxu0 0.0
      %477 = vmatmul.mubr.f32.gmra.mxu0 %v395
      %v478 = vpop.f32.mrf.mxu0
      %v479 = vadd.f32 0.0, %v478
      %v480 = vpop.f32.mrf.mxu0
      %481 = vdwg.mxu0
      %v483 = vsel %vm385, %v367, 0
      %v486 = vsel %vm385, %v372, 0
      %v489 = vsel %vm385, %v377, 0
      %v492 = vsel %vm385, %v382, 0
      %494 = vmatprep.subr.mxu0 0.0
      %495 = vmatpush1.msra.mxu0 0.0
      %496 = vmatprep.subr.mxu0 0.0
      %497 = vmatpush1.msra.mxu0 0.0
      %498 = vmatprep.subr.mxu0 0.0
      %499 = vmatpush1.msra.mxu0 0.0
      %500 = vmatprep.subr.mxu0 0.0
      %501 = vmatpush1.msra.mxu0 0.0
      %502 = vmatprep.subr.mxu0 0.0
      %503 = vmatpush1.msra.mxu0 0.0
      %504 = vmatprep.subr.mxu0 0.0
      %505 = vmatpush1.msra.mxu0 0.0
      %506 = vmatprep.subr.mxu0 0.0
      %507 = vmatpush1.msra.mxu0 0.0
      %508 = vmatprep.subr.mxu0 0.0
      %509 = vmatpush1.msra.mxu0 0.0
      %510 = vmatprep.subr.mxu0 0.0
      %511 = vmatpush1.msra.mxu0 %v265
      %512 = vmatprep.subr.mxu0 0.0
      %513 = vmatpush1.msra.mxu0 %v264
      %514 = vmatprep.subr.mxu0 0.0
      %515 = vmatpush1.msra.mxu0 %v263
      %516 = vmatprep.subr.mxu0 0.0
      %517 = vmatpush1.msra.mxu0 %v262
      %518 = vmatprep.subr.mxu0 0.0
      %519 = vmatpush1.msra.mxu0 %v261
      %520 = vmatprep.subr.mxu0 0.0
      %521 = vmatpush1.msra.mxu0 %v260
      %522 = vmatprep.subr.mxu0 0.0
      %523 = vmatpush1.msra.mxu0 %v259
      %524 = vmatprep.subr.mxu0 0.0
      %525 = vmatpush1.msra.mxu0 %v258
      %526 = vmatprep.subr.mxu0 0.0
      %527 = vmatpush2.msra.mxu0 0.0
      %528 = vmatprep.subr.mxu0 0.0
      %529 = vmatpush2.msra.mxu0 0.0
      %530 = vmatprep.subr.mxu0 0.0
      %531 = vmatpush2.msra.mxu0 0.0
      %532 = vmatprep.subr.mxu0 0.0
      %533 = vmatpush2.msra.mxu0 0.0
      %534 = vmatprep.subr.mxu0 0.0
      %535 = vmatpush2.msra.mxu0 0.0
      %536 = vmatprep.subr.mxu0 0.0
      %537 = vmatpush2.msra.mxu0 0.0
      %538 = vmatprep.subr.mxu0 0.0
      %539 = vmatpush2.msra.mxu0 0.0
      %540 = vmatprep.subr.mxu0 0.0
      %541 = vmatpush2.msra.mxu0 0.0
      %542 = vmatprep.subr.mxu0 0.0
      %543 = vmatpush2.msra.mxu0 0.0
      %544 = vmatprep.subr.mxu0 0.0
      %545 = vmatpush2.msra.mxu0 0.0
      %546 = vmatprep.subr.mxu0 0.0
      %547 = vmatpush2.msra.mxu0 0.0
      %548 = vmatprep.subr.mxu0 0.0
      %549 = vmatpush2.msra.mxu0 0.0
      %550 = vmatprep.subr.mxu0 0.0
      %551 = vmatpush2.msra.mxu0 0.0
      %552 = vmatprep.subr.mxu0 0.0
      %553 = vmatpush2.msra.mxu0 0.0
      %554 = vmatprep.subr.mxu0 0.0
      %555 = vmatpush2.msra.mxu0 0.0
      %556 = vmatprep.subr.mxu0 0.0
      %557 = vmatpush2.msra.mxu0 0.0
      %558 = vmatprep.mubr.f32.mxu0 0.0
      %559 = vmatmul.mubr.f32.gmra.mxu0 %v483
      %v560 = vpop.f32.mrf.mxu0
      %v561 = vadd.f32 %v464, %v560
      %v562 = vpop.f32.mrf.mxu0
      %563 = vmatprep.mubr.f32.mxu0 0.0
      %564 = vmatmul.mubr.f32.gmra.mxu0 %v486
      %v565 = vpop.f32.mrf.mxu0
      %v566 = vadd.f32 %v469, %v565
      %v567 = vpop.f32.mrf.mxu0
      %568 = vmatprep.mubr.f32.mxu0 0.0
      %569 = vmatmul.mubr.f32.gmra.mxu0 %v489
      %v570 = vpop.f32.mrf.mxu0
      %v571 = vadd.f32 %v474, %v570
      %v572 = vpop.f32.mrf.mxu0
      %573 = vmatprep.mubr.f32.mxu0 0.0
      %574 = vmatmul.mubr.f32.gmra.mxu0 %v492
      %v575 = vpop.f32.mrf.mxu0
      %v576 = vadd.f32 %v479, %v575
      %v577 = vpop.f32.mrf.mxu0
      %578 = vdwg.mxu0
      %v580 = vlaneseq
      %v581 = vshrl.u32 %v580, 7
      %v582 = vsub.s32 0, %v581
      %v583 = vrot.slane %v274, %v582
      %v585 = vadd.f32 %v561, %v583
      %v586 = vadd.f32 %v566, %v583
      %v587 = vadd.f32 %v571, %v583
      %v588 = vadd.f32 %v576, %v583
      %589 = vst [vmem:[%s256] sm:$0xff] %v585
      %590 = vst [vmem:[%s256 + $0x8] sm:$0xff] %v586
      %591 = vst [vmem:[%s256 + $0x10] sm:$0xff] %v587
      %592 = vst [vmem:[%s256 + $0x18] sm:$0x1] %v588
      %s593 = scalar_lea.vmem %s242, 32
      %v594 = vld [vmem:[%s593] sm:$0xff]
      %v595 = vld [vmem:[%s593 + $0x8] sm:$0xff]
      %v596 = vld [vmem:[%s593 + $0x10] sm:$0xff]
      %v597 = vld [vmem:[%s593 + $0x18] sm:$0x1]
      %s598 = scalar_lea.vmem %s249, 32
      %v599 = vld [vmem:[%s598] sm:$0xff]
      %v600 = vld [vmem:[%s598 + $0x8] sm:$0xff]
      %v601 = vld [vmem:[%s598 + $0x10] sm:$0xff]
      %v602 = vld [vmem:[%s598 + $0x18] sm:$0x1]
      %v604 = vsel %vm283, %v599, 0
      %v607 = vsel %vm283, %v600, 0
      %v610 = vsel %vm283, %v601, 0
      %v613 = vsel %vm283, %v602, 0
      %v616 = vsel %vm296, %v597, 0
      %618 = vmatprep.subr.mxu0 0.0
      %619 = vmatpush1.msra.mxu0 0.0
      %620 = vmatprep.subr.mxu0 0.0
      %621 = vmatpush1.msra.mxu0 0.0
      %622 = vmatprep.subr.mxu0 0.0
      %623 = vmatpush1.msra.mxu0 0.0
      %624 = vmatprep.subr.mxu0 0.0
      %625 = vmatpush1.msra.mxu0 0.0
      %626 = vmatprep.subr.mxu0 0.0
      %627 = vmatpush1.msra.mxu0 0.0
      %628 = vmatprep.subr.mxu0 0.0
      %629 = vmatpush1.msra.mxu0 0.0
      %630 = vmatprep.subr.mxu0 0.0
      %631 = vmatpush1.msra.mxu0 0.0
      %632 = vmatprep.subr.mxu0 0.0
      %633 = vmatpush1.msra.mxu0 0.0
      %634 = vmatprep.subr.mxu0 0.0
      %635 = vmatpush1.msra.mxu0 0.0
      %636 = vmatprep.subr.mxu0 0.0
      %637 = vmatpush1.msra.mxu0 0.0
      %638 = vmatprep.subr.mxu0 0.0
      %639 = vmatpush1.msra.mxu0 0.0
      %640 = vmatprep.subr.mxu0 0.0
      %641 = vmatpush1.msra.mxu0 0.0
      %642 = vmatprep.subr.mxu0 0.0
      %643 = vmatpush1.msra.mxu0 %v616
      %644 = vmatprep.subr.mxu0 0.0
      %645 = vmatpush1.msra.mxu0 %v596
      %646 = vmatprep.subr.mxu0 0.0
      %647 = vmatpush1.msra.mxu0 %v595
      %648 = vmatprep.subr.mxu0 0.0
      %649 = vmatpush1.msra.mxu0 %v594
      %650 = vmatprep.subr.mxu0 0.0
      %651 = vmatpush2.msra.mxu0 0.0
      %652 = vmatprep.subr.mxu0 0.0
      %653 = vmatpush2.msra.mxu0 0.0
      %654 = vmatprep.subr.mxu0 0.0
      %655 = vmatpush2.msra.mxu0 0.0
      %656 = vmatprep.subr.mxu0 0.0
      %657 = vmatpush2.msra.mxu0 0.0
      %658 = vmatprep.subr.mxu0 0.0
      %659 = vmatpush2.msra.mxu0 0.0
      %660 = vmatprep.subr.mxu0 0.0
      %661 = vmatpush2.msra.mxu0 0.0
      %662 = vmatprep.subr.mxu0 0.0
      %663 = vmatpush2.msra.mxu0 0.0
      %664 = vmatprep.subr.mxu0 0.0
      %665 = vmatpush2.msra.mxu0 0.0
      %666 = vmatprep.subr.mxu0 0.0
      %667 = vmatpush2.msra.mxu0 0.0
      %668 = vmatprep.subr.mxu0 0.0
      %669 = vmatpush2.msra.mxu0 0.0
      %670 = vmatprep.subr.mxu0 0.0
      %671 = vmatpush2.msra.mxu0 0.0
      %672 = vmatprep.subr.mxu0 0.0
      %673 = vmatpush2.msra.mxu0 0.0
      %674 = vmatprep.subr.mxu0 0.0
      %675 = vmatpush2.msra.mxu0 0.0
      %676 = vmatprep.subr.mxu0 0.0
      %677 = vmatpush2.msra.mxu0 0.0
      %678 = vmatprep.subr.mxu0 0.0
      %679 = vmatpush2.msra.mxu0 0.0
      %680 = vmatprep.subr.mxu0 0.0
      %681 = vmatpush2.msra.mxu0 0.0
      %682 = vmatprep.mubr.f32.mxu0 0.0
      %683 = vmatmul.mubr.f32.gmra.mxu0 %v604
      %v684 = vpop.f32.mrf.mxu0
      %v685 = vadd.f32 0.0, %v684
      %v686 = vpop.f32.mrf.mxu0
      %687 = vmatprep.mubr.f32.mxu0 0.0
      %688 = vmatmul.mubr.f32.gmra.mxu0 %v607
      %v689 = vpop.f32.mrf.mxu0
      %v690 = vadd.f32 0.0, %v689
      %v691 = vpop.f32.mrf.mxu0
      %692 = vmatprep.mubr.f32.mxu0 0.0
      %693 = vmatmul.mubr.f32.gmra.mxu0 %v610
      %v694 = vpop.f32.mrf.mxu0
      %v695 = vadd.f32 0.0, %v694
      %v696 = vpop.f32.mrf.mxu0
      %697 = vmatprep.mubr.f32.mxu0 0.0
      %698 = vmatmul.mubr.f32.gmra.mxu0 %v613
      %v699 = vpop.f32.mrf.mxu0
      %v700 = vadd.f32 0.0, %v699
      %v701 = vpop.f32.mrf.mxu0
      %702 = vdwg.mxu0
      %v704 = vsel %vm385, %v594, 0
      %v707 = vsel %vm385, %v595, 0
      %v710 = vsel %vm385, %v596, 0
      %v712 = vsel %vm385, %v597, 0
      %714 = vmatprep.subr.mxu0 0.0
      %715 = vmatpush1.msra.mxu0 0.0
      %716 = vmatprep.subr.mxu0 0.0
      %717 = vmatpush1.msra.mxu0 0.0
      %718 = vmatprep.subr.mxu0 0.0
      %719 = vmatpush1.msra.mxu0 0.0
      %720 = vmatprep.subr.mxu0 0.0
      %721 = vmatpush1.msra.mxu0 0.0
      %722 = vmatprep.subr.mxu0 0.0
      %723 = vmatpush1.msra.mxu0 0.0
      %724 = vmatprep.subr.mxu0 0.0
      %725 = vmatpush1.msra.mxu0 0.0
      %726 = vmatprep.subr.mxu0 0.0
      %727 = vmatpush1.msra.mxu0 0.0
      %728 = vmatprep.subr.mxu0 0.0
      %729 = vmatpush1.msra.mxu0 0.0
      %730 = vmatprep.subr.mxu0 0.0
      %731 = vmatpush1.msra.mxu0 %v273
      %732 = vmatprep.subr.mxu0 0.0
      %733 = vmatpush1.msra.mxu0 %v272
      %734 = vmatprep.subr.mxu0 0.0
      %735 = vmatpush1.msra.mxu0 %v271
      %736 = vmatprep.subr.mxu0 0.0
      %737 = vmatpush1.msra.mxu0 %v270
      %738 = vmatprep.subr.mxu0 0.0
      %739 = vmatpush1.msra.mxu0 %v269
      %740 = vmatprep.subr.mxu0 0.0
      %741 = vmatpush1.msra.mxu0 %v268
      %742 = vmatprep.subr.mxu0 0.0
      %743 = vmatpush1.msra.mxu0 %v267
      %744 = vmatprep.subr.mxu0 0.0
      %745 = vmatpush1.msra.mxu0 %v266
      %746 = vmatprep.subr.mxu0 0.0
      %747 = vmatpush2.msra.mxu0 0.0
      %748 = vmatprep.subr.mxu0 0.0
      %749 = vmatpush2.msra.mxu0 0.0
      %750 = vmatprep.subr.mxu0 0.0
      %751 = vmatpush2.msra.mxu0 0.0
      %752 = vmatprep.subr.mxu0 0.0
      %753 = vmatpush2.msra.mxu0 0.0
      %754 = vmatprep.subr.mxu0 0.0
      %755 = vmatpush2.msra.mxu0 0.0
      %756 = vmatprep.subr.mxu0 0.0
      %757 = vmatpush2.msra.mxu0 0.0
      %758 = vmatprep.subr.mxu0 0.0
      %759 = vmatpush2.msra.mxu0 0.0
      %760 = vmatprep.subr.mxu0 0.0
      %761 = vmatpush2.msra.mxu0 0.0
      %762 = vmatprep.subr.mxu0 0.0
      %763 = vmatpush2.msra.mxu0 0.0
      %764 = vmatprep.subr.mxu0 0.0
      %765 = vmatpush2.msra.mxu0 0.0
      %766 = vmatprep.subr.mxu0 0.0
      %767 = vmatpush2.msra.mxu0 0.0
      %768 = vmatprep.subr.mxu0 0.0
      %769 = vmatpush2.msra.mxu0 0.0
      %770 = vmatprep.subr.mxu0 0.0
      %771 = vmatpush2.msra.mxu0 0.0
      %772 = vmatprep.subr.mxu0 0.0
      %773 = vmatpush2.msra.mxu0 0.0
      %774 = vmatprep.subr.mxu0 0.0
      %775 = vmatpush2.msra.mxu0 0.0
      %776 = vmatprep.subr.mxu0 0.0
      %777 = vmatpush2.msra.mxu0 0.0
      %778 = vmatprep.mubr.f32.mxu0 0.0
      %779 = vmatmul.mubr.f32.gmra.mxu0 %v704
      %v780 = vpop.f32.mrf.mxu0
      %v781 = vadd.f32 0.0, %v780
      %v782 = vpop.f32.mrf.mxu0
      %783 = vmatprep.mubr.f32.mxu0 0.0
      %784 = vmatmul.mubr.f32.gmra.mxu0 %v707
      %v785 = vpop.f32.mrf.mxu0
      %v786 = vadd.f32 0.0, %v785
      %v787 = vpop.f32.mrf.mxu0
      %788 = vmatprep.mubr.f32.mxu0 0.0
      %789 = vmatmul.mubr.f32.gmra.mxu0 %v710
      %v790 = vpop.f32.mrf.mxu0
      %v791 = vadd.f32 0.0, %v790
      %v792 = vpop.f32.mrf.mxu0
      %793 = vmatprep.mubr.f32.mxu0 0.0
      %794 = vmatmul.mubr.f32.gmra.mxu0 %v712
      %v795 = vpop.f32.mrf.mxu0
      %v796 = vadd.f32 0.0, %v795
      %v797 = vpop.f32.mrf.mxu0
      %798 = vdwg.mxu0
      %v800 = vsel %vm385, %v685, 0
      %v803 = vsel %vm385, %v690, 0
      %v806 = vsel %vm385, %v695, 0
      %v809 = vsel %vm385, %v700, 0
      %811 = vmatprep.subr.mxu0 0.0
      %812 = vmatpush1.msra.mxu0 0.0
      %813 = vmatprep.subr.mxu0 0.0
      %814 = vmatpush1.msra.mxu0 0.0
      %815 = vmatprep.subr.mxu0 0.0
      %816 = vmatpush1.msra.mxu0 0.0
      %817 = vmatprep.subr.mxu0 0.0
      %818 = vmatpush1.msra.mxu0 0.0
      %819 = vmatprep.subr.mxu0 0.0
      %820 = vmatpush1.msra.mxu0 0.0
      %821 = vmatprep.subr.mxu0 0.0
      %822 = vmatpush1.msra.mxu0 0.0
      %823 = vmatprep.subr.mxu0 0.0
      %824 = vmatpush1.msra.mxu0 0.0
      %825 = vmatprep.subr.mxu0 0.0
      %826 = vmatpush1.msra.mxu0 0.0
      %827 = vmatprep.subr.mxu0 0.0
      %828 = vmatpush1.msra.mxu0 %v265
      %829 = vmatprep.subr.mxu0 0.0
      %830 = vmatpush1.msra.mxu0 %v264
      %831 = vmatprep.subr.mxu0 0.0
      %832 = vmatpush1.msra.mxu0 %v263
      %833 = vmatprep.subr.mxu0 0.0
      %834 = vmatpush1.msra.mxu0 %v262
      %835 = vmatprep.subr.mxu0 0.0
      %836 = vmatpush1.msra.mxu0 %v261
      %837 = vmatprep.subr.mxu0 0.0
      %838 = vmatpush1.msra.mxu0 %v260
      %839 = vmatprep.subr.mxu0 0.0
      %840 = vmatpush1.msra.mxu0 %v259
      %841 = vmatprep.subr.mxu0 0.0
      %842 = vmatpush1.msra.mxu0 %v258
      %843 = vmatprep.subr.mxu0 0.0
      %844 = vmatpush2.msra.mxu0 0.0
      %845 = vmatprep.subr.mxu0 0.0
      %846 = vmatpush2.msra.mxu0 0.0
      %847 = vmatprep.subr.mxu0 0.0
      %848 = vmatpush2.msra.mxu0 0.0
      %849 = vmatprep.subr.mxu0 0.0
      %850 = vmatpush2.msra.mxu0 0.0
      %851 = vmatprep.subr.mxu0 0.0
      %852 = vmatpush2.msra.mxu0 0.0
      %853 = vmatprep.subr.mxu0 0.0
      %854 = vmatpush2.msra.mxu0 0.0
      %855 = vmatprep.subr.mxu0 0.0
      %856 = vmatpush2.msra.mxu0 0.0
      %857 = vmatprep.subr.mxu0 0.0
      %858 = vmatpush2.msra.mxu0 0.0
      %859 = vmatprep.subr.mxu0 0.0
      %860 = vmatpush2.msra.mxu0 0.0
      %861 = vmatprep.subr.mxu0 0.0
      %862 = vmatpush2.msra.mxu0 0.0
      %863 = vmatprep.subr.mxu0 0.0
      %864 = vmatpush2.msra.mxu0 0.0
      %865 = vmatprep.subr.mxu0 0.0
      %866 = vmatpush2.msra.mxu0 0.0
      %867 = vmatprep.subr.mxu0 0.0
      %868 = vmatpush2.msra.mxu0 0.0
      %869 = vmatprep.subr.mxu0 0.0
      %870 = vmatpush2.msra.mxu0 0.0
      %871 = vmatprep.subr.mxu0 0.0
      %872 = vmatpush2.msra.mxu0 0.0
      %873 = vmatprep.subr.mxu0 0.0
      %874 = vmatpush2.msra.mxu0 0.0
      %875 = vmatprep.mubr.f32.mxu0 0.0
      %876 = vmatmul.mubr.f32.gmra.mxu0 %v800
      %v877 = vpop.f32.mrf.mxu0
      %v878 = vadd.f32 %v781, %v877
      %v879 = vpop.f32.mrf.mxu0
      %880 = vmatprep.mubr.f32.mxu0 0.0
      %881 = vmatmul.mubr.f32.gmra.mxu0 %v803
      %v882 = vpop.f32.mrf.mxu0
      %v883 = vadd.f32 %v786, %v882
      %v884 = vpop.f32.mrf.mxu0
      %885 = vmatprep.mubr.f32.mxu0 0.0
      %886 = vmatmul.mubr.f32.gmra.mxu0 %v806
      %v887 = vpop.f32.mrf.mxu0
      %v888 = vadd.f32 %v791, %v887
      %v889 = vpop.f32.mrf.mxu0
      %890 = vmatprep.mubr.f32.mxu0 0.0
      %891 = vmatmul.mubr.f32.gmra.mxu0 %v809
      %v892 = vpop.f32.mrf.mxu0
      %v893 = vadd.f32 %v796, %v892
      %v894 = vpop.f32.mrf.mxu0
      %895 = vdwg.mxu0
      %v896 = vadd.f32 %v878, %v583
      %v897 = vadd.f32 %v883, %v583
      %v898 = vadd.f32 %v888, %v583
      %v899 = vadd.f32 %v893, %v583
      %s900 = scalar_lea.vmem %s256, 32
      %901 = vst [vmem:[%s900] sm:$0xff] %v896
      %902 = vst [vmem:[%s900 + $0x8] sm:$0xff] %v897
      %903 = vst [vmem:[%s900 + $0x10] sm:$0xff] %v898
      %904 = vst [vmem:[%s900 + $0x18] sm:$0x1] %v899
      %s905 = scalar_lea.vmem %s242, 64
      %v906 = vld [vmem:[%s905] sm:$0xff]
      %v907 = vld [vmem:[%s905 + $0x8] sm:$0xff]
      %v908 = vld [vmem:[%s905 + $0x10] sm:$0xff]
      %v909 = vld [vmem:[%s905 + $0x18] sm:$0x1]
      %s910 = scalar_lea.vmem %s249, 64
      %v911 = vld [vmem:[%s910] sm:$0xff]
      %v912 = vld [vmem:[%s910 + $0x8] sm:$0xff]
      %v913 = vld [vmem:[%s910 + $0x10] sm:$0xff]
      %v914 = vld [vmem:[%s910 + $0x18] sm:$0x1]
      %v916 = vsel %vm283, %v911, 0
      %v919 = vsel %vm283, %v912, 0
      %v922 = vsel %vm283, %v913, 0
      %v925 = vsel %vm283, %v914, 0
      %v928 = vsel %vm296, %v909, 0
      %930 = vmatprep.subr.mxu0 0.0
      %931 = vmatpush1.msra.mxu0 0.0
      %932 = vmatprep.subr.mxu0 0.0
      %933 = vmatpush1.msra.mxu0 0.0
      %934 = vmatprep.subr.mxu0 0.0
      %935 = vmatpush1.msra.mxu0 0.0
      %936 = vmatprep.subr.mxu0 0.0
      %937 = vmatpush1.msra.mxu0 0.0
      %938 = vmatprep.subr.mxu0 0.0
      %939 = vmatpush1.msra.mxu0 0.0
      %940 = vmatprep.subr.mxu0 0.0
      %941 = vmatpush1.msra.mxu0 0.0
      %942 = vmatprep.subr.mxu0 0.0
      %943 = vmatpush1.msra.mxu0 0.0
      %944 = vmatprep.subr.mxu0 0.0
      %945 = vmatpush1.msra.mxu0 0.0
      %946 = vmatprep.subr.mxu0 0.0
      %947 = vmatpush1.msra.mxu0 0.0
      %948 = vmatprep.subr.mxu0 0.0
      %949 = vmatpush1.msra.mxu0 0.0
      %950 = vmatprep.subr.mxu0 0.0
      %951 = vmatpush1.msra.mxu0 0.0
      %952 = vmatprep.subr.mxu0 0.0
      %953 = vmatpush1.msra.mxu0 0.0
      %954 = vmatprep.subr.mxu0 0.0
      %955 = vmatpush1.msra.mxu0 %v928
      %956 = vmatprep.subr.mxu0 0.0
      %957 = vmatpush1.msra.mxu0 %v908
      %958 = vmatprep.subr.mxu0 0.0
      %959 = vmatpush1.msra.mxu0 %v907
      %960 = vmatprep.subr.mxu0 0.0
      %961 = vmatpush1.msra.mxu0 %v906
      %962 = vmatprep.subr.mxu0 0.0
      %963 = vmatpush2.msra.mxu0 0.0
      %964 = vmatprep.subr.mxu0 0.0
      %965 = vmatpush2.msra.mxu0 0.0
      %966 = vmatprep.subr.mxu0 0.0
      %967 = vmatpush2.msra.mxu0 0.0
      %968 = vmatprep.subr.mxu0 0.0
      %969 = vmatpush2.msra.mxu0 0.0
      %970 = vmatprep.subr.mxu0 0.0
      %971 = vmatpush2.msra.mxu0 0.0
      %972 = vmatprep.subr.mxu0 0.0
      %973 = vmatpush2.msra.mxu0 0.0
      %974 = vmatprep.subr.mxu0 0.0
      %975 = vmatpush2.msra.mxu0 0.0
      %976 = vmatprep.subr.mxu0 0.0
      %977 = vmatpush2.msra.mxu0 0.0
      %978 = vmatprep.subr.mxu0 0.0
      %979 = vmatpush2.msra.mxu0 0.0
      %980 = vmatprep.subr.mxu0 0.0
      %981 = vmatpush2.msra.mxu0 0.0
      %982 = vmatprep.subr.mxu0 0.0
      %983 = vmatpush2.msra.mxu0 0.0
      %984 = vmatprep.subr.mxu0 0.0
      %985 = vmatpush2.msra.mxu0 0.0
      %986 = vmatprep.subr.mxu0 0.0
      %987 = vmatpush2.msra.mxu0 0.0
      %988 = vmatprep.subr.mxu0 0.0
      %989 = vmatpush2.msra.mxu0 0.0
      %990 = vmatprep.subr.mxu0 0.0
      %991 = vmatpush2.msra.mxu0 0.0
      %992 = vmatprep.subr.mxu0 0.0
      %993 = vmatpush2.msra.mxu0 0.0
      %994 = vmatprep.mubr.f32.mxu0 0.0
      %995 = vmatmul.mubr.f32.gmra.mxu0 %v916
      %v996 = vpop.f32.mrf.mxu0
      %v997 = vadd.f32 0.0, %v996
      %v998 = vpop.f32.mrf.mxu0
      %999 = vmatprep.mubr.f32.mxu0 0.0
      %1000 = vmatmul.mubr.f32.gmra.mxu0 %v919
      %v1001 = vpop.f32.mrf.mxu0
      %v1002 = vadd.f32 0.0, %v1001
      %v1003 = vpop.f32.mrf.mxu0
      %1004 = vmatprep.mubr.f32.mxu0 0.0
      %1005 = vmatmul.mubr.f32.gmra.mxu0 %v922
      %v1006 = vpop.f32.mrf.mxu0
      %v1007 = vadd.f32 0.0, %v1006
      %v1008 = vpop.f32.mrf.mxu0
      %1009 = vmatprep.mubr.f32.mxu0 0.0
      %1010 = vmatmul.mubr.f32.gmra.mxu0 %v925
      %v1011 = vpop.f32.mrf.mxu0
      %v1012 = vadd.f32 0.0, %v1011
      %v1013 = vpop.f32.mrf.mxu0
      %1014 = vdwg.mxu0
      %v1016 = vsel %vm385, %v906, 0
      %v1019 = vsel %vm385, %v907, 0
      %v1022 = vsel %vm385, %v908, 0
      %v1024 = vsel %vm385, %v909, 0
      %1026 = vmatprep.subr.mxu0 0.0
      %1027 = vmatpush1.msra.mxu0 0.0
      %1028 = vmatprep.subr.mxu0 0.0
      %1029 = vmatpush1.msra.mxu0 0.0
      %1030 = vmatprep.subr.mxu0 0.0
      %1031 = vmatpush1.msra.mxu0 0.0
      %1032 = vmatprep.subr.mxu0 0.0
      %1033 = vmatpush1.msra.mxu0 0.0
      %1034 = vmatprep.subr.mxu0 0.0
      %1035 = vmatpush1.msra.mxu0 0.0
      %1036 = vmatprep.subr.mxu0 0.0
      %1037 = vmatpush1.msra.mxu0 0.0
      %1038 = vmatprep.subr.mxu0 0.0
      %1039 = vmatpush1.msra.mxu0 0.0
      %1040 = vmatprep.subr.mxu0 0.0
      %1041 = vmatpush1.msra.mxu0 0.0
      %1042 = vmatprep.subr.mxu0 0.0
      %1043 = vmatpush1.msra.mxu0 %v273
      %1044 = vmatprep.subr.mxu0 0.0
      %1045 = vmatpush1.msra.mxu0 %v272
      %1046 = vmatprep.subr.mxu0 0.0
      %1047 = vmatpush1.msra.mxu0 %v271
      %1048 = vmatprep.subr.mxu0 0.0
      %1049 = vmatpush1.msra.mxu0 %v270
      %1050 = vmatprep.subr.mxu0 0.0
      %1051 = vmatpush1.msra.mxu0 %v269
      %1052 = vmatprep.subr.mxu0 0.0
      %1053 = vmatpush1.msra.mxu0 %v268
      %1054 = vmatprep.subr.mxu0 0.0
      %1055 = vmatpush1.msra.mxu0 %v267
      %1056 = vmatprep.subr.mxu0 0.0
      %1057 = vmatpush1.msra.mxu0 %v266
      %1058 = vmatprep.subr.mxu0 0.0
      %1059 = vmatpush2.msra.mxu0 0.0
      %1060 = vmatprep.subr.mxu0 0.0
      %1061 = vmatpush2.msra.mxu0 0.0
      %1062 = vmatprep.subr.mxu0 0.0
      %1063 = vmatpush2.msra.mxu0 0.0
      %1064 = vmatprep.subr.mxu0 0.0
      %1065 = vmatpush2.msra.mxu0 0.0
      %1066 = vmatprep.subr.mxu0 0.0
      %1067 = vmatpush2.msra.mxu0 0.0
      %1068 = vmatprep.subr.mxu0 0.0
      %1069 = vmatpush2.msra.mxu0 0.0
      %1070 = vmatprep.subr.mxu0 0.0
      %1071 = vmatpush2.msra.mxu0 0.0
      %1072 = vmatprep.subr.mxu0 0.0
      %1073 = vmatpush2.msra.mxu0 0.0
      %1074 = vmatprep.subr.mxu0 0.0
      %1075 = vmatpush2.msra.mxu0 0.0
      %1076 = vmatprep.subr.mxu0 0.0
      %1077 = vmatpush2.msra.mxu0 0.0
      %1078 = vmatprep.subr.mxu0 0.0
      %1079 = vmatpush2.msra.mxu0 0.0
      %1080 = vmatprep.subr.mxu0 0.0
      %1081 = vmatpush2.msra.mxu0 0.0
      %1082 = vmatprep.subr.mxu0 0.0
      %1083 = vmatpush2.msra.mxu0 0.0
      %1084 = vmatprep.subr.mxu0 0.0
      %1085 = vmatpush2.msra.mxu0 0.0
      %1086 = vmatprep.subr.mxu0 0.0
      %1087 = vmatpush2.msra.mxu0 0.0
      %1088 = vmatprep.subr.mxu0 0.0
      %1089 = vmatpush2.msra.mxu0 0.0
      %1090 = vmatprep.mubr.f32.mxu0 0.0
      %1091 = vmatmul.mubr.f32.gmra.mxu0 %v1016
      %v1092 = vpop.f32.mrf.mxu0
      %v1093 = vadd.f32 0.0, %v1092
      %v1094 = vpop.f32.mrf.mxu0
      %1095 = vmatprep.mubr.f32.mxu0 0.0
      %1096 = vmatmul.mubr.f32.gmra.mxu0 %v1019
      %v1097 = vpop.f32.mrf.mxu0
      %v1098 = vadd.f32 0.0, %v1097
      %v1099 = vpop.f32.mrf.mxu0
      %1100 = vmatprep.mubr.f32.mxu0 0.0
      %1101 = vmatmul.mubr.f32.gmra.mxu0 %v1022
      %v1102 = vpop.f32.mrf.mxu0
      %v1103 = vadd.f32 0.0, %v1102
      %v1104 = vpop.f32.mrf.mxu0
      %1105 = vmatprep.mubr.f32.mxu0 0.0
      %1106 = vmatmul.mubr.f32.gmra.mxu0 %v1024
      %v1107 = vpop.f32.mrf.mxu0
      %v1108 = vadd.f32 0.0, %v1107
      %v1109 = vpop.f32.mrf.mxu0
      %1110 = vdwg.mxu0
      %v1112 = vsel %vm385, %v997, 0
      %v1115 = vsel %vm385, %v1002, 0
      %v1118 = vsel %vm385, %v1007, 0
      %v1121 = vsel %vm385, %v1012, 0
      %1123 = vmatprep.subr.mxu0 0.0
      %1124 = vmatpush1.msra.mxu0 0.0
      %1125 = vmatprep.subr.mxu0 0.0
      %1126 = vmatpush1.msra.mxu0 0.0
      %1127 = vmatprep.subr.mxu0 0.0
      %1128 = vmatpush1.msra.mxu0 0.0
      %1129 = vmatprep.subr.mxu0 0.0
      %1130 = vmatpush1.msra.mxu0 0.0
      %1131 = vmatprep.subr.mxu0 0.0
      %1132 = vmatpush1.msra.mxu0 0.0
      %1133 = vmatprep.subr.mxu0 0.0
      %1134 = vmatpush1.msra.mxu0 0.0
      %1135 = vmatprep.subr.mxu0 0.0
      %1136 = vmatpush1.msra.mxu0 0.0
      %1137 = vmatprep.subr.mxu0 0.0
      %1138 = vmatpush1.msra.mxu0 0.0
      %1139 = vmatprep.subr.mxu0 0.0
      %1140 = vmatpush1.msra.mxu0 %v265
      %1141 = vmatprep.subr.mxu0 0.0
      %1142 = vmatpush1.msra.mxu0 %v264
      %1143 = vmatprep.subr.mxu0 0.0
      %1144 = vmatpush1.msra.mxu0 %v263
      %1145 = vmatprep.subr.mxu0 0.0
      %1146 = vmatpush1.msra.mxu0 %v262
      %1147 = vmatprep.subr.mxu0 0.0
      %1148 = vmatpush1.msra.mxu0 %v261
      %1149 = vmatprep.subr.mxu0 0.0
      %1150 = vmatpush1.msra.mxu0 %v260
      %1151 = vmatprep.subr.mxu0 0.0
      %1152 = vmatpush1.msra.mxu0 %v259
      %1153 = vmatprep.subr.mxu0 0.0
      %1154 = vmatpush1.msra.mxu0 %v258
      %1155 = vmatprep.subr.mxu0 0.0
      %1156 = vmatpush2.msra.mxu0 0.0
      %1157 = vmatprep.subr.mxu0 0.0
      %1158 = vmatpush2.msra.mxu0 0.0
      %1159 = vmatprep.subr.mxu0 0.0
      %1160 = vmatpush2.msra.mxu0 0.0
      %1161 = vmatprep.subr.mxu0 0.0
      %1162 = vmatpush2.msra.mxu0 0.0
      %1163 = vmatprep.subr.mxu0 0.0
      %1164 = vmatpush2.msra.mxu0 0.0
      %1165 = vmatprep.subr.mxu0 0.0
      %1166 = vmatpush2.msra.mxu0 0.0
      %1167 = vmatprep.subr.mxu0 0.0
      %1168 = vmatpush2.msra.mxu0 0.0
      %1169 = vmatprep.subr.mxu0 0.0
      %1170 = vmatpush2.msra.mxu0 0.0
      %1171 = vmatprep.subr.mxu0 0.0
      %1172 = vmatpush2.msra.mxu0 0.0
      %1173 = vmatprep.subr.mxu0 0.0
      %1174 = vmatpush2.msra.mxu0 0.0
      %1175 = vmatprep.subr.mxu0 0.0
      %1176 = vmatpush2.msra.mxu0 0.0
      %1177 = vmatprep.subr.mxu0 0.0
      %1178 = vmatpush2.msra.mxu0 0.0
      %1179 = vmatprep.subr.mxu0 0.0
      %1180 = vmatpush2.msra.mxu0 0.0
      %1181 = vmatprep.subr.mxu0 0.0
      %1182 = vmatpush2.msra.mxu0 0.0
      %1183 = vmatprep.subr.mxu0 0.0
      %1184 = vmatpush2.msra.mxu0 0.0
      %1185 = vmatprep.subr.mxu0 0.0
      %1186 = vmatpush2.msra.mxu0 0.0
      %1187 = vmatprep.mubr.f32.mxu0 0.0
      %1188 = vmatmul.mubr.f32.gmra.mxu0 %v1112
      %v1189 = vpop.f32.mrf.mxu0
      %v1190 = vadd.f32 %v1093, %v1189
      %v1191 = vpop.f32.mrf.mxu0
      %1192 = vmatprep.mubr.f32.mxu0 0.0
      %1193 = vmatmul.mubr.f32.gmra.mxu0 %v1115
      %v1194 = vpop.f32.mrf.mxu0
      %v1195 = vadd.f32 %v1098, %v1194
      %v1196 = vpop.f32.mrf.mxu0
      %1197 = vmatprep.mubr.f32.mxu0 0.0
      %1198 = vmatmul.mubr.f32.gmra.mxu0 %v1118
      %v1199 = vpop.f32.mrf.mxu0
      %v1200 = vadd.f32 %v1103, %v1199
      %v1201 = vpop.f32.mrf.mxu0
      %1202 = vmatprep.mubr.f32.mxu0 0.0
      %1203 = vmatmul.mubr.f32.gmra.mxu0 %v1121
      %v1204 = vpop.f32.mrf.mxu0
      %v1205 = vadd.f32 %v1108, %v1204
      %v1206 = vpop.f32.mrf.mxu0
      %1207 = vdwg.mxu0
      %v1208 = vadd.f32 %v1190, %v583
      %v1209 = vadd.f32 %v1195, %v583
      %v1210 = vadd.f32 %v1200, %v583
      %v1211 = vadd.f32 %v1205, %v583
      %s1212 = scalar_lea.vmem %s256, 64
      %1213 = vst [vmem:[%s1212] sm:$0xff] %v1208
      %1214 = vst [vmem:[%s1212 + $0x8] sm:$0xff] %v1209
      %1215 = vst [vmem:[%s1212 + $0x10] sm:$0xff] %v1210
      %1216 = vst [vmem:[%s1212 + $0x18] sm:$0x1] %v1211
      %s1217 = scalar_lea.vmem %s242, 96
      %v1218 = vld [vmem:[%s1217] sm:$0xff]
      %v1219 = vld [vmem:[%s1217 + $0x8] sm:$0xff]
      %v1220 = vld [vmem:[%s1217 + $0x10] sm:$0xff]
      %v1221 = vld [vmem:[%s1217 + $0x18] sm:$0x1]
      %s1222 = scalar_lea.vmem %s249, 96
      %v1223 = vld [vmem:[%s1222] sm:$0xff]
      %v1224 = vld [vmem:[%s1222 + $0x8] sm:$0xff]
      %v1225 = vld [vmem:[%s1222 + $0x10] sm:$0xff]
      %v1226 = vld [vmem:[%s1222 + $0x18] sm:$0x1]
      %v1228 = vsel %vm283, %v1223, 0
      %v1231 = vsel %vm283, %v1224, 0
      %v1234 = vsel %vm283, %v1225, 0
      %v1237 = vsel %vm283, %v1226, 0
      %v1240 = vsel %vm296, %v1221, 0
      %1242 = vmatprep.subr.mxu0 0.0
      %1243 = vmatpush1.msra.mxu0 0.0
      %1244 = vmatprep.subr.mxu0 0.0
      %1245 = vmatpush1.msra.mxu0 0.0
      %1246 = vmatprep.subr.mxu0 0.0
      %1247 = vmatpush1.msra.mxu0 0.0
      %1248 = vmatprep.subr.mxu0 0.0
      %1249 = vmatpush1.msra.mxu0 0.0
      %1250 = vmatprep.subr.mxu0 0.0
      %1251 = vmatpush1.msra.mxu0 0.0
      %1252 = vmatprep.subr.mxu0 0.0
      %1253 = vmatpush1.msra.mxu0 0.0
      %1254 = vmatprep.subr.mxu0 0.0
      %1255 = vmatpush1.msra.mxu0 0.0
      %1256 = vmatprep.subr.mxu0 0.0
      %1257 = vmatpush1.msra.mxu0 0.0
      %1258 = vmatprep.subr.mxu0 0.0
      %1259 = vmatpush1.msra.mxu0 0.0
      %1260 = vmatprep.subr.mxu0 0.0
      %1261 = vmatpush1.msra.mxu0 0.0
      %1262 = vmatprep.subr.mxu0 0.0
      %1263 = vmatpush1.msra.mxu0 0.0
      %1264 = vmatprep.subr.mxu0 0.0
      %1265 = vmatpush1.msra.mxu0 0.0
      %1266 = vmatprep.subr.mxu0 0.0
      %1267 = vmatpush1.msra.mxu0 %v1240
      %1268 = vmatprep.subr.mxu0 0.0
      %1269 = vmatpush1.msra.mxu0 %v1220
      %1270 = vmatprep.subr.mxu0 0.0
      %1271 = vmatpush1.msra.mxu0 %v1219
      %1272 = vmatprep.subr.mxu0 0.0
      %1273 = vmatpush1.msra.mxu0 %v1218
      %1274 = vmatprep.subr.mxu0 0.0
      %1275 = vmatpush2.msra.mxu0 0.0
      %1276 = vmatprep.subr.mxu0 0.0
      %1277 = vmatpush2.msra.mxu0 0.0
      %1278 = vmatprep.subr.mxu0 0.0
      %1279 = vmatpush2.msra.mxu0 0.0
      %1280 = vmatprep.subr.mxu0 0.0
      %1281 = vmatpush2.msra.mxu0 0.0
      %1282 = vmatprep.subr.mxu0 0.0
      %1283 = vmatpush2.msra.mxu0 0.0
      %1284 = vmatprep.subr.mxu0 0.0
      %1285 = vmatpush2.msra.mxu0 0.0
      %1286 = vmatprep.subr.mxu0 0.0
      %1287 = vmatpush2.msra.mxu0 0.0
      %1288 = vmatprep.subr.mxu0 0.0
      %1289 = vmatpush2.msra.mxu0 0.0
      %1290 = vmatprep.subr.mxu0 0.0
      %1291 = vmatpush2.msra.mxu0 0.0
      %1292 = vmatprep.subr.mxu0 0.0
      %1293 = vmatpush2.msra.mxu0 0.0
      %1294 = vmatprep.subr.mxu0 0.0
      %1295 = vmatpush2.msra.mxu0 0.0
      %1296 = vmatprep.subr.mxu0 0.0
      %1297 = vmatpush2.msra.mxu0 0.0
      %1298 = vmatprep.subr.mxu0 0.0
      %1299 = vmatpush2.msra.mxu0 0.0
      %1300 = vmatprep.subr.mxu0 0.0
      %1301 = vmatpush2.msra.mxu0 0.0
      %1302 = vmatprep.subr.mxu0 0.0
      %1303 = vmatpush2.msra.mxu0 0.0
      %1304 = vmatprep.subr.mxu0 0.0
      %1305 = vmatpush2.msra.mxu0 0.0
      %1306 = vmatprep.mubr.f32.mxu0 0.0
      %1307 = vmatmul.mubr.f32.gmra.mxu0 %v1228
      %v1308 = vpop.f32.mrf.mxu0
      %v1309 = vadd.f32 0.0, %v1308
      %v1310 = vpop.f32.mrf.mxu0
      %1311 = vmatprep.mubr.f32.mxu0 0.0
      %1312 = vmatmul.mubr.f32.gmra.mxu0 %v1231
      %v1313 = vpop.f32.mrf.mxu0
      %v1314 = vadd.f32 0.0, %v1313
      %v1315 = vpop.f32.mrf.mxu0
      %1316 = vmatprep.mubr.f32.mxu0 0.0
      %1317 = vmatmul.mubr.f32.gmra.mxu0 %v1234
      %v1318 = vpop.f32.mrf.mxu0
      %v1319 = vadd.f32 0.0, %v1318
      %v1320 = vpop.f32.mrf.mxu0
      %1321 = vmatprep.mubr.f32.mxu0 0.0
      %1322 = vmatmul.mubr.f32.gmra.mxu0 %v1237
      %v1323 = vpop.f32.mrf.mxu0
      %v1324 = vadd.f32 0.0, %v1323
      %v1325 = vpop.f32.mrf.mxu0
      %1326 = vdwg.mxu0
      %v1328 = vsel %vm385, %v1218, 0
      %v1331 = vsel %vm385, %v1219, 0
      %v1334 = vsel %vm385, %v1220, 0
      %v1336 = vsel %vm385, %v1221, 0
      %1338 = vmatprep.subr.mxu0 0.0
      %1339 = vmatpush1.msra.mxu0 0.0
      %1340 = vmatprep.subr.mxu0 0.0
      %1341 = vmatpush1.msra.mxu0 0.0
      %1342 = vmatprep.subr.mxu0 0.0
      %1343 = vmatpush1.msra.mxu0 0.0
      %1344 = vmatprep.subr.mxu0 0.0
      %1345 = vmatpush1.msra.mxu0 0.0
      %1346 = vmatprep.subr.mxu0 0.0
      %1347 = vmatpush1.msra.mxu0 0.0
      %1348 = vmatprep.subr.mxu0 0.0
      %1349 = vmatpush1.msra.mxu0 0.0
      %1350 = vmatprep.subr.mxu0 0.0
      %1351 = vmatpush1.msra.mxu0 0.0
      %1352 = vmatprep.subr.mxu0 0.0
      %1353 = vmatpush1.msra.mxu0 0.0
      %1354 = vmatprep.subr.mxu0 0.0
      %1355 = vmatpush1.msra.mxu0 %v273
      %1356 = vmatprep.subr.mxu0 0.0
      %1357 = vmatpush1.msra.mxu0 %v272
      %1358 = vmatprep.subr.mxu0 0.0
      %1359 = vmatpush1.msra.mxu0 %v271
      %1360 = vmatprep.subr.mxu0 0.0
      %1361 = vmatpush1.msra.mxu0 %v270
      %1362 = vmatprep.subr.mxu0 0.0
      %1363 = vmatpush1.msra.mxu0 %v269
      %1364 = vmatprep.subr.mxu0 0.0
      %1365 = vmatpush1.msra.mxu0 %v268
      %1366 = vmatprep.subr.mxu0 0.0
      %1367 = vmatpush1.msra.mxu0 %v267
      %1368 = vmatprep.subr.mxu0 0.0
      %1369 = vmatpush1.msra.mxu0 %v266
      %1370 = vmatprep.subr.mxu0 0.0
      %1371 = vmatpush2.msra.mxu0 0.0
      %1372 = vmatprep.subr.mxu0 0.0
      %1373 = vmatpush2.msra.mxu0 0.0
      %1374 = vmatprep.subr.mxu0 0.0
      %1375 = vmatpush2.msra.mxu0 0.0
      %1376 = vmatprep.subr.mxu0 0.0
      %1377 = vmatpush2.msra.mxu0 0.0
      %1378 = vmatprep.subr.mxu0 0.0
      %1379 = vmatpush2.msra.mxu0 0.0
      %1380 = vmatprep.subr.mxu0 0.0
      %1381 = vmatpush2.msra.mxu0 0.0
      %1382 = vmatprep.subr.mxu0 0.0
      %1383 = vmatpush2.msra.mxu0 0.0
      %1384 = vmatprep.subr.mxu0 0.0
      %1385 = vmatpush2.msra.mxu0 0.0
      %1386 = vmatprep.subr.mxu0 0.0
      %1387 = vmatpush2.msra.mxu0 0.0
      %1388 = vmatprep.subr.mxu0 0.0
      %1389 = vmatpush2.msra.mxu0 0.0
      %1390 = vmatprep.subr.mxu0 0.0
      %1391 = vmatpush2.msra.mxu0 0.0
      %1392 = vmatprep.subr.mxu0 0.0
      %1393 = vmatpush2.msra.mxu0 0.0
      %1394 = vmatprep.subr.mxu0 0.0
      %1395 = vmatpush2.msra.mxu0 0.0
      %1396 = vmatprep.subr.mxu0 0.0
      %1397 = vmatpush2.msra.mxu0 0.0
      %1398 = vmatprep.subr.mxu0 0.0
      %1399 = vmatpush2.msra.mxu0 0.0
      %1400 = vmatprep.subr.mxu0 0.0
      %1401 = vmatpush2.msra.mxu0 0.0
      %1402 = vmatprep.mubr.f32.mxu0 0.0
      %1403 = vmatmul.mubr.f32.gmra.mxu0 %v1328
      %v1404 = vpop.f32.mrf.mxu0
      %v1405 = vadd.f32 0.0, %v1404
      %v1406 = vpop.f32.mrf.mxu0
      %1407 = vmatprep.mubr.f32.mxu0 0.0
      %1408 = vmatmul.mubr.f32.gmra.mxu0 %v1331
      %v1409 = vpop.f32.mrf.mxu0
      %v1410 = vadd.f32 0.0, %v1409
      %v1411 = vpop.f32.mrf.mxu0
      %1412 = vmatprep.mubr.f32.mxu0 0.0
      %1413 = vmatmul.mubr.f32.gmra.mxu0 %v1334
      %v1414 = vpop.f32.mrf.mxu0
      %v1415 = vadd.f32 0.0, %v1414
      %v1416 = vpop.f32.mrf.mxu0
      %1417 = vmatprep.mubr.f32.mxu0 0.0
      %1418 = vmatmul.mubr.f32.gmra.mxu0 %v1336
      %v1419 = vpop.f32.mrf.mxu0
      %v1420 = vadd.f32 0.0, %v1419
      %v1421 = vpop.f32.mrf.mxu0
      %1422 = vdwg.mxu0
      %v1424 = vsel %vm385, %v1309, 0
      %v1427 = vsel %vm385, %v1314, 0
      %v1430 = vsel %vm385, %v1319, 0
      %v1433 = vsel %vm385, %v1324, 0
      %1435 = vmatprep.subr.mxu0 0.0
      %1436 = vmatpush1.msra.mxu0 0.0
      %1437 = vmatprep.subr.mxu0 0.0
      %1438 = vmatpush1.msra.mxu0 0.0
      %1439 = vmatprep.subr.mxu0 0.0
      %1440 = vmatpush1.msra.mxu0 0.0
      %1441 = vmatprep.subr.mxu0 0.0
      %1442 = vmatpush1.msra.mxu0 0.0
      %1443 = vmatprep.subr.mxu0 0.0
      %1444 = vmatpush1.msra.mxu0 0.0
      %1445 = vmatprep.subr.mxu0 0.0
      %1446 = vmatpush1.msra.mxu0 0.0
      %1447 = vmatprep.subr.mxu0 0.0
      %1448 = vmatpush1.msra.mxu0 0.0
      %1449 = vmatprep.subr.mxu0 0.0
      %1450 = vmatpush1.msra.mxu0 0.0
      %1451 = vmatprep.subr.mxu0 0.0
      %1452 = vmatpush1.msra.mxu0 %v265
      %1453 = vmatprep.subr.mxu0 0.0
      %1454 = vmatpush1.msra.mxu0 %v264
      %1455 = vmatprep.subr.mxu0 0.0
      %1456 = vmatpush1.msra.mxu0 %v263
      %1457 = vmatprep.subr.mxu0 0.0
      %1458 = vmatpush1.msra.mxu0 %v262
      %1459 = vmatprep.subr.mxu0 0.0
      %1460 = vmatpush1.msra.mxu0 %v261
      %1461 = vmatprep.subr.mxu0 0.0
      %1462 = vmatpush1.msra.mxu0 %v260
      %1463 = vmatprep.subr.mxu0 0.0
      %1464 = vmatpush1.msra.mxu0 %v259
      %1465 = vmatprep.subr.mxu0 0.0
      %1466 = vmatpush1.msra.mxu0 %v258
      %1467 = vmatprep.subr.mxu0 0.0
      %1468 = vmatpush2.msra.mxu0 0.0
      %1469 = vmatprep.subr.mxu0 0.0
      %1470 = vmatpush2.msra.mxu0 0.0
      %1471 = vmatprep.subr.mxu0 0.0
      %1472 = vmatpush2.msra.mxu0 0.0
      %1473 = vmatprep.subr.mxu0 0.0
      %1474 = vmatpush2.msra.mxu0 0.0
      %1475 = vmatprep.subr.mxu0 0.0
      %1476 = vmatpush2.msra.mxu0 0.0
      %1477 = vmatprep.subr.mxu0 0.0
      %1478 = vmatpush2.msra.mxu0 0.0
      %1479 = vmatprep.subr.mxu0 0.0
      %1480 = vmatpush2.msra.mxu0 0.0
      %1481 = vmatprep.subr.mxu0 0.0
      %1482 = vmatpush2.msra.mxu0 0.0
      %1483 = vmatprep.subr.mxu0 0.0
      %1484 = vmatpush2.msra.mxu0 0.0
      %1485 = vmatprep.subr.mxu0 0.0
      %1486 = vmatpush2.msra.mxu0 0.0
      %1487 = vmatprep.subr.mxu0 0.0
      %1488 = vmatpush2.msra.mxu0 0.0
      %1489 = vmatprep.subr.mxu0 0.0
      %1490 = vmatpush2.msra.mxu0 0.0
      %1491 = vmatprep.subr.mxu0 0.0
      %1492 = vmatpush2.msra.mxu0 0.0
      %1493 = vmatprep.subr.mxu0 0.0
      %1494 = vmatpush2.msra.mxu0 0.0
      %1495 = vmatprep.subr.mxu0 0.0
      %1496 = vmatpush2.msra.mxu0 0.0
      %1497 = vmatprep.subr.mxu0 0.0
      %1498 = vmatpush2.msra.mxu0 0.0
      %1499 = vmatprep.mubr.f32.mxu0 0.0
      %1500 = vmatmul.mubr.f32.gmra.mxu0 %v1424
      %v1501 = vpop.f32.mrf.mxu0
      %v1502 = vadd.f32 %v1405, %v1501
      %v1503 = vpop.f32.mrf.mxu0
      %1504 = vmatprep.mubr.f32.mxu0 0.0
      %1505 = vmatmul.mubr.f32.gmra.mxu0 %v1427
      %v1506 = vpop.f32.mrf.mxu0
      %v1507 = vadd.f32 %v1410, %v1506
      %v1508 = vpop.f32.mrf.mxu0
      %1509 = vmatprep.mubr.f32.mxu0 0.0
      %1510 = vmatmul.mubr.f32.gmra.mxu0 %v1430
      %v1511 = vpop.f32.mrf.mxu0
      %v1512 = vadd.f32 %v1415, %v1511
      %v1513 = vpop.f32.mrf.mxu0
      %1514 = vmatprep.mubr.f32.mxu0 0.0
      %1515 = vmatmul.mubr.f32.gmra.mxu0 %v1433
      %v1516 = vpop.f32.mrf.mxu0
      %v1517 = vadd.f32 %v1420, %v1516
      %v1518 = vpop.f32.mrf.mxu0
      %1519 = vdwg.mxu0
      %v1520 = vadd.f32 %v1502, %v583
      %v1521 = vadd.f32 %v1507, %v583
      %v1522 = vadd.f32 %v1512, %v583
      %v1523 = vadd.f32 %v1517, %v583
      %s1524 = scalar_lea.vmem %s256, 96
      %1525 = vst [vmem:[%s1524] sm:$0xff] %v1520
      %1526 = vst [vmem:[%s1524 + $0x8] sm:$0xff] %v1521
      %1527 = vst [vmem:[%s1524 + $0x10] sm:$0xff] %v1522
      %1528 = vst [vmem:[%s1524 + $0x18] sm:$0x1] %v1523
      %s1529 = scalar_lea.vmem %s242, 128
      %v1530 = vld [vmem:[%s1529] sm:$0xff]
      %v1531 = vld [vmem:[%s1529 + $0x8] sm:$0xff]
      %v1532 = vld [vmem:[%s1529 + $0x10] sm:$0xff]
      %v1533 = vld [vmem:[%s1529 + $0x18] sm:$0x1]
      %s1534 = scalar_lea.vmem %s249, 128
      %v1535 = vld [vmem:[%s1534] sm:$0xff]
      %v1536 = vld [vmem:[%s1534 + $0x8] sm:$0xff]
      %v1537 = vld [vmem:[%s1534 + $0x10] sm:$0xff]
      %v1538 = vld [vmem:[%s1534 + $0x18] sm:$0x1]
      %v1540 = vsel %vm283, %v1535, 0
      %v1543 = vsel %vm283, %v1536, 0
      %v1546 = vsel %vm283, %v1537, 0
      %v1549 = vsel %vm283, %v1538, 0
      %v1552 = vsel %vm296, %v1533, 0
      %1554 = vmatprep.subr.mxu0 0.0
      %1555 = vmatpush1.msra.mxu0 0.0
      %1556 = vmatprep.subr.mxu0 0.0
      %1557 = vmatpush1.msra.mxu0 0.0
      %1558 = vmatprep.subr.mxu0 0.0
      %1559 = vmatpush1.msra.mxu0 0.0
      %1560 = vmatprep.subr.mxu0 0.0
      %1561 = vmatpush1.msra.mxu0 0.0
      %1562 = vmatprep.subr.mxu0 0.0
      %1563 = vmatpush1.msra.mxu0 0.0
      %1564 = vmatprep.subr.mxu0 0.0
      %1565 = vmatpush1.msra.mxu0 0.0
      %1566 = vmatprep.subr.mxu0 0.0
      %1567 = vmatpush1.msra.mxu0 0.0
      %1568 = vmatprep.subr.mxu0 0.0
      %1569 = vmatpush1.msra.mxu0 0.0
      %1570 = vmatprep.subr.mxu0 0.0
      %1571 = vmatpush1.msra.mxu0 0.0
      %1572 = vmatprep.subr.mxu0 0.0
      %1573 = vmatpush1.msra.mxu0 0.0
      %1574 = vmatprep.subr.mxu0 0.0
      %1575 = vmatpush1.msra.mxu0 0.0
      %1576 = vmatprep.subr.mxu0 0.0
      %1577 = vmatpush1.msra.mxu0 0.0
      %1578 = vmatprep.subr.mxu0 0.0
      %1579 = vmatpush1.msra.mxu0 %v1552
      %1580 = vmatprep.subr.mxu0 0.0
      %1581 = vmatpush1.msra.mxu0 %v1532
      %1582 = vmatprep.subr.mxu0 0.0
      %1583 = vmatpush1.msra.mxu0 %v1531
      %1584 = vmatprep.subr.mxu0 0.0
      %1585 = vmatpush1.msra.mxu0 %v1530
      %1586 = vmatprep.subr.mxu0 0.0
      %1587 = vmatpush2.msra.mxu0 0.0
      %1588 = vmatprep.subr.mxu0 0.0
      %1589 = vmatpush2.msra.mxu0 0.0
      %1590 = vmatprep.subr.mxu0 0.0
      %1591 = vmatpush2.msra.mxu0 0.0
      %1592 = vmatprep.subr.mxu0 0.0
      %1593 = vmatpush2.msra.mxu0 0.0
      %1594 = vmatprep.subr.mxu0 0.0
      %1595 = vmatpush2.msra.mxu0 0.0
      %1596 = vmatprep.subr.mxu0 0.0
      %1597 = vmatpush2.msra.mxu0 0.0
      %1598 = vmatprep.subr.mxu0 0.0
      %1599 = vmatpush2.msra.mxu0 0.0
      %1600 = vmatprep.subr.mxu0 0.0
      %1601 = vmatpush2.msra.mxu0 0.0
      %1602 = vmatprep.subr.mxu0 0.0
      %1603 = vmatpush2.msra.mxu0 0.0
      %1604 = vmatprep.subr.mxu0 0.0
      %1605 = vmatpush2.msra.mxu0 0.0
      %1606 = vmatprep.subr.mxu0 0.0
      %1607 = vmatpush2.msra.mxu0 0.0
      %1608 = vmatprep.subr.mxu0 0.0
      %1609 = vmatpush2.msra.mxu0 0.0
      %1610 = vmatprep.subr.mxu0 0.0
      %1611 = vmatpush2.msra.mxu0 0.0
      %1612 = vmatprep.subr.mxu0 0.0
      %1613 = vmatpush2.msra.mxu0 0.0
      %1614 = vmatprep.subr.mxu0 0.0
      %1615 = vmatpush2.msra.mxu0 0.0
      %1616 = vmatprep.subr.mxu0 0.0
      %1617 = vmatpush2.msra.mxu0 0.0
      %1618 = vmatprep.mubr.f32.mxu0 0.0
      %1619 = vmatmul.mubr.f32.gmra.mxu0 %v1540
      %v1620 = vpop.f32.mrf.mxu0
      %v1621 = vadd.f32 0.0, %v1620
      %v1622 = vpop.f32.mrf.mxu0
      %1623 = vmatprep.mubr.f32.mxu0 0.0
      %1624 = vmatmul.mubr.f32.gmra.mxu0 %v1543
      %v1625 = vpop.f32.mrf.mxu0
      %v1626 = vadd.f32 0.0, %v1625
      %v1627 = vpop.f32.mrf.mxu0
      %1628 = vmatprep.mubr.f32.mxu0 0.0
      %1629 = vmatmul.mubr.f32.gmra.mxu0 %v1546
      %v1630 = vpop.f32.mrf.mxu0
      %v1631 = vadd.f32 0.0, %v1630
      %v1632 = vpop.f32.mrf.mxu0
      %1633 = vmatprep.mubr.f32.mxu0 0.0
      %1634 = vmatmul.mubr.f32.gmra.mxu0 %v1549
      %v1635 = vpop.f32.mrf.mxu0
      %v1636 = vadd.f32 0.0, %v1635
      %v1637 = vpop.f32.mrf.mxu0
      %1638 = vdwg.mxu0
      %v1640 = vsel %vm385, %v1530, 0
      %v1643 = vsel %vm385, %v1531, 0
      %v1646 = vsel %vm385, %v1532, 0
      %v1648 = vsel %vm385, %v1533, 0
      %1650 = vmatprep.subr.mxu0 0.0
      %1651 = vmatpush1.msra.mxu0 0.0
      %1652 = vmatprep.subr.mxu0 0.0
      %1653 = vmatpush1.msra.mxu0 0.0
      %1654 = vmatprep.subr.mxu0 0.0
      %1655 = vmatpush1.msra.mxu0 0.0
      %1656 = vmatprep.subr.mxu0 0.0
      %1657 = vmatpush1.msra.mxu0 0.0
      %1658 = vmatprep.subr.mxu0 0.0
      %1659 = vmatpush1.msra.mxu0 0.0
      %1660 = vmatprep.subr.mxu0 0.0
      %1661 = vmatpush1.msra.mxu0 0.0
      %1662 = vmatprep.subr.mxu0 0.0
      %1663 = vmatpush1.msra.mxu0 0.0
      %1664 = vmatprep.subr.mxu0 0.0
      %1665 = vmatpush1.msra.mxu0 0.0
      %1666 = vmatprep.subr.mxu0 0.0
      %1667 = vmatpush1.msra.mxu0 %v273
      %1668 = vmatprep.subr.mxu0 0.0
      %1669 = vmatpush1.msra.mxu0 %v272
      %1670 = vmatprep.subr.mxu0 0.0
      %1671 = vmatpush1.msra.mxu0 %v271
      %1672 = vmatprep.subr.mxu0 0.0
      %1673 = vmatpush1.msra.mxu0 %v270
      %1674 = vmatprep.subr.mxu0 0.0
      %1675 = vmatpush1.msra.mxu0 %v269
      %1676 = vmatprep.subr.mxu0 0.0
      %1677 = vmatpush1.msra.mxu0 %v268
      %1678 = vmatprep.subr.mxu0 0.0
      %1679 = vmatpush1.msra.mxu0 %v267
      %1680 = vmatprep.subr.mxu0 0.0
      %1681 = vmatpush1.msra.mxu0 %v266
      %1682 = vmatprep.subr.mxu0 0.0
      %1683 = vmatpush2.msra.mxu0 0.0
      %1684 = vmatprep.subr.mxu0 0.0
      %1685 = vmatpush2.msra.mxu0 0.0
      %1686 = vmatprep.subr.mxu0 0.0
      %1687 = vmatpush2.msra.mxu0 0.0
      %1688 = vmatprep.subr.mxu0 0.0
      %1689 = vmatpush2.msra.mxu0 0.0
      %1690 = vmatprep.subr.mxu0 0.0
      %1691 = vmatpush2.msra.mxu0 0.0
      %1692 = vmatprep.subr.mxu0 0.0
      %1693 = vmatpush2.msra.mxu0 0.0
      %1694 = vmatprep.subr.mxu0 0.0
      %1695 = vmatpush2.msra.mxu0 0.0
      %1696 = vmatprep.subr.mxu0 0.0
      %1697 = vmatpush2.msra.mxu0 0.0
      %1698 = vmatprep.subr.mxu0 0.0
      %1699 = vmatpush2.msra.mxu0 0.0
      %1700 = vmatprep.subr.mxu0 0.0
      %1701 = vmatpush2.msra.mxu0 0.0
      %1702 = vmatprep.subr.mxu0 0.0
      %1703 = vmatpush2.msra.mxu0 0.0
      %1704 = vmatprep.subr.mxu0 0.0
      %1705 = vmatpush2.msra.mxu0 0.0
      %1706 = vmatprep.subr.mxu0 0.0
      %1707 = vmatpush2.msra.mxu0 0.0
      %1708 = vmatprep.subr.mxu0 0.0
      %1709 = vmatpush2.msra.mxu0 0.0
      %1710 = vmatprep.subr.mxu0 0.0
      %1711 = vmatpush2.msra.mxu0 0.0
      %1712 = vmatprep.subr.mxu0 0.0
      %1713 = vmatpush2.msra.mxu0 0.0
      %1714 = vmatprep.mubr.f32.mxu0 0.0
      %1715 = vmatmul.mubr.f32.gmra.mxu0 %v1640
      %v1716 = vpop.f32.mrf.mxu0
      %v1717 = vadd.f32 0.0, %v1716
      %v1718 = vpop.f32.mrf.mxu0
      %1719 = vmatprep.mubr.f32.mxu0 0.0
      %1720 = vmatmul.mubr.f32.gmra.mxu0 %v1643
      %v1721 = vpop.f32.mrf.mxu0
      %v1722 = vadd.f32 0.0, %v1721
      %v1723 = vpop.f32.mrf.mxu0
      %1724 = vmatprep.mubr.f32.mxu0 0.0
      %1725 = vmatmul.mubr.f32.gmra.mxu0 %v1646
      %v1726 = vpop.f32.mrf.mxu0
      %v1727 = vadd.f32 0.0, %v1726
      %v1728 = vpop.f32.mrf.mxu0
      %1729 = vmatprep.mubr.f32.mxu0 0.0
      %1730 = vmatmul.mubr.f32.gmra.mxu0 %v1648
      %v1731 = vpop.f32.mrf.mxu0
      %v1732 = vadd.f32 0.0, %v1731
      %v1733 = vpop.f32.mrf.mxu0
      %1734 = vdwg.mxu0
      %v1736 = vsel %vm385, %v1621, 0
      %v1739 = vsel %vm385, %v1626, 0
      %v1742 = vsel %vm385, %v1631, 0
      %v1745 = vsel %vm385, %v1636, 0
      %1747 = vmatprep.subr.mxu0 0.0
      %1748 = vmatpush1.msra.mxu0 0.0
      %1749 = vmatprep.subr.mxu0 0.0
      %1750 = vmatpush1.msra.mxu0 0.0
      %1751 = vmatprep.subr.mxu0 0.0
      %1752 = vmatpush1.msra.mxu0 0.0
      %1753 = vmatprep.subr.mxu0 0.0
      %1754 = vmatpush1.msra.mxu0 0.0
      %1755 = vmatprep.subr.mxu0 0.0
      %1756 = vmatpush1.msra.mxu0 0.0
      %1757 = vmatprep.subr.mxu0 0.0
      %1758 = vmatpush1.msra.mxu0 0.0
      %1759 = vmatprep.subr.mxu0 0.0
      %1760 = vmatpush1.msra.mxu0 0.0
      %1761 = vmatprep.subr.mxu0 0.0
      %1762 = vmatpush1.msra.mxu0 0.0
      %1763 = vmatprep.subr.mxu0 0.0
      %1764 = vmatpush1.msra.mxu0 %v265
      %1765 = vmatprep.subr.mxu0 0.0
      %1766 = vmatpush1.msra.mxu0 %v264
      %1767 = vmatprep.subr.mxu0 0.0
      %1768 = vmatpush1.msra.mxu0 %v263
      %1769 = vmatprep.subr.mxu0 0.0
      %1770 = vmatpush1.msra.mxu0 %v262
      %1771 = vmatprep.subr.mxu0 0.0
      %1772 = vmatpush1.msra.mxu0 %v261
      %1773 = vmatprep.subr.mxu0 0.0
      %1774 = vmatpush1.msra.mxu0 %v260
      %1775 = vmatprep.subr.mxu0 0.0
      %1776 = vmatpush1.msra.mxu0 %v259
      %1777 = vmatprep.subr.mxu0 0.0
      %1778 = vmatpush1.msra.mxu0 %v258
      %1779 = vmatprep.subr.mxu0 0.0
      %1780 = vmatpush2.msra.mxu0 0.0
      %1781 = vmatprep.subr.mxu0 0.0
      %1782 = vmatpush2.msra.mxu0 0.0
      %1783 = vmatprep.subr.mxu0 0.0
      %1784 = vmatpush2.msra.mxu0 0.0
      %1785 = vmatprep.subr.mxu0 0.0
      %1786 = vmatpush2.msra.mxu0 0.0
      %1787 = vmatprep.subr.mxu0 0.0
      %1788 = vmatpush2.msra.mxu0 0.0
      %1789 = vmatprep.subr.mxu0 0.0
      %1790 = vmatpush2.msra.mxu0 0.0
      %1791 = vmatprep.subr.mxu0 0.0
      %1792 = vmatpush2.msra.mxu0 0.0
      %1793 = vmatprep.subr.mxu0 0.0
      %1794 = vmatpush2.msra.mxu0 0.0
      %1795 = vmatprep.subr.mxu0 0.0
      %1796 = vmatpush2.msra.mxu0 0.0
      %1797 = vmatprep.subr.mxu0 0.0
      %1798 = vmatpush2.msra.mxu0 0.0
      %1799 = vmatprep.subr.mxu0 0.0
      %1800 = vmatpush2.msra.mxu0 0.0
      %1801 = vmatprep.subr.mxu0 0.0
      %1802 = vmatpush2.msra.mxu0 0.0
      %1803 = vmatprep.subr.mxu0 0.0
      %1804 = vmatpush2.msra.mxu0 0.0
      %1805 = vmatprep.subr.mxu0 0.0
      %1806 = vmatpush2.msra.mxu0 0.0
      %1807 = vmatprep.subr.mxu0 0.0
      %1808 = vmatpush2.msra.mxu0 0.0
      %1809 = vmatprep.subr.mxu0 0.0
      %1810 = vmatpush2.msra.mxu0 0.0
      %1811 = vmatprep.mubr.f32.mxu0 0.0
      %1812 = vmatmul.mubr.f32.gmra.mxu0 %v1736
      %v1813 = vpop.f32.mrf.mxu0
      %v1814 = vadd.f32 %v1717, %v1813
      %v1815 = vpop.f32.mrf.mxu0
      %1816 = vmatprep.mubr.f32.mxu0 0.0
      %1817 = vmatmul.mubr.f32.gmra.mxu0 %v1739
      %v1818 = vpop.f32.mrf.mxu0
      %v1819 = vadd.f32 %v1722, %v1818
      %v1820 = vpop.f32.mrf.mxu0
      %1821 = vmatprep.mubr.f32.mxu0 0.0
      %1822 = vmatmul.mubr.f32.gmra.mxu0 %v1742
      %v1823 = vpop.f32.mrf.mxu0
      %v1824 = vadd.f32 %v1727, %v1823
      %v1825 = vpop.f32.mrf.mxu0
      %1826 = vmatprep.mubr.f32.mxu0 0.0
      %1827 = vmatmul.mubr.f32.gmra.mxu0 %v1745
      %v1828 = vpop.f32.mrf.mxu0
      %v1829 = vadd.f32 %v1732, %v1828
      %v1830 = vpop.f32.mrf.mxu0
      %1831 = vdwg.mxu0
      %v1832 = vadd.f32 %v1814, %v583
      %v1833 = vadd.f32 %v1819, %v583
      %v1834 = vadd.f32 %v1824, %v583
      %v1835 = vadd.f32 %v1829, %v583
      %s1836 = scalar_lea.vmem %s256, 128
      %1837 = vst [vmem:[%s1836] sm:$0xff] %v1832
      %1838 = vst [vmem:[%s1836 + $0x8] sm:$0xff] %v1833
      %1839 = vst [vmem:[%s1836 + $0x10] sm:$0xff] %v1834
      %1840 = vst [vmem:[%s1836 + $0x18] sm:$0x1] %v1835
      %s1841 = scalar_lea.vmem %s242, 160
      %v1842 = vld [vmem:[%s1841] sm:$0xff]
      %v1843 = vld [vmem:[%s1841 + $0x8] sm:$0xff]
      %v1844 = vld [vmem:[%s1841 + $0x10] sm:$0xff]
      %v1845 = vld [vmem:[%s1841 + $0x18] sm:$0x1]
      %s1846 = scalar_lea.vmem %s249, 160
      %v1847 = vld [vmem:[%s1846] sm:$0xff]
      %v1848 = vld [vmem:[%s1846 + $0x8] sm:$0xff]
      %v1849 = vld [vmem:[%s1846 + $0x10] sm:$0xff]
      %v1850 = vld [vmem:[%s1846 + $0x18] sm:$0x1]
      %v1852 = vsel %vm283, %v1847, 0
      %v1855 = vsel %vm283, %v1848, 0
      %v1858 = vsel %vm283, %v1849, 0
      %v1861 = vsel %vm283, %v1850, 0
      %v1864 = vsel %vm296, %v1845, 0
      %1866 = vmatprep.subr.mxu0 0.0
      %1867 = vmatpush1.msra.mxu0 0.0
      %1868 = vmatprep.subr.mxu0 0.0
      %1869 = vmatpush1.msra.mxu0 0.0
      %1870 = vmatprep.subr.mxu0 0.0
      %1871 = vmatpush1.msra.mxu0 0.0
      %1872 = vmatprep.subr.mxu0 0.0
      %1873 = vmatpush1.msra.mxu0 0.0
      %1874 = vmatprep.subr.mxu0 0.0
      %1875 = vmatpush1.msra.mxu0 0.0
      %1876 = vmatprep.subr.mxu0 0.0
      %1877 = vmatpush1.msra.mxu0 0.0
      %1878 = vmatprep.subr.mxu0 0.0
      %1879 = vmatpush1.msra.mxu0 0.0
      %1880 = vmatprep.subr.mxu0 0.0
      %1881 = vmatpush1.msra.mxu0 0.0
      %1882 = vmatprep.subr.mxu0 0.0
      %1883 = vmatpush1.msra.mxu0 0.0
      %1884 = vmatprep.subr.mxu0 0.0
      %1885 = vmatpush1.msra.mxu0 0.0
      %1886 = vmatprep.subr.mxu0 0.0
      %1887 = vmatpush1.msra.mxu0 0.0
      %1888 = vmatprep.subr.mxu0 0.0
      %1889 = vmatpush1.msra.mxu0 0.0
      %1890 = vmatprep.subr.mxu0 0.0
      %1891 = vmatpush1.msra.mxu0 %v1864
      %1892 = vmatprep.subr.mxu0 0.0
      %1893 = vmatpush1.msra.mxu0 %v1844
      %1894 = vmatprep.subr.mxu0 0.0
      %1895 = vmatpush1.msra.mxu0 %v1843
      %1896 = vmatprep.subr.mxu0 0.0
      %1897 = vmatpush1.msra.mxu0 %v1842
      %1898 = vmatprep.subr.mxu0 0.0
      %1899 = vmatpush2.msra.mxu0 0.0
      %1900 = vmatprep.subr.mxu0 0.0
      %1901 = vmatpush2.msra.mxu0 0.0
      %1902 = vmatprep.subr.mxu0 0.0
      %1903 = vmatpush2.msra.mxu0 0.0
      %1904 = vmatprep.subr.mxu0 0.0
      %1905 = vmatpush2.msra.mxu0 0.0
      %1906 = vmatprep.subr.mxu0 0.0
      %1907 = vmatpush2.msra.mxu0 0.0
      %1908 = vmatprep.subr.mxu0 0.0
      %1909 = vmatpush2.msra.mxu0 0.0
      %1910 = vmatprep.subr.mxu0 0.0
      %1911 = vmatpush2.msra.mxu0 0.0
      %1912 = vmatprep.subr.mxu0 0.0
      %1913 = vmatpush2.msra.mxu0 0.0
      %1914 = vmatprep.subr.mxu0 0.0
      %1915 = vmatpush2.msra.mxu0 0.0
      %1916 = vmatprep.subr.mxu0 0.0
      %1917 = vmatpush2.msra.mxu0 0.0
      %1918 = vmatprep.subr.mxu0 0.0
      %1919 = vmatpush2.msra.mxu0 0.0
      %1920 = vmatprep.subr.mxu0 0.0
      %1921 = vmatpush2.msra.mxu0 0.0
      %1922 = vmatprep.subr.mxu0 0.0
      %1923 = vmatpush2.msra.mxu0 0.0
      %1924 = vmatprep.subr.mxu0 0.0
      %1925 = vmatpush2.msra.mxu0 0.0
      %1926 = vmatprep.subr.mxu0 0.0
      %1927 = vmatpush2.msra.mxu0 0.0
      %1928 = vmatprep.subr.mxu0 0.0
      %1929 = vmatpush2.msra.mxu0 0.0
      %1930 = vmatprep.mubr.f32.mxu0 0.0
      %1931 = vmatmul.mubr.f32.gmra.mxu0 %v1852
      %v1932 = vpop.f32.mrf.mxu0
      %v1933 = vadd.f32 0.0, %v1932
      %v1934 = vpop.f32.mrf.mxu0
      %1935 = vmatprep.mubr.f32.mxu0 0.0
      %1936 = vmatmul.mubr.f32.gmra.mxu0 %v1855
      %v1937 = vpop.f32.mrf.mxu0
      %v1938 = vadd.f32 0.0, %v1937
      %v1939 = vpop.f32.mrf.mxu0
      %1940 = vmatprep.mubr.f32.mxu0 0.0
      %1941 = vmatmul.mubr.f32.gmra.mxu0 %v1858
      %v1942 = vpop.f32.mrf.mxu0
      %v1943 = vadd.f32 0.0, %v1942
      %v1944 = vpop.f32.mrf.mxu0
      %1945 = vmatprep.mubr.f32.mxu0 0.0
      %1946 = vmatmul.mubr.f32.gmra.mxu0 %v1861
      %v1947 = vpop.f32.mrf.mxu0
      %v1948 = vadd.f32 0.0, %v1947
      %v1949 = vpop.f32.mrf.mxu0
      %1950 = vdwg.mxu0
      %v1952 = vsel %vm385, %v1842, 0
      %v1955 = vsel %vm385, %v1843, 0
      %v1958 = vsel %vm385, %v1844, 0
      %v1960 = vsel %vm385, %v1845, 0
      %1962 = vmatprep.subr.mxu0 0.0
      %1963 = vmatpush1.msra.mxu0 0.0
      %1964 = vmatprep.subr.mxu0 0.0
      %1965 = vmatpush1.msra.mxu0 0.0
      %1966 = vmatprep.subr.mxu0 0.0
      %1967 = vmatpush1.msra.mxu0 0.0
      %1968 = vmatprep.subr.mxu0 0.0
      %1969 = vmatpush1.msra.mxu0 0.0
      %1970 = vmatprep.subr.mxu0 0.0
      %1971 = vmatpush1.msra.mxu0 0.0
      %1972 = vmatprep.subr.mxu0 0.0
      %1973 = vmatpush1.msra.mxu0 0.0
      %1974 = vmatprep.subr.mxu0 0.0
      %1975 = vmatpush1.msra.mxu0 0.0
      %1976 = vmatprep.subr.mxu0 0.0
      %1977 = vmatpush1.msra.mxu0 0.0
      %1978 = vmatprep.subr.mxu0 0.0
      %1979 = vmatpush1.msra.mxu0 %v273
      %1980 = vmatprep.subr.mxu0 0.0
      %1981 = vmatpush1.msra.mxu0 %v272
      %1982 = vmatprep.subr.mxu0 0.0
      %1983 = vmatpush1.msra.mxu0 %v271
      %1984 = vmatprep.subr.mxu0 0.0
      %1985 = vmatpush1.msra.mxu0 %v270
      %1986 = vmatprep.subr.mxu0 0.0
      %1987 = vmatpush1.msra.mxu0 %v269
      %1988 = vmatprep.subr.mxu0 0.0
      %1989 = vmatpush1.msra.mxu0 %v268
      %1990 = vmatprep.subr.mxu0 0.0
      %1991 = vmatpush1.msra.mxu0 %v267
      %1992 = vmatprep.subr.mxu0 0.0
      %1993 = vmatpush1.msra.mxu0 %v266
      %1994 = vmatprep.subr.mxu0 0.0
      %1995 = vmatpush2.msra.mxu0 0.0
      %1996 = vmatprep.subr.mxu0 0.0
      %1997 = vmatpush2.msra.mxu0 0.0
      %1998 = vmatprep.subr.mxu0 0.0
      %1999 = vmatpush2.msra.mxu0 0.0
      %2000 = vmatprep.subr.mxu0 0.0
      %2001 = vmatpush2.msra.mxu0 0.0
      %2002 = vmatprep.subr.mxu0 0.0
      %2003 = vmatpush2.msra.mxu0 0.0
      %2004 = vmatprep.subr.mxu0 0.0
      %2005 = vmatpush2.msra.mxu0 0.0
      %2006 = vmatprep.subr.mxu0 0.0
      %2007 = vmatpush2.msra.mxu0 0.0
      %2008 = vmatprep.subr.mxu0 0.0
      %2009 = vmatpush2.msra.mxu0 0.0
      %2010 = vmatprep.subr.mxu0 0.0
      %2011 = vmatpush2.msra.mxu0 0.0
      %2012 = vmatprep.subr.mxu0 0.0
      %2013 = vmatpush2.msra.mxu0 0.0
      %2014 = vmatprep.subr.mxu0 0.0
      %2015 = vmatpush2.msra.mxu0 0.0
      %2016 = vmatprep.subr.mxu0 0.0
      %2017 = vmatpush2.msra.mxu0 0.0
      %2018 = vmatprep.subr.mxu0 0.0
      %2019 = vmatpush2.msra.mxu0 0.0
      %2020 = vmatprep.subr.mxu0 0.0
      %2021 = vmatpush2.msra.mxu0 0.0
      %2022 = vmatprep.subr.mxu0 0.0
      %2023 = vmatpush2.msra.mxu0 0.0
      %2024 = vmatprep.subr.mxu0 0.0
      %2025 = vmatpush2.msra.mxu0 0.0
      %2026 = vmatprep.mubr.f32.mxu0 0.0
      %2027 = vmatmul.mubr.f32.gmra.mxu0 %v1952
      %v2028 = vpop.f32.mrf.mxu0
      %v2029 = vadd.f32 0.0, %v2028
      %v2030 = vpop.f32.mrf.mxu0
      %2031 = vmatprep.mubr.f32.mxu0 0.0
      %2032 = vmatmul.mubr.f32.gmra.mxu0 %v1955
      %v2033 = vpop.f32.mrf.mxu0
      %v2034 = vadd.f32 0.0, %v2033
      %v2035 = vpop.f32.mrf.mxu0
      %2036 = vmatprep.mubr.f32.mxu0 0.0
      %2037 = vmatmul.mubr.f32.gmra.mxu0 %v1958
      %v2038 = vpop.f32.mrf.mxu0
      %v2039 = vadd.f32 0.0, %v2038
      %v2040 = vpop.f32.mrf.mxu0
      %2041 = vmatprep.mubr.f32.mxu0 0.0
      %2042 = vmatmul.mubr.f32.gmra.mxu0 %v1960
      %v2043 = vpop.f32.mrf.mxu0
      %v2044 = vadd.f32 0.0, %v2043
      %v2045 = vpop.f32.mrf.mxu0
      %2046 = vdwg.mxu0
      %v2048 = vsel %vm385, %v1933, 0
      %v2051 = vsel %vm385, %v1938, 0
      %v2054 = vsel %vm385, %v1943, 0
      %v2057 = vsel %vm385, %v1948, 0
      %2059 = vmatprep.subr.mxu0 0.0
      %2060 = vmatpush1.msra.mxu0 0.0
      %2061 = vmatprep.subr.mxu0 0.0
      %2062 = vmatpush1.msra.mxu0 0.0
      %2063 = vmatprep.subr.mxu0 0.0
      %2064 = vmatpush1.msra.mxu0 0.0
      %2065 = vmatprep.subr.mxu0 0.0
      %2066 = vmatpush1.msra.mxu0 0.0
      %2067 = vmatprep.subr.mxu0 0.0
      %2068 = vmatpush1.msra.mxu0 0.0
      %2069 = vmatprep.subr.mxu0 0.0
      %2070 = vmatpush1.msra.mxu0 0.0
      %2071 = vmatprep.subr.mxu0 0.0
      %2072 = vmatpush1.msra.mxu0 0.0
      %2073 = vmatprep.subr.mxu0 0.0
      %2074 = vmatpush1.msra.mxu0 0.0
      %2075 = vmatprep.subr.mxu0 0.0
      %2076 = vmatpush1.msra.mxu0 %v265
      %2077 = vmatprep.subr.mxu0 0.0
      %2078 = vmatpush1.msra.mxu0 %v264
      %2079 = vmatprep.subr.mxu0 0.0
      %2080 = vmatpush1.msra.mxu0 %v263
      %2081 = vmatprep.subr.mxu0 0.0
      %2082 = vmatpush1.msra.mxu0 %v262
      %2083 = vmatprep.subr.mxu0 0.0
      %2084 = vmatpush1.msra.mxu0 %v261
      %2085 = vmatprep.subr.mxu0 0.0
      %2086 = vmatpush1.msra.mxu0 %v260
      %2087 = vmatprep.subr.mxu0 0.0
      %2088 = vmatpush1.msra.mxu0 %v259
      %2089 = vmatprep.subr.mxu0 0.0
      %2090 = vmatpush1.msra.mxu0 %v258
      %2091 = vmatprep.subr.mxu0 0.0
      %2092 = vmatpush2.msra.mxu0 0.0
      %2093 = vmatprep.subr.mxu0 0.0
      %2094 = vmatpush2.msra.mxu0 0.0
      %2095 = vmatprep.subr.mxu0 0.0
      %2096 = vmatpush2.msra.mxu0 0.0
      %2097 = vmatprep.subr.mxu0 0.0
      %2098 = vmatpush2.msra.mxu0 0.0
      %2099 = vmatprep.subr.mxu0 0.0
      %2100 = vmatpush2.msra.mxu0 0.0
      %2101 = vmatprep.subr.mxu0 0.0
      %2102 = vmatpush2.msra.mxu0 0.0
      %2103 = vmatprep.subr.mxu0 0.0
      %2104 = vmatpush2.msra.mxu0 0.0
      %2105 = vmatprep.subr.mxu0 0.0
      %2106 = vmatpush2.msra.mxu0 0.0
      %2107 = vmatprep.subr.mxu0 0.0
      %2108 = vmatpush2.msra.mxu0 0.0
      %2109 = vmatprep.subr.mxu0 0.0
      %2110 = vmatpush2.msra.mxu0 0.0
      %2111 = vmatprep.subr.mxu0 0.0
      %2112 = vmatpush2.msra.mxu0 0.0
      %2113 = vmatprep.subr.mxu0 0.0
      %2114 = vmatpush2.msra.mxu0 0.0
      %2115 = vmatprep.subr.mxu0 0.0
      %2116 = vmatpush2.msra.mxu0 0.0
      %2117 = vmatprep.subr.mxu0 0.0
      %2118 = vmatpush2.msra.mxu0 0.0
      %2119 = vmatprep.subr.mxu0 0.0
      %2120 = vmatpush2.msra.mxu0 0.0
      %2121 = vmatprep.subr.mxu0 0.0
      %2122 = vmatpush2.msra.mxu0 0.0
      %2123 = vmatprep.mubr.f32.mxu0 0.0
      %2124 = vmatmul.mubr.f32.gmra.mxu0 %v2048
      %v2125 = vpop.f32.mrf.mxu0
      %v2126 = vadd.f32 %v2029, %v2125
      %v2127 = vpop.f32.mrf.mxu0
      %2128 = vmatprep.mubr.f32.mxu0 0.0
      %2129 = vmatmul.mubr.f32.gmra.mxu0 %v2051
      %v2130 = vpop.f32.mrf.mxu0
      %v2131 = vadd.f32 %v2034, %v2130
      %v2132 = vpop.f32.mrf.mxu0
      %2133 = vmatprep.mubr.f32.mxu0 0.0
      %2134 = vmatmul.mubr.f32.gmra.mxu0 %v2054
      %v2135 = vpop.f32.mrf.mxu0
      %v2136 = vadd.f32 %v2039, %v2135
      %v2137 = vpop.f32.mrf.mxu0
      %2138 = vmatprep.mubr.f32.mxu0 0.0
      %2139 = vmatmul.mubr.f32.gmra.mxu0 %v2057
      %v2140 = vpop.f32.mrf.mxu0
      %v2141 = vadd.f32 %v2044, %v2140
      %v2142 = vpop.f32.mrf.mxu0
      %2143 = vdwg.mxu0
      %v2144 = vadd.f32 %v2126, %v583
      %v2145 = vadd.f32 %v2131, %v583
      %v2146 = vadd.f32 %v2136, %v583
      %v2147 = vadd.f32 %v2141, %v583
      %s2148 = scalar_lea.vmem %s256, 160
      %2149 = vst [vmem:[%s2148] sm:$0xff] %v2144
      %2150 = vst [vmem:[%s2148 + $0x8] sm:$0xff] %v2145
      %2151 = vst [vmem:[%s2148 + $0x10] sm:$0xff] %v2146
      %2152 = vst [vmem:[%s2148 + $0x18] sm:$0x1] %v2147
      %s2153 = scalar_lea.vmem %s242, 192
      %v2154 = vld [vmem:[%s2153] sm:$0xff]
      %v2155 = vld [vmem:[%s2153 + $0x8] sm:$0xff]
      %v2156 = vld [vmem:[%s2153 + $0x10] sm:$0xff]
      %v2157 = vld [vmem:[%s2153 + $0x18] sm:$0x1]
      %s2158 = scalar_lea.vmem %s249, 192
      %v2159 = vld [vmem:[%s2158] sm:$0xff]
      %v2160 = vld [vmem:[%s2158 + $0x8] sm:$0xff]
      %v2161 = vld [vmem:[%s2158 + $0x10] sm:$0xff]
      %v2162 = vld [vmem:[%s2158 + $0x18] sm:$0x1]
      %v2164 = vsel %vm283, %v2159, 0
      %v2167 = vsel %vm283, %v2160, 0
      %v2170 = vsel %vm283, %v2161, 0
      %v2173 = vsel %vm283, %v2162, 0
      %v2176 = vsel %vm296, %v2157, 0
      %2178 = vmatprep.subr.mxu0 0.0
      %2179 = vmatpush1.msra.mxu0 0.0
      %2180 = vmatprep.subr.mxu0 0.0
      %2181 = vmatpush1.msra.mxu0 0.0
      %2182 = vmatprep.subr.mxu0 0.0
      %2183 = vmatpush1.msra.mxu0 0.0
      %2184 = vmatprep.subr.mxu0 0.0
      %2185 = vmatpush1.msra.mxu0 0.0
      %2186 = vmatprep.subr.mxu0 0.0
      %2187 = vmatpush1.msra.mxu0 0.0
      %2188 = vmatprep.subr.mxu0 0.0
      %2189 = vmatpush1.msra.mxu0 0.0
      %2190 = vmatprep.subr.mxu0 0.0
      %2191 = vmatpush1.msra.mxu0 0.0
      %2192 = vmatprep.subr.mxu0 0.0
      %2193 = vmatpush1.msra.mxu0 0.0
      %2194 = vmatprep.subr.mxu0 0.0
      %2195 = vmatpush1.msra.mxu0 0.0
      %2196 = vmatprep.subr.mxu0 0.0
      %2197 = vmatpush1.msra.mxu0 0.0
      %2198 = vmatprep.subr.mxu0 0.0
      %2199 = vmatpush1.msra.mxu0 0.0
      %2200 = vmatprep.subr.mxu0 0.0
      %2201 = vmatpush1.msra.mxu0 0.0
      %2202 = vmatprep.subr.mxu0 0.0
      %2203 = vmatpush1.msra.mxu0 %v2176
      %2204 = vmatprep.subr.mxu0 0.0
      %2205 = vmatpush1.msra.mxu0 %v2156
      %2206 = vmatprep.subr.mxu0 0.0
      %2207 = vmatpush1.msra.mxu0 %v2155
      %2208 = vmatprep.subr.mxu0 0.0
      %2209 = vmatpush1.msra.mxu0 %v2154
      %2210 = vmatprep.subr.mxu0 0.0
      %2211 = vmatpush2.msra.mxu0 0.0
      %2212 = vmatprep.subr.mxu0 0.0
      %2213 = vmatpush2.msra.mxu0 0.0
      %2214 = vmatprep.subr.mxu0 0.0
      %2215 = vmatpush2.msra.mxu0 0.0
      %2216 = vmatprep.subr.mxu0 0.0
      %2217 = vmatpush2.msra.mxu0 0.0
      %2218 = vmatprep.subr.mxu0 0.0
      %2219 = vmatpush2.msra.mxu0 0.0
      %2220 = vmatprep.subr.mxu0 0.0
      %2221 = vmatpush2.msra.mxu0 0.0
      %2222 = vmatprep.subr.mxu0 0.0
      %2223 = vmatpush2.msra.mxu0 0.0
      %2224 = vmatprep.subr.mxu0 0.0
      %2225 = vmatpush2.msra.mxu0 0.0
      %2226 = vmatprep.subr.mxu0 0.0
      %2227 = vmatpush2.msra.mxu0 0.0
      %2228 = vmatprep.subr.mxu0 0.0
      %2229 = vmatpush2.msra.mxu0 0.0
      %2230 = vmatprep.subr.mxu0 0.0
      %2231 = vmatpush2.msra.mxu0 0.0
      %2232 = vmatprep.subr.mxu0 0.0
      %2233 = vmatpush2.msra.mxu0 0.0
      %2234 = vmatprep.subr.mxu0 0.0
      %2235 = vmatpush2.msra.mxu0 0.0
      %2236 = vmatprep.subr.mxu0 0.0
      %2237 = vmatpush2.msra.mxu0 0.0
      %2238 = vmatprep.subr.mxu0 0.0
      %2239 = vmatpush2.msra.mxu0 0.0
      %2240 = vmatprep.subr.mxu0 0.0
      %2241 = vmatpush2.msra.mxu0 0.0
      %2242 = vmatprep.mubr.f32.mxu0 0.0
      %2243 = vmatmul.mubr.f32.gmra.mxu0 %v2164
      %v2244 = vpop.f32.mrf.mxu0
      %v2245 = vadd.f32 0.0, %v2244
      %v2246 = vpop.f32.mrf.mxu0
      %2247 = vmatprep.mubr.f32.mxu0 0.0
      %2248 = vmatmul.mubr.f32.gmra.mxu0 %v2167
      %v2249 = vpop.f32.mrf.mxu0
      %v2250 = vadd.f32 0.0, %v2249
      %v2251 = vpop.f32.mrf.mxu0
      %2252 = vmatprep.mubr.f32.mxu0 0.0
      %2253 = vmatmul.mubr.f32.gmra.mxu0 %v2170
      %v2254 = vpop.f32.mrf.mxu0
      %v2255 = vadd.f32 0.0, %v2254
      %v2256 = vpop.f32.mrf.mxu0
      %2257 = vmatprep.mubr.f32.mxu0 0.0
      %2258 = vmatmul.mubr.f32.gmra.mxu0 %v2173
      %v2259 = vpop.f32.mrf.mxu0
      %v2260 = vadd.f32 0.0, %v2259
      %v2261 = vpop.f32.mrf.mxu0
      %2262 = vdwg.mxu0
      %v2264 = vsel %vm385, %v2154, 0
      %v2267 = vsel %vm385, %v2155, 0
      %v2270 = vsel %vm385, %v2156, 0
      %v2272 = vsel %vm385, %v2157, 0
      %2274 = vmatprep.subr.mxu0 0.0
      %2275 = vmatpush1.msra.mxu0 0.0
      %2276 = vmatprep.subr.mxu0 0.0
      %2277 = vmatpush1.msra.mxu0 0.0
      %2278 = vmatprep.subr.mxu0 0.0
      %2279 = vmatpush1.msra.mxu0 0.0
      %2280 = vmatprep.subr.mxu0 0.0
      %2281 = vmatpush1.msra.mxu0 0.0
      %2282 = vmatprep.subr.mxu0 0.0
      %2283 = vmatpush1.msra.mxu0 0.0
      %2284 = vmatprep.subr.mxu0 0.0
      %2285 = vmatpush1.msra.mxu0 0.0
      %2286 = vmatprep.subr.mxu0 0.0
      %2287 = vmatpush1.msra.mxu0 0.0
      %2288 = vmatprep.subr.mxu0 0.0
      %2289 = vmatpush1.msra.mxu0 0.0
      %2290 = vmatprep.subr.mxu0 0.0
      %2291 = vmatpush1.msra.mxu0 %v273
      %2292 = vmatprep.subr.mxu0 0.0
      %2293 = vmatpush1.msra.mxu0 %v272
      %2294 = vmatprep.subr.mxu0 0.0
      %2295 = vmatpush1.msra.mxu0 %v271
      %2296 = vmatprep.subr.mxu0 0.0
      %2297 = vmatpush1.msra.mxu0 %v270
      %2298 = vmatprep.subr.mxu0 0.0
      %2299 = vmatpush1.msra.mxu0 %v269
      %2300 = vmatprep.subr.mxu0 0.0
      %2301 = vmatpush1.msra.mxu0 %v268
      %2302 = vmatprep.subr.mxu0 0.0
      %2303 = vmatpush1.msra.mxu0 %v267
      %2304 = vmatprep.subr.mxu0 0.0
      %2305 = vmatpush1.msra.mxu0 %v266
      %2306 = vmatprep.subr.mxu0 0.0
      %2307 = vmatpush2.msra.mxu0 0.0
      %2308 = vmatprep.subr.mxu0 0.0
      %2309 = vmatpush2.msra.mxu0 0.0
      %2310 = vmatprep.subr.mxu0 0.0
      %2311 = vmatpush2.msra.mxu0 0.0
      %2312 = vmatprep.subr.mxu0 0.0
      %2313 = vmatpush2.msra.mxu0 0.0
      %2314 = vmatprep.subr.mxu0 0.0
      %2315 = vmatpush2.msra.mxu0 0.0
      %2316 = vmatprep.subr.mxu0 0.0
      %2317 = vmatpush2.msra.mxu0 0.0
      %2318 = vmatprep.subr.mxu0 0.0
      %2319 = vmatpush2.msra.mxu0 0.0
      %2320 = vmatprep.subr.mxu0 0.0
      %2321 = vmatpush2.msra.mxu0 0.0
      %2322 = vmatprep.subr.mxu0 0.0
      %2323 = vmatpush2.msra.mxu0 0.0
      %2324 = vmatprep.subr.mxu0 0.0
      %2325 = vmatpush2.msra.mxu0 0.0
      %2326 = vmatprep.subr.mxu0 0.0
      %2327 = vmatpush2.msra.mxu0 0.0
      %2328 = vmatprep.subr.mxu0 0.0
      %2329 = vmatpush2.msra.mxu0 0.0
      %2330 = vmatprep.subr.mxu0 0.0
      %2331 = vmatpush2.msra.mxu0 0.0
      %2332 = vmatprep.subr.mxu0 0.0
      %2333 = vmatpush2.msra.mxu0 0.0
      %2334 = vmatprep.subr.mxu0 0.0
      %2335 = vmatpush2.msra.mxu0 0.0
      %2336 = vmatprep.subr.mxu0 0.0
      %2337 = vmatpush2.msra.mxu0 0.0
      %2338 = vmatprep.mubr.f32.mxu0 0.0
      %2339 = vmatmul.mubr.f32.gmra.mxu0 %v2264
      %v2340 = vpop.f32.mrf.mxu0
      %v2341 = vadd.f32 0.0, %v2340
      %v2342 = vpop.f32.mrf.mxu0
      %2343 = vmatprep.mubr.f32.mxu0 0.0
      %2344 = vmatmul.mubr.f32.gmra.mxu0 %v2267
      %v2345 = vpop.f32.mrf.mxu0
      %v2346 = vadd.f32 0.0, %v2345
      %v2347 = vpop.f32.mrf.mxu0
      %2348 = vmatprep.mubr.f32.mxu0 0.0
      %2349 = vmatmul.mubr.f32.gmra.mxu0 %v2270
      %v2350 = vpop.f32.mrf.mxu0
      %v2351 = vadd.f32 0.0, %v2350
      %v2352 = vpop.f32.mrf.mxu0
      %2353 = vmatprep.mubr.f32.mxu0 0.0
      %2354 = vmatmul.mubr.f32.gmra.mxu0 %v2272
      %v2355 = vpop.f32.mrf.mxu0
      %v2356 = vadd.f32 0.0, %v2355
      %v2357 = vpop.f32.mrf.mxu0
      %2358 = vdwg.mxu0
      %v2360 = vsel %vm385, %v2245, 0
      %v2363 = vsel %vm385, %v2250, 0
      %v2366 = vsel %vm385, %v2255, 0
      %v2369 = vsel %vm385, %v2260, 0
      %2371 = vmatprep.subr.mxu0 0.0
      %2372 = vmatpush1.msra.mxu0 0.0
      %2373 = vmatprep.subr.mxu0 0.0
      %2374 = vmatpush1.msra.mxu0 0.0
      %2375 = vmatprep.subr.mxu0 0.0
      %2376 = vmatpush1.msra.mxu0 0.0
      %2377 = vmatprep.subr.mxu0 0.0
      %2378 = vmatpush1.msra.mxu0 0.0
      %2379 = vmatprep.subr.mxu0 0.0
      %2380 = vmatpush1.msra.mxu0 0.0
      %2381 = vmatprep.subr.mxu0 0.0
      %2382 = vmatpush1.msra.mxu0 0.0
      %2383 = vmatprep.subr.mxu0 0.0
      %2384 = vmatpush1.msra.mxu0 0.0
      %2385 = vmatprep.subr.mxu0 0.0
      %2386 = vmatpush1.msra.mxu0 0.0
      %2387 = vmatprep.subr.mxu0 0.0
      %2388 = vmatpush1.msra.mxu0 %v265
      %2389 = vmatprep.subr.mxu0 0.0
      %2390 = vmatpush1.msra.mxu0 %v264
      %2391 = vmatprep.subr.mxu0 0.0
      %2392 = vmatpush1.msra.mxu0 %v263
      %2393 = vmatprep.subr.mxu0 0.0
      %2394 = vmatpush1.msra.mxu0 %v262
      %2395 = vmatprep.subr.mxu0 0.0
      %2396 = vmatpush1.msra.mxu0 %v261
      %2397 = vmatprep.subr.mxu0 0.0
      %2398 = vmatpush1.msra.mxu0 %v260
      %2399 = vmatprep.subr.mxu0 0.0
      %2400 = vmatpush1.msra.mxu0 %v259
      %2401 = vmatprep.subr.mxu0 0.0
      %2402 = vmatpush1.msra.mxu0 %v258
      %2403 = vmatprep.subr.mxu0 0.0
      %2404 = vmatpush2.msra.mxu0 0.0
      %2405 = vmatprep.subr.mxu0 0.0
      %2406 = vmatpush2.msra.mxu0 0.0
      %2407 = vmatprep.subr.mxu0 0.0
      %2408 = vmatpush2.msra.mxu0 0.0
      %2409 = vmatprep.subr.mxu0 0.0
      %2410 = vmatpush2.msra.mxu0 0.0
      %2411 = vmatprep.subr.mxu0 0.0
      %2412 = vmatpush2.msra.mxu0 0.0
      %2413 = vmatprep.subr.mxu0 0.0
      %2414 = vmatpush2.msra.mxu0 0.0
      %2415 = vmatprep.subr.mxu0 0.0
      %2416 = vmatpush2.msra.mxu0 0.0
      %2417 = vmatprep.subr.mxu0 0.0
      %2418 = vmatpush2.msra.mxu0 0.0
      %2419 = vmatprep.subr.mxu0 0.0
      %2420 = vmatpush2.msra.mxu0 0.0
      %2421 = vmatprep.subr.mxu0 0.0
      %2422 = vmatpush2.msra.mxu0 0.0
      %2423 = vmatprep.subr.mxu0 0.0
      %2424 = vmatpush2.msra.mxu0 0.0
      %2425 = vmatprep.subr.mxu0 0.0
      %2426 = vmatpush2.msra.mxu0 0.0
      %2427 = vmatprep.subr.mxu0 0.0
      %2428 = vmatpush2.msra.mxu0 0.0
      %2429 = vmatprep.subr.mxu0 0.0
      %2430 = vmatpush2.msra.mxu0 0.0
      %2431 = vmatprep.subr.mxu0 0.0
      %2432 = vmatpush2.msra.mxu0 0.0
      %2433 = vmatprep.subr.mxu0 0.0
      %2434 = vmatpush2.msra.mxu0 0.0
      %2435 = vmatprep.mubr.f32.mxu0 0.0
      %2436 = vmatmul.mubr.f32.gmra.mxu0 %v2360
      %v2437 = vpop.f32.mrf.mxu0
      %v2438 = vadd.f32 %v2341, %v2437
      %v2439 = vpop.f32.mrf.mxu0
      %2440 = vmatprep.mubr.f32.mxu0 0.0
      %2441 = vmatmul.mubr.f32.gmra.mxu0 %v2363
      %v2442 = vpop.f32.mrf.mxu0
      %v2443 = vadd.f32 %v2346, %v2442
      %v2444 = vpop.f32.mrf.mxu0
      %2445 = vmatprep.mubr.f32.mxu0 0.0
      %2446 = vmatmul.mubr.f32.gmra.mxu0 %v2366
      %v2447 = vpop.f32.mrf.mxu0
      %v2448 = vadd.f32 %v2351, %v2447
      %v2449 = vpop.f32.mrf.mxu0
      %2450 = vmatprep.mubr.f32.mxu0 0.0
      %2451 = vmatmul.mubr.f32.gmra.mxu0 %v2369
      %v2452 = vpop.f32.mrf.mxu0
      %v2453 = vadd.f32 %v2356, %v2452
      %v2454 = vpop.f32.mrf.mxu0
      %2455 = vdwg.mxu0
      %v2456 = vadd.f32 %v2438, %v583
      %v2457 = vadd.f32 %v2443, %v583
      %v2458 = vadd.f32 %v2448, %v583
      %v2459 = vadd.f32 %v2453, %v583
      %s2460 = scalar_lea.vmem %s256, 192
      %2461 = vst [vmem:[%s2460] sm:$0xff] %v2456
      %2462 = vst [vmem:[%s2460 + $0x8] sm:$0xff] %v2457
      %2463 = vst [vmem:[%s2460 + $0x10] sm:$0xff] %v2458
      %2464 = vst [vmem:[%s2460 + $0x18] sm:$0x1] %v2459
      %s2465 = scalar_lea.vmem %s242, 224
      %v2466 = vld [vmem:[%s2465] sm:$0xff]
      %v2467 = vld [vmem:[%s2465 + $0x8] sm:$0xff]
      %v2468 = vld [vmem:[%s2465 + $0x10] sm:$0xff]
      %v2469 = vld [vmem:[%s2465 + $0x18] sm:$0x1]
      %s2470 = scalar_lea.vmem %s249, 224
      %v2471 = vld [vmem:[%s2470] sm:$0xff]
      %v2472 = vld [vmem:[%s2470 + $0x8] sm:$0xff]
      %v2473 = vld [vmem:[%s2470 + $0x10] sm:$0xff]
      %v2474 = vld [vmem:[%s2470 + $0x18] sm:$0x1]
      %v2476 = vsel %vm283, %v2471, 0
      %v2479 = vsel %vm283, %v2472, 0
      %v2482 = vsel %vm283, %v2473, 0
      %v2485 = vsel %vm283, %v2474, 0
      %v2488 = vsel %vm296, %v2469, 0
      %2490 = vmatprep.subr.mxu0 0.0
      %2491 = vmatpush1.msra.mxu0 0.0
      %2492 = vmatprep.subr.mxu0 0.0
      %2493 = vmatpush1.msra.mxu0 0.0
      %2494 = vmatprep.subr.mxu0 0.0
      %2495 = vmatpush1.msra.mxu0 0.0
      %2496 = vmatprep.subr.mxu0 0.0
      %2497 = vmatpush1.msra.mxu0 0.0
      %2498 = vmatprep.subr.mxu0 0.0
      %2499 = vmatpush1.msra.mxu0 0.0
      %2500 = vmatprep.subr.mxu0 0.0
      %2501 = vmatpush1.msra.mxu0 0.0
      %2502 = vmatprep.subr.mxu0 0.0
      %2503 = vmatpush1.msra.mxu0 0.0
      %2504 = vmatprep.subr.mxu0 0.0
      %2505 = vmatpush1.msra.mxu0 0.0
      %2506 = vmatprep.subr.mxu0 0.0
      %2507 = vmatpush1.msra.mxu0 0.0
      %2508 = vmatprep.subr.mxu0 0.0
      %2509 = vmatpush1.msra.mxu0 0.0
      %2510 = vmatprep.subr.mxu0 0.0
      %2511 = vmatpush1.msra.mxu0 0.0
      %2512 = vmatprep.subr.mxu0 0.0
      %2513 = vmatpush1.msra.mxu0 0.0
      %2514 = vmatprep.subr.mxu0 0.0
      %2515 = vmatpush1.msra.mxu0 %v2488
      %2516 = vmatprep.subr.mxu0 0.0
      %2517 = vmatpush1.msra.mxu0 %v2468
      %2518 = vmatprep.subr.mxu0 0.0
      %2519 = vmatpush1.msra.mxu0 %v2467
      %2520 = vmatprep.subr.mxu0 0.0
      %2521 = vmatpush1.msra.mxu0 %v2466
      %2522 = vmatprep.subr.mxu0 0.0
      %2523 = vmatpush2.msra.mxu0 0.0
      %2524 = vmatprep.subr.mxu0 0.0
      %2525 = vmatpush2.msra.mxu0 0.0
      %2526 = vmatprep.subr.mxu0 0.0
      %2527 = vmatpush2.msra.mxu0 0.0
      %2528 = vmatprep.subr.mxu0 0.0
      %2529 = vmatpush2.msra.mxu0 0.0
      %2530 = vmatprep.subr.mxu0 0.0
      %2531 = vmatpush2.msra.mxu0 0.0
      %2532 = vmatprep.subr.mxu0 0.0
      %2533 = vmatpush2.msra.mxu0 0.0
      %2534 = vmatprep.subr.mxu0 0.0
      %2535 = vmatpush2.msra.mxu0 0.0
      %2536 = vmatprep.subr.mxu0 0.0
      %2537 = vmatpush2.msra.mxu0 0.0
      %2538 = vmatprep.subr.mxu0 0.0
      %2539 = vmatpush2.msra.mxu0 0.0
      %2540 = vmatprep.subr.mxu0 0.0
      %2541 = vmatpush2.msra.mxu0 0.0
      %2542 = vmatprep.subr.mxu0 0.0
      %2543 = vmatpush2.msra.mxu0 0.0
      %2544 = vmatprep.subr.mxu0 0.0
      %2545 = vmatpush2.msra.mxu0 0.0
      %2546 = vmatprep.subr.mxu0 0.0
      %2547 = vmatpush2.msra.mxu0 0.0
      %2548 = vmatprep.subr.mxu0 0.0
      %2549 = vmatpush2.msra.mxu0 0.0
      %2550 = vmatprep.subr.mxu0 0.0
      %2551 = vmatpush2.msra.mxu0 0.0
      %2552 = vmatprep.subr.mxu0 0.0
      %2553 = vmatpush2.msra.mxu0 0.0
      %2554 = vmatprep.mubr.f32.mxu0 0.0
      %2555 = vmatmul.mubr.f32.gmra.mxu0 %v2476
      %v2556 = vpop.f32.mrf.mxu0
      %v2557 = vadd.f32 0.0, %v2556
      %v2558 = vpop.f32.mrf.mxu0
      %2559 = vmatprep.mubr.f32.mxu0 0.0
      %2560 = vmatmul.mubr.f32.gmra.mxu0 %v2479
      %v2561 = vpop.f32.mrf.mxu0
      %v2562 = vadd.f32 0.0, %v2561
      %v2563 = vpop.f32.mrf.mxu0
      %2564 = vmatprep.mubr.f32.mxu0 0.0
      %2565 = vmatmul.mubr.f32.gmra.mxu0 %v2482
      %v2566 = vpop.f32.mrf.mxu0
      %v2567 = vadd.f32 0.0, %v2566
      %v2568 = vpop.f32.mrf.mxu0
      %2569 = vmatprep.mubr.f32.mxu0 0.0
      %2570 = vmatmul.mubr.f32.gmra.mxu0 %v2485
      %v2571 = vpop.f32.mrf.mxu0
      %v2572 = vadd.f32 0.0, %v2571
      %v2573 = vpop.f32.mrf.mxu0
      %2574 = vdwg.mxu0
      %v2576 = vsel %vm385, %v2466, 0
      %v2579 = vsel %vm385, %v2467, 0
      %v2582 = vsel %vm385, %v2468, 0
      %v2584 = vsel %vm385, %v2469, 0
      %2586 = vmatprep.subr.mxu0 0.0
      %2587 = vmatpush1.msra.mxu0 0.0
      %2588 = vmatprep.subr.mxu0 0.0
      %2589 = vmatpush1.msra.mxu0 0.0
      %2590 = vmatprep.subr.mxu0 0.0
      %2591 = vmatpush1.msra.mxu0 0.0
      %2592 = vmatprep.subr.mxu0 0.0
      %2593 = vmatpush1.msra.mxu0 0.0
      %2594 = vmatprep.subr.mxu0 0.0
      %2595 = vmatpush1.msra.mxu0 0.0
      %2596 = vmatprep.subr.mxu0 0.0
      %2597 = vmatpush1.msra.mxu0 0.0
      %2598 = vmatprep.subr.mxu0 0.0
      %2599 = vmatpush1.msra.mxu0 0.0
      %2600 = vmatprep.subr.mxu0 0.0
      %2601 = vmatpush1.msra.mxu0 0.0
      %2602 = vmatprep.subr.mxu0 0.0
      %2603 = vmatpush1.msra.mxu0 %v273
      %2604 = vmatprep.subr.mxu0 0.0
      %2605 = vmatpush1.msra.mxu0 %v272
      %2606 = vmatprep.subr.mxu0 0.0
      %2607 = vmatpush1.msra.mxu0 %v271
      %2608 = vmatprep.subr.mxu0 0.0
      %2609 = vmatpush1.msra.mxu0 %v270
      %2610 = vmatprep.subr.mxu0 0.0
      %2611 = vmatpush1.msra.mxu0 %v269
      %2612 = vmatprep.subr.mxu0 0.0
      %2613 = vmatpush1.msra.mxu0 %v268
      %2614 = vmatprep.subr.mxu0 0.0
      %2615 = vmatpush1.msra.mxu0 %v267
      %2616 = vmatprep.subr.mxu0 0.0
      %2617 = vmatpush1.msra.mxu0 %v266
      %2618 = vmatprep.subr.mxu0 0.0
      %2619 = vmatpush2.msra.mxu0 0.0
      %2620 = vmatprep.subr.mxu0 0.0
      %2621 = vmatpush2.msra.mxu0 0.0
      %2622 = vmatprep.subr.mxu0 0.0
      %2623 = vmatpush2.msra.mxu0 0.0
      %2624 = vmatprep.subr.mxu0 0.0
      %2625 = vmatpush2.msra.mxu0 0.0
      %2626 = vmatprep.subr.mxu0 0.0
      %2627 = vmatpush2.msra.mxu0 0.0
      %2628 = vmatprep.subr.mxu0 0.0
      %2629 = vmatpush2.msra.mxu0 0.0
      %2630 = vmatprep.subr.mxu0 0.0
      %2631 = vmatpush2.msra.mxu0 0.0
      %2632 = vmatprep.subr.mxu0 0.0
      %2633 = vmatpush2.msra.mxu0 0.0
      %2634 = vmatprep.subr.mxu0 0.0
      %2635 = vmatpush2.msra.mxu0 0.0
      %2636 = vmatprep.subr.mxu0 0.0
      %2637 = vmatpush2.msra.mxu0 0.0
      %2638 = vmatprep.subr.mxu0 0.0
      %2639 = vmatpush2.msra.mxu0 0.0
      %2640 = vmatprep.subr.mxu0 0.0
      %2641 = vmatpush2.msra.mxu0 0.0
      %2642 = vmatprep.subr.mxu0 0.0
      %2643 = vmatpush2.msra.mxu0 0.0
      %2644 = vmatprep.subr.mxu0 0.0
      %2645 = vmatpush2.msra.mxu0 0.0
      %2646 = vmatprep.subr.mxu0 0.0
      %2647 = vmatpush2.msra.mxu0 0.0
      %2648 = vmatprep.subr.mxu0 0.0
      %2649 = vmatpush2.msra.mxu0 0.0
      %2650 = vmatprep.mubr.f32.mxu0 0.0
      %2651 = vmatmul.mubr.f32.gmra.mxu0 %v2576
      %v2652 = vpop.f32.mrf.mxu0
      %v2653 = vadd.f32 0.0, %v2652
      %v2654 = vpop.f32.mrf.mxu0
      %2655 = vmatprep.mubr.f32.mxu0 0.0
      %2656 = vmatmul.mubr.f32.gmra.mxu0 %v2579
      %v2657 = vpop.f32.mrf.mxu0
      %v2658 = vadd.f32 0.0, %v2657
      %v2659 = vpop.f32.mrf.mxu0
      %2660 = vmatprep.mubr.f32.mxu0 0.0
      %2661 = vmatmul.mubr.f32.gmra.mxu0 %v2582
      %v2662 = vpop.f32.mrf.mxu0
      %v2663 = vadd.f32 0.0, %v2662
      %v2664 = vpop.f32.mrf.mxu0
      %2665 = vmatprep.mubr.f32.mxu0 0.0
      %2666 = vmatmul.mubr.f32.gmra.mxu0 %v2584
      %v2667 = vpop.f32.mrf.mxu0
      %v2668 = vadd.f32 0.0, %v2667
      %v2669 = vpop.f32.mrf.mxu0
      %2670 = vdwg.mxu0
      %v2672 = vsel %vm385, %v2557, 0
      %v2675 = vsel %vm385, %v2562, 0
      %v2678 = vsel %vm385, %v2567, 0
      %v2681 = vsel %vm385, %v2572, 0
      %2683 = vmatprep.subr.mxu0 0.0
      %2684 = vmatpush1.msra.mxu0 0.0
      %2685 = vmatprep.subr.mxu0 0.0
      %2686 = vmatpush1.msra.mxu0 0.0
      %2687 = vmatprep.subr.mxu0 0.0
      %2688 = vmatpush1.msra.mxu0 0.0
      %2689 = vmatprep.subr.mxu0 0.0
      %2690 = vmatpush1.msra.mxu0 0.0
      %2691 = vmatprep.subr.mxu0 0.0
      %2692 = vmatpush1.msra.mxu0 0.0
      %2693 = vmatprep.subr.mxu0 0.0
      %2694 = vmatpush1.msra.mxu0 0.0
      %2695 = vmatprep.subr.mxu0 0.0
      %2696 = vmatpush1.msra.mxu0 0.0
      %2697 = vmatprep.subr.mxu0 0.0
      %2698 = vmatpush1.msra.mxu0 0.0
      %2699 = vmatprep.subr.mxu0 0.0
      %2700 = vmatpush1.msra.mxu0 %v265
      %2701 = vmatprep.subr.mxu0 0.0
      %2702 = vmatpush1.msra.mxu0 %v264
      %2703 = vmatprep.subr.mxu0 0.0
      %2704 = vmatpush1.msra.mxu0 %v263
      %2705 = vmatprep.subr.mxu0 0.0
      %2706 = vmatpush1.msra.mxu0 %v262
      %2707 = vmatprep.subr.mxu0 0.0
      %2708 = vmatpush1.msra.mxu0 %v261
      %2709 = vmatprep.subr.mxu0 0.0
      %2710 = vmatpush1.msra.mxu0 %v260
      %2711 = vmatprep.subr.mxu0 0.0
      %2712 = vmatpush1.msra.mxu0 %v259
      %2713 = vmatprep.subr.mxu0 0.0
      %2714 = vmatpush1.msra.mxu0 %v258
      %2715 = vmatprep.subr.mxu0 0.0
      %2716 = vmatpush2.msra.mxu0 0.0
      %2717 = vmatprep.subr.mxu0 0.0
      %2718 = vmatpush2.msra.mxu0 0.0
      %2719 = vmatprep.subr.mxu0 0.0
      %2720 = vmatpush2.msra.mxu0 0.0
      %2721 = vmatprep.subr.mxu0 0.0
      %2722 = vmatpush2.msra.mxu0 0.0
      %2723 = vmatprep.subr.mxu0 0.0
      %2724 = vmatpush2.msra.mxu0 0.0
      %2725 = vmatprep.subr.mxu0 0.0
      %2726 = vmatpush2.msra.mxu0 0.0
      %2727 = vmatprep.subr.mxu0 0.0
      %2728 = vmatpush2.msra.mxu0 0.0
      %2729 = vmatprep.subr.mxu0 0.0
      %2730 = vmatpush2.msra.mxu0 0.0
      %2731 = vmatprep.subr.mxu0 0.0
      %2732 = vmatpush2.msra.mxu0 0.0
      %2733 = vmatprep.subr.mxu0 0.0
      %2734 = vmatpush2.msra.mxu0 0.0
      %2735 = vmatprep.subr.mxu0 0.0
      %2736 = vmatpush2.msra.mxu0 0.0
      %2737 = vmatprep.subr.mxu0 0.0
      %2738 = vmatpush2.msra.mxu0 0.0
      %2739 = vmatprep.subr.mxu0 0.0
      %2740 = vmatpush2.msra.mxu0 0.0
      %2741 = vmatprep.subr.mxu0 0.0
      %2742 = vmatpush2.msra.mxu0 0.0
      %2743 = vmatprep.subr.mxu0 0.0
      %2744 = vmatpush2.msra.mxu0 0.0
      %2745 = vmatprep.subr.mxu0 0.0
      %2746 = vmatpush2.msra.mxu0 0.0
      %2747 = vmatprep.mubr.f32.mxu0 0.0
      %2748 = vmatmul.mubr.f32.gmra.mxu0 %v2672
      %v2749 = vpop.f32.mrf.mxu0
      %v2750 = vadd.f32 %v2653, %v2749
      %v2751 = vpop.f32.mrf.mxu0
      %2752 = vmatprep.mubr.f32.mxu0 0.0
      %2753 = vmatmul.mubr.f32.gmra.mxu0 %v2675
      %v2754 = vpop.f32.mrf.mxu0
      %v2755 = vadd.f32 %v2658, %v2754
      %v2756 = vpop.f32.mrf.mxu0
      %2757 = vmatprep.mubr.f32.mxu0 0.0
      %2758 = vmatmul.mubr.f32.gmra.mxu0 %v2678
      %v2759 = vpop.f32.mrf.mxu0
      %v2760 = vadd.f32 %v2663, %v2759
      %v2761 = vpop.f32.mrf.mxu0
      %2762 = vmatprep.mubr.f32.mxu0 0.0
      %2763 = vmatmul.mubr.f32.gmra.mxu0 %v2681
      %v2764 = vpop.f32.mrf.mxu0
      %v2765 = vadd.f32 %v2668, %v2764
      %v2766 = vpop.f32.mrf.mxu0
      %2767 = vdwg.mxu0
      %v2768 = vadd.f32 %v2750, %v583
      %v2769 = vadd.f32 %v2755, %v583
      %v2770 = vadd.f32 %v2760, %v583
      %v2771 = vadd.f32 %v2765, %v583
      %s2772 = scalar_lea.vmem %s256, 224
      %2773 = vst [vmem:[%s2772] sm:$0xff] %v2768
      %2774 = vst [vmem:[%s2772 + $0x8] sm:$0xff] %v2769
      %2775 = vst [vmem:[%s2772 + $0x10] sm:$0xff] %v2770
      %2776 = vst [vmem:[%s2772 + $0x18] sm:$0x1] %v2771
      %s2777 = smul.u32 8, %s16
      %p2778 = scmp.lt.s32.totalorder %s2777, 15
      %s2779 = scalar_select %p2778, %s2777, 15
      %s2780 = smul.addr %s2779, 4
      %s2781 = smul.addr %s2780, 8
      %s2782 = scalar_lea.vmem %s5, %s2781
      // Predicated region
      $region41: #{gcn_spa_forward.2} parent=39 // pred_check
        %p2783 = pneg %p149
      $region42: #{gcn_spa_forward.2} parent=39 // pred_check_branch
        %2785 = sbr.rel (%p2783) target = $region44
      $region43: #{gcn_spa_forward.2} parent=39 // pred_region
        %s2786 = smul.u32 8, %s16
      $region44: #{gcn_spa_forward.2} parent=39 // pred_fallthru
        _
    $region40: #{gcn_spa_forward.2} parent=5 // pred_fallthru
      _
    %p2787 = scmp.le.s32.totalorder 2, %s11
    // Predicated region
    $region45: #{gcn_spa_forward.2} parent=5 // pred_check
      %p2788 = pneg %p2787
    $region46: #{gcn_spa_forward.2} parent=5 // pred_check_branch
      %2790 = sbr.rel (%p2788) target = $region48
    $region47: #{gcn_spa_forward.2} parent=5 // pred_region
      %s2791 = ssub.s32 %s11, 2
      // Predicated region
      $region49: #{gcn_spa_forward.2} parent=47 // pred_check
        %p2792 = pneg %p155
      $region50: #{gcn_spa_forward.2} parent=47 // pred_check_branch
        %2794 = sbr.rel (%p2792) target = $region52
      $region51: #{gcn_spa_forward.2} parent=47 // pred_region
        %s2795 = smul.u32 8, %s17
        %p2796 = scmp.lt.s32.totalorder %s2795, 15
        %s2797 = scalar_select %p2796, %s2795, 15
        %s2798 = smul.addr %s2797, 4
        %s2799 = smul.addr %s2798, 8
        %s2800 = scalar_lea.vmem %s5, %s2799
      $region52: #{gcn_spa_forward.2} parent=47 // pred_fallthru
        _
    $region48: #{gcn_spa_forward.2} parent=5 // pred_fallthru
      _
  $region6: #{gcn_spa_forward.2} parent=0 // loop_footer
    %s15 = sadd.s32 1, %s11
  $region7: #{gcn_spa_forward.2} parent=0 // loop_footer_branch
    %10 = sbr.rel target = $region3
  $region8: #{gcn_spa_forward.2} parent=0 // loop_exit
    _

</llo_original>
